<compile_context>
chip_gen: v7x
topology: tpu7x:2x2x1
jax: 0.10.0
libtpu: 0.0.40
codegen_flags: <defaults>
</compile_context>

<pallas_src>
import functools
import math

import jax
import jax.numpy as jnp
import numpy as np
from jax import lax
from jax.experimental import pallas as pl
from jax.experimental.pallas import tpu as pltpu

EMBED = 32   # self.embedding_size
RECUR = 8    # self.recurrent_size


# --------------------------------------------------------------------------- #
# Kernel 1: fused forward/backward recurrence (latency-bound, serial in S)     #
# --------------------------------------------------------------------------- #
def recurrence_kernel(proj_ref, wblk_ref, hcat_ref, *, seq_len, batch_tile, recur):
    """proj_ref : (S, TB, 2R)  pre-projected inputs, backward half pre-flipped
                               along S (so step i reads one contiguous slab).
    wblk_ref   : (2R, 2R)      block-diag [W_f.T, 0; 0, W_b.T].
    hcat_ref   : (S, TB, 2R)   per-step [fwd | bwd(reversed)] hidden states."""
    S, TB, R = seq_len, batch_tile, recur
    f32 = jnp.float32

    wblk = wblk_ref[...]                          # hoist (2R, 2R) weight load
    # TODO(synk): could hold wblk in the MXU across the loop via
    # pltpu.matmul_push_rhs/matmul_acc_lhs/matmul_pop, or switch to a
    # VPU-only broadcast-MAC update; benchmark per generation.
    h0 = jnp.zeros((TB, 2 * R), f32)              # [h_fwd | h_bwd]

    def step(i, h_cat):
        # Store the PRE-update state (matches the PyTorch loops) — one
        # full-width store, no lane masking.
        hcat_ref[i] = h_cat
        # Fused update: both directions share one block-diag matmul + one tanh.
        pre = proj_ref[i] + jnp.dot(h_cat, wblk, preferred_element_type=f32)
        return jnp.tanh(pre)

    unroll = True if S <= 32 else 8
    h_last = lax.fori_loop(0, S - 1, step, h0, unroll=unroll)

    # Last iteration of the PyTorch loops stores the state and breaks (no update).
    hcat_ref[S - 1] = h_last


# --------------------------------------------------------------------------- #
# Kernel 2: vocab projection + log_softmax (gridded / pipelined)               #
# --------------------------------------------------------------------------- #
def proj_kernel(h_ref, vt_ref, mask_ref, out_ref):
    """h_ref: (TM, 2R); vt_ref: (2R, vocab_pad); mask_ref: (1, vocab_pad) additive
    mask (0 for real vocab columns, -1e30 for lane padding); out: (TM, vocab_pad)."""
    a = jnp.dot(h_ref[...].astype(vt_ref.dtype), vt_ref[...],
                preferred_element_type=jnp.float32)          # (TM, vocab_pad)
    a = a + mask_ref[...]                                     # keep padding out of lse
    m = jnp.max(a, axis=1, keepdims=True)
    lse = m + jnp.log(jnp.sum(jnp.exp(a - m), axis=1, keepdims=True))
    out_ref[...] = (a - lse).astype(out_ref.dtype)


# --------------------------------------------------------------------------- #
# Tiling helpers                                                               #
# --------------------------------------------------------------------------- #
def _vmem_capacity_bytes():
    try:
        return int(pltpu.get_tpu_info().vmem_capacity_bytes)
    except Exception:
        return 64 * 1024 * 1024   # conservative (v7x per-TC)


def _pick_row_tile(rows, vocab_pad, out_block_budget_bytes, out_bytes_per_elem):
    """Row tile: multiple of 8, <=1024, output block within budget, and (when
    rows allow it) at least 2 grid steps so the 'parallel' axis spans both
    v7x TensorCores.  rows are later padded UP to a multiple of the tile."""
    budget_rows = max(8, out_block_budget_bytes // (vocab_pad * out_bytes_per_elem))
    tm = min(1024, budget_rows)
    tm = max(8, (tm // 8) * 8)
    rows8 = ((rows + 7) // 8) * 8
    if rows8 >= 16:
        half = max(8, ((rows8 // 2 + 7) // 8) * 8)
        tm = min(tm, half)        # guarantees >= 2 grid steps
    else:
        tm = 8
    return tm


# --------------------------------------------------------------------------- #
# Wrapper                                                                      #
# --------------------------------------------------------------------------- #
def birnn_forward(input_batch, params, proj_dtype=jnp.bfloat16,
                  out_dtype=jnp.float32):
    """input_batch: (S, B) int32 -> (S, B, vocab) log-probs (out_dtype)."""
    S, B = input_batch.shape
    R = RECUR
    V = params["V"]
    vocab = V.shape[0]

    # ---- XLA glue: embedding gather + hoisted input projection ------------ #
    emb = params["embedding"][input_batch].astype(jnp.float32)          # (S, B, E)
    proj_f = emb @ params["U_f"].T + (params["bias_1_f"] + params["bias_2_f"])
    proj_b = emb @ params["U_b"].T + (params["bias_1_b"] + params["bias_2_b"])
    # Pre-flip the backward half along S so the fused recurrence step i reads
    # ONE contiguous (TB, 2R) slab.
    proj = jnp.concatenate([proj_f, jnp.flip(proj_b, axis=0)], axis=-1)  # (S,B,2R)

    # Batch tiling (sublane-aligned; gives v7x a parallel axis, bounds VMEM).
    TB = min(max(8, ((B + 7) // 8) * 8), 256)
    B_pad = ((B + TB - 1) // TB) * TB
    if B_pad != B:
        proj = jnp.pad(proj, ((0, 0), (0, B_pad - B), (0, 0)))

    zer = jnp.zeros((R, R), jnp.float32)
    w_blk = jnp.block([[params["W_f"].T, zer],
                       [zer, params["W_b"].T]])                          # (2R, 2R)
    # NOTE: params["bias_3"] exists but is never used in the PyTorch forward.

    rec = functools.partial(recurrence_kernel, seq_len=S, batch_tile=TB, recur=R)
    hcat = pl.pallas_call(
        rec,
        out_shape=jax.ShapeDtypeStruct((S, B_pad, 2 * R), jnp.float32),
        grid=(B_pad // TB,),
        in_specs=[pl.BlockSpec((S, TB, 2 * R), lambda b: (0, b, 0)),
                  pl.BlockSpec((2 * R, 2 * R), lambda b: (0, 0))],
        out_specs=pl.BlockSpec((S, TB, 2 * R), lambda b: (0, b, 0)),
        compiler_params=pltpu.CompilerParams(
            dimension_semantics=("parallel",)),
    )(proj, w_blk)

    # Un-flip the backward lanes along S (cheap XLA glue); drop batch padding
    # before the heavy vocab projection; single (rows, 2R) input for kernel 2.
    total_h = jnp.concatenate(
        [hcat[:, :B, :R], jnp.flip(hcat[:, :B, R:], axis=0)], axis=-1)   # (S,B,2R)
    rows = S * B
    total_h = total_h.reshape(rows, 2 * R)

    # ---- gridded projection + log_softmax --------------------------------- #
    vocab_pad = ((vocab + 127) // 128) * 128
    out_bytes = jnp.dtype(out_dtype).itemsize

    vmem_cap = _vmem_capacity_bytes()
    if vmem_cap >= 96 * 1024 * 1024:        # v5e / v6e: 128 MiB physical VMEM
        out_budget = 16 * 1024 * 1024
    else:                                    # v7x: 64 MiB physical VMEM
        out_budget = 8 * 1024 * 1024
    vmem_limit = int(min(vmem_cap * 3 // 4, 96 * 1024 * 1024))

    tm = _pick_row_tile(rows, vocab_pad, out_budget, out_bytes)
    rows_pad = ((rows + tm - 1) // tm) * tm  # pad rows up; never shrink the tile
    if rows_pad != rows:
        total_h = jnp.pad(total_h, ((0, rows_pad - rows), (0, 0)))

    vt = V.T                                                             # (2R, vocab)
    if vocab_pad != vocab:
        vt = jnp.pad(vt, ((0, 0), (0, vocab_pad - vocab)))
    vt = vt.astype(proj_dtype)

    # Resident additive mask: 0 for real vocab columns, -1e30 for padding.
    mask = jnp.where(jnp.arange(vocab_pad) < vocab, 0.0, -1e30)
    mask = mask.astype(jnp.float32).reshape(1, vocab_pad)

    grid = (rows_pad // tm,)
    # TODO(synk): the constant vt/mask BlockSpecs could use pipeline_mode=
    # pl.Buffered(1) to avoid a second buffer; left default for portability.
    out = pl.pallas_call(
        proj_kernel,
        out_shape=jax.ShapeDtypeStruct((rows_pad, vocab_pad), out_dtype),
        grid=grid,
        in_specs=[pl.BlockSpec((tm, 2 * R), lambda i: (i, 0)),
                  pl.BlockSpec((2 * R, vocab_pad), lambda i: (0, 0)),
                  pl.BlockSpec((1, vocab_pad), lambda i: (0, 0))],
        out_specs=pl.BlockSpec((tm, vocab_pad), lambda i: (i, 0)),
        compiler_params=pltpu.CompilerParams(
            dimension_semantics=("parallel",),
            vmem_limit_bytes=vmem_limit),
    )(total_h, vt, mask)

    return out[:rows, :vocab].reshape(S, B, vocab)


# --------------------------------------------------------------------------- #
# Pure-JAX reference mirroring the PyTorch loops exactly                       #
# --------------------------------------------------------------------------- #
def birnn_reference(input_batch, params):
    S, B = input_batch.shape
    R = RECUR
    emb = params["embedding"][input_batch]            # (S, B, E)

    h = jnp.zeros((B, R), jnp.float32)
    fwd = []
    for i in range(S):
        fwd.append(h)
        if i == S - 1:
            break
        h = jnp.tanh(emb[i] @ params["U_f"].T + params["bias_1_f"]
                     + h @ params["W_f"].T + params["bias_2_f"])
    fwd = jnp.stack(fwd)

    h = jnp.zeros((B, R), jnp.float32)
    bwd = [None] * S
    for i in range(S):
        idx = S - 1 - i
        bwd[idx] = h
        if i == S - 1:
            break
        h = jnp.tanh(emb[idx] @ params["U_b"].T + params["bias_1_b"]
                     + h @ params["W_b"].T + params["bias_2_b"])
    bwd = jnp.stack(bwd)

    a = jnp.concatenate([fwd, bwd], axis=2) @ params["V"].T
    m = jnp.max(a, axis=2, keepdims=True)
    return a - (m + jnp.log(jnp.sum(jnp.exp(a - m), axis=2, keepdims=True)))


def init_params(vocab_size, key):
    stdv = 1.0 / math.sqrt(RECUR)
    shapes = {
        "embedding": (vocab_size, EMBED),
        "U_f": (RECUR, EMBED), "W_f": (RECUR, RECUR),
        "U_b": (RECUR, EMBED), "W_b": (RECUR, RECUR),
        "V": (vocab_size, 2 * RECUR),
        "bias_1_f": (RECUR,), "bias_2_f": (RECUR,),
        "bias_1_b": (RECUR,), "bias_2_b": (RECUR,),
        "bias_3": (vocab_size,),
    }
    keys = jax.random.split(key, len(shapes))
    return {name: jax.random.uniform(k, shp, jnp.float32, -stdv, stdv)
            for k, (name, shp) in zip(keys, shapes.items())}


if __name__ == "__main__":
    # Full-f32 matmuls for both the XLA reference and the wrapper glue so the
    # exactness check is meaningful.
    jax.config.update("jax_default_matmul_precision", "highest")

    vocab_size, seq_len, batch = 16, 8, 2
    key = jax.random.PRNGKey(0)
    k_param, k_tok = jax.random.split(key)

    params = init_params(vocab_size, k_param)
    input_batch = jax.random.randint(k_tok, (seq_len, batch), 0, vocab_size,
                                     dtype=jnp.int32)

    ref = birnn_reference(input_batch, params)

    # Exactness check with the f32 projection path.
    out_f32 = jax.block_until_ready(
        birnn_forward(input_batch, params, proj_dtype=jnp.float32))
    np.testing.assert_allclose(np.asarray(out_f32), np.asarray(ref),
                               rtol=1e-4, atol=1e-4)

    # Performance path: bf16-weight / f32-accumulate projection.
    out_bf16 = jax.block_until_ready(
        birnn_forward(input_batch, params, proj_dtype=jnp.bfloat16))
    np.testing.assert_allclose(np.asarray(out_bf16), np.asarray(ref),
                               rtol=0, atol=1e-1)

    assert out_f32.shape == (seq_len, batch, vocab_size)
    print("KERNEL_OK")
</pallas_src>

<mosaic_0001>
module attributes {stable_mosaic.version = 11 : i64} {
  func.func @recurrence_kernel(%arg0: i32, %arg1: memref<8x8x16xf32, #tpu.memory_space<vmem>>, %arg2: memref<16x16xf32, #tpu.memory_space<vmem>>, %arg3: memref<8x8x16xf32, #tpu.memory_space<vmem>>) attributes {dimension_semantics = [#tpu.dimension_semantics<parallel>], iteration_bounds = array<i64: 1>, scalar_prefetch = 0 : i64, scratch_operands = 0 : i64, tpu.core_type = #tpu.core_type<tc>, window_params = [{transform_indices = @transform_0, window_bounds = array<i64: 8, 8, 16>}, {pipeline_mode = #tpu.pipeline_mode<synchronous>, transform_indices = @transform_1, window_bounds = array<i64: 16, 16>}, {transform_indices = @transform_2, window_bounds = array<i64: 8, 8, 16>}]} {
    %c0 = arith.constant 0 : index
    %c0_0 = arith.constant 0 : index
    %0 = vector.load %arg2[%c0, %c0_0] : memref<16x16xf32, #tpu.memory_space<vmem>>, vector<16x16xf32>
    %cst = arith.constant 0.000000e+00 : f32
    %1 = vector.broadcast %cst : f32 to vector<8x16xf32>
    %c0_i32 = arith.constant 0 : i32
    %2 = arith.index_cast %c0_i32 : i32 to index
    %c0_1 = arith.constant 0 : index
    %c0_2 = arith.constant 0 : index
    %3 = vector.load %arg3[%2, %c0_1, %c0_2] : memref<8x8x16xf32, #tpu.memory_space<vmem>>, vector<1x8x16xf32>
    %4 = vector.shape_cast %3 : vector<1x8x16xf32> to vector<8x16xf32>
    %5 = vector.shape_cast %1 : vector<8x16xf32> to vector<1x8x16xf32>
    tpu.vector_store %arg3[%2, %c0_1, %c0_2], %5 {strides = array<i32>} : memref<8x8x16xf32, #tpu.memory_space<vmem>>, vector<1x8x16xf32>,
    %6 = arith.index_cast %c0_i32 : i32 to index
    %c0_3 = arith.constant 0 : index
    %c0_4 = arith.constant 0 : index
    %7 = vector.load %arg1[%6, %c0_3, %c0_4] : memref<8x8x16xf32, #tpu.memory_space<vmem>>, vector<1x8x16xf32>
    %8 = vector.shape_cast %7 : vector<1x8x16xf32> to vector<8x16xf32>
    %cst_5 = arith.constant dense<0.000000e+00> : vector<8x16xf32>
    %9 = tpu.matmul %1, %0, %cst_5 {dimension_numbers = #tpu.dot_dimension_numbers<[1], [0], [0], [1], [0, 0, 1, 1], [], []>, precision = #tpu.contract_precision<fp32>} : vector<8x16xf32>, vector<16x16xf32>, vector<8x16xf32> -> vector<8x16xf32>
    %10 = arith.addf %8, %9 : vector<8x16xf32>
    %11 = math.tanh %10 : vector<8x16xf32>
    %c1_i32 = arith.constant 1 : i32
    %12 = arith.index_cast %c1_i32 : i32 to index
    %c0_6 = arith.constant 0 : index
    %c0_7 = arith.constant 0 : index
    %13 = vector.load %arg3[%12, %c0_6, %c0_7] : memref<8x8x16xf32, #tpu.memory_space<vmem>>, vector<1x8x16xf32>
    %14 = vector.shape_cast %13 : vector<1x8x16xf32> to vector<8x16xf32>
    %15 = vector.shape_cast %11 : vector<8x16xf32> to vector<1x8x16xf32>
    tpu.vector_store %arg3[%12, %c0_6, %c0_7], %15 {strides = array<i32>} : memref<8x8x16xf32, #tpu.memory_space<vmem>>, vector<1x8x16xf32>,
    %16 = arith.index_cast %c1_i32 : i32 to index
    %c0_8 = arith.constant 0 : index
    %c0_9 = arith.constant 0 : index
    %17 = vector.load %arg1[%16, %c0_8, %c0_9] : memref<8x8x16xf32, #tpu.memory_space<vmem>>, vector<1x8x16xf32>
    %18 = vector.shape_cast %17 : vector<1x8x16xf32> to vector<8x16xf32>
    %cst_10 = arith.constant dense<0.000000e+00> : vector<8x16xf32>
    %19 = tpu.matmul %11, %0, %cst_10 {dimension_numbers = #tpu.dot_dimension_numbers<[1], [0], [0], [1], [0, 0, 1, 1], [], []>, precision = #tpu.contract_precision<fp32>} : vector<8x16xf32>, vector<16x16xf32>, vector<8x16xf32> -> vector<8x16xf32>
    %20 = arith.addf %18, %19 : vector<8x16xf32>
    %21 = math.tanh %20 : vector<8x16xf32>
    %c2_i32 = arith.constant 2 : i32
    %22 = arith.index_cast %c2_i32 : i32 to index
    %c0_11 = arith.constant 0 : index
    %c0_12 = arith.constant 0 : index
    %23 = vector.load %arg3[%22, %c0_11, %c0_12] : memref<8x8x16xf32, #tpu.memory_space<vmem>>, vector<1x8x16xf32>
    %24 = vector.shape_cast %23 : vector<1x8x16xf32> to vector<8x16xf32>
    %25 = vector.shape_cast %21 : vector<8x16xf32> to vector<1x8x16xf32>
    tpu.vector_store %arg3[%22, %c0_11, %c0_12], %25 {strides = array<i32>} : memref<8x8x16xf32, #tpu.memory_space<vmem>>, vector<1x8x16xf32>,
    %26 = arith.index_cast %c2_i32 : i32 to index
    %c0_13 = arith.constant 0 : index
    %c0_14 = arith.constant 0 : index
    %27 = vector.load %arg1[%26, %c0_13, %c0_14] : memref<8x8x16xf32, #tpu.memory_space<vmem>>, vector<1x8x16xf32>
    %28 = vector.shape_cast %27 : vector<1x8x16xf32> to vector<8x16xf32>
    %cst_15 = arith.constant dense<0.000000e+00> : vector<8x16xf32>
    %29 = tpu.matmul %21, %0, %cst_15 {dimension_numbers = #tpu.dot_dimension_numbers<[1], [0], [0], [1], [0, 0, 1, 1], [], []>, precision = #tpu.contract_precision<fp32>} : vector<8x16xf32>, vector<16x16xf32>, vector<8x16xf32> -> vector<8x16xf32>
    %30 = arith.addf %28, %29 : vector<8x16xf32>
    %31 = math.tanh %30 : vector<8x16xf32>
    %c3_i32 = arith.constant 3 : i32
    %32 = arith.index_cast %c3_i32 : i32 to index
    %c0_16 = arith.constant 0 : index
    %c0_17 = arith.constant 0 : index
    %33 = vector.load %arg3[%32, %c0_16, %c0_17] : memref<8x8x16xf32, #tpu.memory_space<vmem>>, vector<1x8x16xf32>
    %34 = vector.shape_cast %33 : vector<1x8x16xf32> to vector<8x16xf32>
    %35 = vector.shape_cast %31 : vector<8x16xf32> to vector<1x8x16xf32>
    tpu.vector_store %arg3[%32, %c0_16, %c0_17], %35 {strides = array<i32>} : memref<8x8x16xf32, #tpu.memory_space<vmem>>, vector<1x8x16xf32>,
    %36 = arith.index_cast %c3_i32 : i32 to index
    %c0_18 = arith.constant 0 : index
    %c0_19 = arith.constant 0 : index
    %37 = vector.load %arg1[%36, %c0_18, %c0_19] : memref<8x8x16xf32, #tpu.memory_space<vmem>>, vector<1x8x16xf32>
    %38 = vector.shape_cast %37 : vector<1x8x16xf32> to vector<8x16xf32>
    %cst_20 = arith.constant dense<0.000000e+00> : vector<8x16xf32>
    %39 = tpu.matmul %31, %0, %cst_20 {dimension_numbers = #tpu.dot_dimension_numbers<[1], [0], [0], [1], [0, 0, 1, 1], [], []>, precision = #tpu.contract_precision<fp32>} : vector<8x16xf32>, vector<16x16xf32>, vector<8x16xf32> -> vector<8x16xf32>
    %40 = arith.addf %38, %39 : vector<8x16xf32>
    %41 = math.tanh %40 : vector<8x16xf32>
    %c4_i32 = arith.constant 4 : i32
    %42 = arith.index_cast %c4_i32 : i32 to index
    %c0_21 = arith.constant 0 : index
    %c0_22 = arith.constant 0 : index
    %43 = vector.load %arg3[%42, %c0_21, %c0_22] : memref<8x8x16xf32, #tpu.memory_space<vmem>>, vector<1x8x16xf32>
    %44 = vector.shape_cast %43 : vector<1x8x16xf32> to vector<8x16xf32>
    %45 = vector.shape_cast %41 : vector<8x16xf32> to vector<1x8x16xf32>
    tpu.vector_store %arg3[%42, %c0_21, %c0_22], %45 {strides = array<i32>} : memref<8x8x16xf32, #tpu.memory_space<vmem>>, vector<1x8x16xf32>,
    %46 = arith.index_cast %c4_i32 : i32 to index
    %c0_23 = arith.constant 0 : index
    %c0_24 = arith.constant 0 : index
    %47 = vector.load %arg1[%46, %c0_23, %c0_24] : memref<8x8x16xf32, #tpu.memory_space<vmem>>, vector<1x8x16xf32>
    %48 = vector.shape_cast %47 : vector<1x8x16xf32> to vector<8x16xf32>
    %cst_25 = arith.constant dense<0.000000e+00> : vector<8x16xf32>
    %49 = tpu.matmul %41, %0, %cst_25 {dimension_numbers = #tpu.dot_dimension_numbers<[1], [0], [0], [1], [0, 0, 1, 1], [], []>, precision = #tpu.contract_precision<fp32>} : vector<8x16xf32>, vector<16x16xf32>, vector<8x16xf32> -> vector<8x16xf32>
    %50 = arith.addf %48, %49 : vector<8x16xf32>
    %51 = math.tanh %50 : vector<8x16xf32>
    %c5_i32 = arith.constant 5 : i32
    %52 = arith.index_cast %c5_i32 : i32 to index
    %c0_26 = arith.constant 0 : index
    %c0_27 = arith.constant 0 : index
    %53 = vector.load %arg3[%52, %c0_26, %c0_27] : memref<8x8x16xf32, #tpu.memory_space<vmem>>, vector<1x8x16xf32>
    %54 = vector.shape_cast %53 : vector<1x8x16xf32> to vector<8x16xf32>
    %55 = vector.shape_cast %51 : vector<8x16xf32> to vector<1x8x16xf32>
    tpu.vector_store %arg3[%52, %c0_26, %c0_27], %55 {strides = array<i32>} : memref<8x8x16xf32, #tpu.memory_space<vmem>>, vector<1x8x16xf32>,
    %56 = arith.index_cast %c5_i32 : i32 to index
    %c0_28 = arith.constant 0 : index
    %c0_29 = arith.constant 0 : index
    %57 = vector.load %arg1[%56, %c0_28, %c0_29] : memref<8x8x16xf32, #tpu.memory_space<vmem>>, vector<1x8x16xf32>
    %58 = vector.shape_cast %57 : vector<1x8x16xf32> to vector<8x16xf32>
    %cst_30 = arith.constant dense<0.000000e+00> : vector<8x16xf32>
    %59 = tpu.matmul %51, %0, %cst_30 {dimension_numbers = #tpu.dot_dimension_numbers<[1], [0], [0], [1], [0, 0, 1, 1], [], []>, precision = #tpu.contract_precision<fp32>} : vector<8x16xf32>, vector<16x16xf32>, vector<8x16xf32> -> vector<8x16xf32>
    %60 = arith.addf %58, %59 : vector<8x16xf32>
    %61 = math.tanh %60 : vector<8x16xf32>
    %c6_i32 = arith.constant 6 : i32
    %62 = arith.index_cast %c6_i32 : i32 to index
    %c0_31 = arith.constant 0 : index
    %c0_32 = arith.constant 0 : index
    %63 = vector.load %arg3[%62, %c0_31, %c0_32] : memref<8x8x16xf32, #tpu.memory_space<vmem>>, vector<1x8x16xf32>
    %64 = vector.shape_cast %63 : vector<1x8x16xf32> to vector<8x16xf32>
    %65 = vector.shape_cast %61 : vector<8x16xf32> to vector<1x8x16xf32>
    tpu.vector_store %arg3[%62, %c0_31, %c0_32], %65 {strides = array<i32>} : memref<8x8x16xf32, #tpu.memory_space<vmem>>, vector<1x8x16xf32>,
    %66 = arith.index_cast %c6_i32 : i32 to index
    %c0_33 = arith.constant 0 : index
    %c0_34 = arith.constant 0 : index
    %67 = vector.load %arg1[%66, %c0_33, %c0_34] : memref<8x8x16xf32, #tpu.memory_space<vmem>>, vector<1x8x16xf32>
    %68 = vector.shape_cast %67 : vector<1x8x16xf32> to vector<8x16xf32>
    %cst_35 = arith.constant dense<0.000000e+00> : vector<8x16xf32>
    %69 = tpu.matmul %61, %0, %cst_35 {dimension_numbers = #tpu.dot_dimension_numbers<[1], [0], [0], [1], [0, 0, 1, 1], [], []>, precision = #tpu.contract_precision<fp32>} : vector<8x16xf32>, vector<16x16xf32>, vector<8x16xf32> -> vector<8x16xf32>
    %70 = arith.addf %68, %69 : vector<8x16xf32>
    %71 = math.tanh %70 : vector<8x16xf32>
    %c7_i32 = arith.constant 7 : i32
    %c7 = arith.constant 7 : index
    %c0_36 = arith.constant 0 : index
    %c0_37 = arith.constant 0 : index
    %72 = vector.load %arg3[%c7, %c0_36, %c0_37] : memref<8x8x16xf32, #tpu.memory_space<vmem>>, vector<1x8x16xf32>
    %73 = vector.shape_cast %72 : vector<1x8x16xf32> to vector<8x16xf32>
    %74 = vector.shape_cast %71 : vector<8x16xf32> to vector<1x8x16xf32>
    tpu.vector_store %arg3[%c7, %c0_36, %c0_37], %74 {strides = array<i32>} : memref<8x8x16xf32, #tpu.memory_space<vmem>>, vector<1x8x16xf32>,
    return
  }
  func.func @transform_0(%arg0: i32) -> (i32, i32, i32) {
    %c0_i32 = arith.constant 0 : i32
    %c0_i32_0 = arith.constant 0 : i32
    %c0_i32_1 = arith.constant 0 : i32
    return %c0_i32, %arg0, %c0_i32_0 : i32, i32, i32
  }
  func.func @transform_1(%arg0: i32) -> (i32, i32) {
    %c0_i32 = arith.constant 0 : i32
    %c0_i32_0 = arith.constant 0 : i32
    %c0_i32_1 = arith.constant 0 : i32
    return %c0_i32, %c0_i32_0 : i32, i32
  }
  func.func @transform_2(%arg0: i32) -> (i32, i32, i32) {
    %c0_i32 = arith.constant 0 : i32
    %c0_i32_0 = arith.constant 0 : i32
    %c0_i32_1 = arith.constant 0 : i32
    return %c0_i32, %arg0, %c0_i32_0 : i32, i32, i32
  }
}

</mosaic_0001>

<llo_original>
// kernel: tpu_custom_call.1
$region0: #{tpu_custom_call.1}
  #allocation0 [shape = 'u32[]', space=smem, size = 0x4, offset = 0x4, fixed_abs, tag = 'smem constant byte address 0x4 - core index']
  #allocation1 [shape = 'u32[144,128]{1,0:T(1,128)}', space=vmem, size = 0x12000, scoped, tag = 'internal scratch']
  %s0 = inlined_call_operand.hbm [shape: f32[8,8,16], index: 0, kind: input, shape index: {}]
  %s1 = inlined_call_operand.hbm [shape: f32[16,16], index: 1, kind: input, shape index: {}]
  %s2 = inlined_call_operand.hbm [shape: f32[8,8,16], index: 2, kind: output, shape index: {}]
  %s3 = sld [smem:[#allocation0]]
  $region26: #{tpu_custom_call.1} parent=0
    _
  %s5 = ssub.s32 1, %s3
  %s6 = scalar_select 0, %s5, %s3
  $region1: #{tpu_custom_call.1} parent=0
    #allocation2 [shape = 'u8[32768]{0}', space=vmem, size = 0x8000, scoped, tag = 'input window, operand 0, single buffered']
    #allocation3 [shape = 's32[1]{0}', space=sflag, size = 0x4, scoped, tag = 'scoped memory for tpu_custom_call.1']
    #allocation4 [shape = 's32[1]{0}', space=sflag, size = 0x4, scoped, tag = 'scoped memory for tpu_custom_call.1']
    #allocation5 [shape = 'u8[8192]{0}', space=vmem, size = 0x2000, scoped, tag = 'input window, operand 1, single buffered']
    #allocation6 [shape = 's32[1]{0}', space=sflag, size = 0x4, scoped, tag = 'scoped memory for tpu_custom_call.1']
    #allocation7 [shape = 'u8[32768]{0}', space=vmem, size = 0x8000, scoped, tag = 'output window, operand 0, single buffered']
    %7 = vsyncpa [#allocation3], 0
    %8 = vsyncpa [#allocation6], 0
    %9 = vsyncpa [#allocation4], 0
    // Predicated region
    $region2: #{tpu_custom_call.1} parent=1 // pred_check
      _
    $region3: #{tpu_custom_call.1} parent=1 // pred_check_branch
      %11 = sbr.rel (0) target = $region5
    $region4: #{tpu_custom_call.1} parent=1 // pred_region
      %s13 = ssub.s32 1024, 1024
      %14 = vsyncadd [#allocation3], %s13
      %s15 = sshll.u32 [#allocation2], 4
      %s16 = int_to_ptr.vmem [resolvable:$true] %s15
      %21 = dma.hbm_to_vmem [thread:$0]  %s0, 1024, %s16, [#allocation3], 128, 128, 8
    $region5: #{tpu_custom_call.1} parent=1 // pred_fallthru
      _
    // Predicated region
    $region6: #{tpu_custom_call.1} parent=1 // pred_check
      _
    $region7: #{tpu_custom_call.1} parent=1 // pred_check_branch
      %23 = sbr.rel (0) target = $region9
    $region8: #{tpu_custom_call.1} parent=1 // pred_region
      %s25 = ssub.s32 256, 256
      %26 = vsyncadd [#allocation6], %s25
      %s27 = sshll.u32 [#allocation5], 4
      %s28 = int_to_ptr.vmem [resolvable:$true] %s27
      %33 = dma.hbm_to_vmem [thread:$0]  %s1, 256, %s28, [#allocation6], 128, 128, 8
    $region9: #{tpu_custom_call.1} parent=1 // pred_fallthru
      _
    // Predicated region
    $region10: #{tpu_custom_call.1} parent=1 // pred_check
      _
    $region11: #{tpu_custom_call.1} parent=1 // pred_check_branch
      %35 = sbr.rel (0) target = $region13
    $region12: #{tpu_custom_call.1} parent=1 // pred_region
      %36 = dma.done [#allocation3], 1024
    $region13: #{tpu_custom_call.1} parent=1 // pred_fallthru
      _
    // Predicated region
    $region14: #{tpu_custom_call.1} parent=1 // pred_check
      _
    $region15: #{tpu_custom_call.1} parent=1 // pred_check_branch
      %38 = sbr.rel (0) target = $region17
    $region16: #{tpu_custom_call.1} parent=1 // pred_region
      %39 = dma.done [#allocation6], 256
    $region17: #{tpu_custom_call.1} parent=1 // pred_fallthru
      _
    %v40 = vld [vmem:[#allocation5] sm:$0xff]
    %v41 = vld [vmem:[#allocation5 + $0x8] sm:$0xff]
    %vm42 = vcmask 130048
    %43 = vst.msk [vmem:[#allocation7] sm:$0xff] %vm42, 0.0
    %v44 = vld [vmem:[#allocation2] sm:$0xff]
    %v46 = vsel %vm42, 0.0, 0
    %48 = vmatprep.subr.mxu0 0.0
    %v49 = vand.u32 %v40, 4294901760
    %50 = vmatpush1.msra.mxu0 %v49
    %51 = vmatprep.subr.mxu0 0.0
    %v52 = vand.u32 %v41, 4294901760
    %53 = vmatpush1.msra.mxu0 %v52
    %54 = vmatprep.subr.mxu0 0.0
    %55 = vmatpush1.msra.mxu0 0.0
    %56 = vmatprep.subr.mxu0 0.0
    %57 = vmatpush1.msra.mxu0 0.0
    %58 = vmatprep.subr.mxu0 0.0
    %59 = vmatpush1.msra.mxu0 0.0
    %60 = vmatprep.subr.mxu0 0.0
    %61 = vmatpush1.msra.mxu0 0.0
    %62 = vmatprep.subr.mxu0 0.0
    %63 = vmatpush1.msra.mxu0 0.0
    %64 = vmatprep.subr.mxu0 0.0
    %65 = vmatpush1.msra.mxu0 0.0
    %66 = vmatprep.subr.mxu0 0.0
    %67 = vmatpush1.msra.mxu0 0.0
    %68 = vmatprep.subr.mxu0 0.0
    %69 = vmatpush1.msra.mxu0 0.0
    %70 = vmatprep.subr.mxu0 0.0
    %71 = vmatpush1.msra.mxu0 0.0
    %72 = vmatprep.subr.mxu0 0.0
    %73 = vmatpush1.msra.mxu0 0.0
    %74 = vmatprep.subr.mxu0 0.0
    %75 = vmatpush1.msra.mxu0 0.0
    %76 = vmatprep.subr.mxu0 0.0
    %77 = vmatpush1.msra.mxu0 0.0
    %78 = vmatprep.subr.mxu0 0.0
    %79 = vmatpush1.msra.mxu0 0.0
    %80 = vmatprep.subr.mxu0 0.0
    %81 = vmatpush1.msra.mxu0 0.0
    %82 = vmatprep.subr.mxu0 0.0
    %83 = vmatpush1.msra.mxu0 0.0
    %84 = vmatprep.subr.mxu0 0.0
    %85 = vmatpush1.msra.mxu0 0.0
    %86 = vmatprep.subr.mxu0 0.0
    %87 = vmatpush1.msra.mxu0 0.0
    %88 = vmatprep.subr.mxu0 0.0
    %89 = vmatpush1.msra.mxu0 0.0
    %90 = vmatprep.subr.mxu0 0.0
    %91 = vmatpush1.msra.mxu0 0.0
    %92 = vmatprep.subr.mxu0 0.0
    %93 = vmatpush1.msra.mxu0 0.0
    %94 = vmatprep.subr.mxu0 0.0
    %95 = vmatpush1.msra.mxu0 0.0
    %96 = vmatprep.subr.mxu0 0.0
    %97 = vmatpush1.msra.mxu0 0.0
    %98 = vmatprep.subr.mxu0 0.0
    %99 = vmatpush1.msra.mxu0 0.0
    %100 = vmatprep.subr.mxu0 0.0
    %101 = vmatpush1.msra.mxu0 0.0
    %102 = vmatprep.subr.mxu0 0.0
    %103 = vmatpush1.msra.mxu0 0.0
    %104 = vmatprep.subr.mxu0 0.0
    %105 = vmatpush1.msra.mxu0 0.0
    %106 = vmatprep.subr.mxu0 0.0
    %107 = vmatpush1.msra.mxu0 0.0
    %108 = vmatprep.subr.mxu0 0.0
    %109 = vmatpush1.msra.mxu0 0.0
    %110 = vmatprep.subr.mxu0 0.0
    %111 = vmatpush1.msra.mxu0 0.0
    %112 = vmatprep.subr.mxu0 0.0
    %113 = vmatpush1.msra.mxu0 0.0
    %114 = vmatprep.mubr.f32.mxu0 0.0
    %v115 = vand.u32 %v46, 4294901760
    %v116 = vsub.f32 %v46, %v115
    %v117 = vand.u32 %v116, 4294901760
    %v118 = vsub.f32 %v116, %v117
    %v119 = vand.u32 %v118, 4294901760
    %120 = vmatmul.mubr.f32.gmra.mrb[0].mxu0 %v119
    %v121 = vpop.f32.mrb[0].mxu0
    %v122 = vadd.f32 0.0, %v121
    %v123 = vpop.f32.mrb[0].mxu0
    %124 = vdwg.mxu0
    %125 = vmatprep.subr.mxu0 0.0
    %v126 = vand.u32 %v40, 4294901760
    %v127 = vsub.f32 %v40, %v126
    %v128 = vand.u32 %v127, 4294901760
    %v129 = vsub.f32 %v127, %v128
    %v130 = vand.u32 %v129, 4294901760
    %131 = vmatpush1.msra.mxu0 %v130
    %132 = vmatprep.subr.mxu0 0.0
    %v133 = vand.u32 %v41, 4294901760
    %v134 = vsub.f32 %v41, %v133
    %v135 = vand.u32 %v134, 4294901760
    %v136 = vsub.f32 %v134, %v135
    %v137 = vand.u32 %v136, 4294901760
    %138 = vmatpush1.msra.mxu0 %v137
    %139 = vmatprep.subr.mxu0 0.0
    %140 = vmatpush1.msra.mxu0 0.0
    %141 = vmatprep.subr.mxu0 0.0
    %142 = vmatpush1.msra.mxu0 0.0
    %143 = vmatprep.subr.mxu0 0.0
    %144 = vmatpush1.msra.mxu0 0.0
    %145 = vmatprep.subr.mxu0 0.0
    %146 = vmatpush1.msra.mxu0 0.0
    %147 = vmatprep.subr.mxu0 0.0
    %148 = vmatpush1.msra.mxu0 0.0
    %149 = vmatprep.subr.mxu0 0.0
    %150 = vmatpush1.msra.mxu0 0.0
    %151 = vmatprep.subr.mxu0 0.0
    %152 = vmatpush1.msra.mxu0 0.0
    %153 = vmatprep.subr.mxu0 0.0
    %154 = vmatpush1.msra.mxu0 0.0
    %155 = vmatprep.subr.mxu0 0.0
    %156 = vmatpush1.msra.mxu0 0.0
    %157 = vmatprep.subr.mxu0 0.0
    %158 = vmatpush1.msra.mxu0 0.0
    %159 = vmatprep.subr.mxu0 0.0
    %160 = vmatpush1.msra.mxu0 0.0
    %161 = vmatprep.subr.mxu0 0.0
    %162 = vmatpush1.msra.mxu0 0.0
    %163 = vmatprep.subr.mxu0 0.0
    %164 = vmatpush1.msra.mxu0 0.0
    %165 = vmatprep.subr.mxu0 0.0
    %166 = vmatpush1.msra.mxu0 0.0
    %167 = vmatprep.subr.mxu0 0.0
    %168 = vmatpush1.msra.mxu0 0.0
    %169 = vmatprep.subr.mxu0 0.0
    %170 = vmatpush1.msra.mxu0 0.0
    %171 = vmatprep.subr.mxu0 0.0
    %172 = vmatpush1.msra.mxu0 0.0
    %173 = vmatprep.subr.mxu0 0.0
    %174 = vmatpush1.msra.mxu0 0.0
    %175 = vmatprep.subr.mxu0 0.0
    %176 = vmatpush1.msra.mxu0 0.0
    %177 = vmatprep.subr.mxu0 0.0
    %178 = vmatpush1.msra.mxu0 0.0
    %179 = vmatprep.subr.mxu0 0.0
    %180 = vmatpush1.msra.mxu0 0.0
    %181 = vmatprep.subr.mxu0 0.0
    %182 = vmatpush1.msra.mxu0 0.0
    %183 = vmatprep.subr.mxu0 0.0
    %184 = vmatpush1.msra.mxu0 0.0
    %185 = vmatprep.subr.mxu0 0.0
    %186 = vmatpush1.msra.mxu0 0.0
    %187 = vmatprep.subr.mxu0 0.0
    %188 = vmatpush1.msra.mxu0 0.0
    %189 = vmatprep.subr.mxu0 0.0
    %190 = vmatpush1.msra.mxu0 0.0
    %191 = vmatprep.subr.mxu0 0.0
    %192 = vmatpush1.msra.mxu0 0.0
    %193 = vmatprep.subr.mxu0 0.0
    %194 = vmatpush1.msra.mxu0 0.0
    %195 = vmatprep.subr.mxu0 0.0
    %196 = vmatpush1.msra.mxu0 0.0
    %197 = vmatprep.subr.mxu0 0.0
    %198 = vmatpush1.msra.mxu0 0.0
    %199 = vmatprep.mubr.f32.mxu0 0.0
    %v200 = vand.u32 %v46, 4294901760
    %201 = vmatmul.mubr.f32.gmra.mrb[0].mxu0 %v200
    %v202 = vpop.f32.mrb[0].mxu0
    %v203 = vadd.f32 %v122, %v202
    %v204 = vpop.f32.mrb[0].mxu0
    %205 = vdwg.mxu0
    %206 = vmatprep.subr.mxu0 0.0
    %v207 = vand.u32 %v40, 4294901760
    %v208 = vsub.f32 %v40, %v207
    %209 = vmatpush1.msra.mxu0 %v208
    %210 = vmatprep.subr.mxu0 0.0
    %v211 = vand.u32 %v41, 4294901760
    %v212 = vsub.f32 %v41, %v211
    %213 = vmatpush1.msra.mxu0 %v212
    %214 = vmatprep.subr.mxu0 0.0
    %215 = vmatpush1.msra.mxu0 0.0
    %216 = vmatprep.subr.mxu0 0.0
    %217 = vmatpush1.msra.mxu0 0.0
    %218 = vmatprep.subr.mxu0 0.0
    %219 = vmatpush1.msra.mxu0 0.0
    %220 = vmatprep.subr.mxu0 0.0
    %221 = vmatpush1.msra.mxu0 0.0
    %222 = vmatprep.subr.mxu0 0.0
    %223 = vmatpush1.msra.mxu0 0.0
    %224 = vmatprep.subr.mxu0 0.0
    %225 = vmatpush1.msra.mxu0 0.0
    %226 = vmatprep.subr.mxu0 0.0
    %227 = vmatpush1.msra.mxu0 0.0
    %228 = vmatprep.subr.mxu0 0.0
    %229 = vmatpush1.msra.mxu0 0.0
    %230 = vmatprep.subr.mxu0 0.0
    %231 = vmatpush1.msra.mxu0 0.0
    %232 = vmatprep.subr.mxu0 0.0
    %233 = vmatpush1.msra.mxu0 0.0
    %234 = vmatprep.subr.mxu0 0.0
    %235 = vmatpush1.msra.mxu0 0.0
    %236 = vmatprep.subr.mxu0 0.0
    %237 = vmatpush1.msra.mxu0 0.0
    %238 = vmatprep.subr.mxu0 0.0
    %239 = vmatpush1.msra.mxu0 0.0
    %240 = vmatprep.subr.mxu0 0.0
    %241 = vmatpush1.msra.mxu0 0.0
    %242 = vmatprep.subr.mxu0 0.0
    %243 = vmatpush1.msra.mxu0 0.0
    %244 = vmatprep.subr.mxu0 0.0
    %245 = vmatpush1.msra.mxu0 0.0
    %246 = vmatprep.subr.mxu0 0.0
    %247 = vmatpush1.msra.mxu0 0.0
    %248 = vmatprep.subr.mxu0 0.0
    %249 = vmatpush1.msra.mxu0 0.0
    %250 = vmatprep.subr.mxu0 0.0
    %251 = vmatpush1.msra.mxu0 0.0
    %252 = vmatprep.subr.mxu0 0.0
    %253 = vmatpush1.msra.mxu0 0.0
    %254 = vmatprep.subr.mxu0 0.0
    %255 = vmatpush1.msra.mxu0 0.0
    %256 = vmatprep.subr.mxu0 0.0
    %257 = vmatpush1.msra.mxu0 0.0
    %258 = vmatprep.subr.mxu0 0.0
    %259 = vmatpush1.msra.mxu0 0.0
    %260 = vmatprep.subr.mxu0 0.0
    %261 = vmatpush1.msra.mxu0 0.0
    %262 = vmatprep.subr.mxu0 0.0
    %263 = vmatpush1.msra.mxu0 0.0
    %264 = vmatprep.subr.mxu0 0.0
    %265 = vmatpush1.msra.mxu0 0.0
    %266 = vmatprep.subr.mxu0 0.0
    %267 = vmatpush1.msra.mxu0 0.0
    %268 = vmatprep.subr.mxu0 0.0
    %269 = vmatpush1.msra.mxu0 0.0
    %270 = vmatprep.subr.mxu0 0.0
    %271 = vmatpush1.msra.mxu0 0.0
    %272 = vmatprep.subr.mxu0 0.0
    %273 = vmatpush1.msra.mxu0 0.0
    %274 = vmatprep.mubr.f32.mxu0 0.0
    %v275 = vand.u32 %v46, 4294901760
    %v276 = vsub.f32 %v46, %v275
    %277 = vmatmul.mubr.f32.gmra.mrb[0].mxu0 %v276
    %v278 = vpop.f32.mrb[0].mxu0
    %v279 = vadd.f32 %v203, %v278
    %v280 = vpop.f32.mrb[0].mxu0
    %281 = vdwg.mxu0
    %282 = vmatprep.subr.mxu0 0.0
    %v283 = vand.u32 %v40, 4294901760
    %284 = vmatpush1.msra.mxu0 %v283
    %285 = vmatprep.subr.mxu0 0.0
    %v286 = vand.u32 %v41, 4294901760
    %287 = vmatpush1.msra.mxu0 %v286
    %288 = vmatprep.subr.mxu0 0.0
    %289 = vmatpush1.msra.mxu0 0.0
    %290 = vmatprep.subr.mxu0 0.0
    %291 = vmatpush1.msra.mxu0 0.0
    %292 = vmatprep.subr.mxu0 0.0
    %293 = vmatpush1.msra.mxu0 0.0
    %294 = vmatprep.subr.mxu0 0.0
    %295 = vmatpush1.msra.mxu0 0.0
    %296 = vmatprep.subr.mxu0 0.0
    %297 = vmatpush1.msra.mxu0 0.0
    %298 = vmatprep.subr.mxu0 0.0
    %299 = vmatpush1.msra.mxu0 0.0
    %300 = vmatprep.subr.mxu0 0.0
    %301 = vmatpush1.msra.mxu0 0.0
    %302 = vmatprep.subr.mxu0 0.0
    %303 = vmatpush1.msra.mxu0 0.0
    %304 = vmatprep.subr.mxu0 0.0
    %305 = vmatpush1.msra.mxu0 0.0
    %306 = vmatprep.subr.mxu0 0.0
    %307 = vmatpush1.msra.mxu0 0.0
    %308 = vmatprep.subr.mxu0 0.0
    %309 = vmatpush1.msra.mxu0 0.0
    %310 = vmatprep.subr.mxu0 0.0
    %311 = vmatpush1.msra.mxu0 0.0
    %312 = vmatprep.subr.mxu0 0.0
    %313 = vmatpush1.msra.mxu0 0.0
    %314 = vmatprep.subr.mxu0 0.0
    %315 = vmatpush1.msra.mxu0 0.0
    %316 = vmatprep.subr.mxu0 0.0
    %317 = vmatpush1.msra.mxu0 0.0
    %318 = vmatprep.subr.mxu0 0.0
    %319 = vmatpush1.msra.mxu0 0.0
    %320 = vmatprep.subr.mxu0 0.0
    %321 = vmatpush1.msra.mxu0 0.0
    %322 = vmatprep.subr.mxu0 0.0
    %323 = vmatpush1.msra.mxu0 0.0
    %324 = vmatprep.subr.mxu0 0.0
    %325 = vmatpush1.msra.mxu0 0.0
    %326 = vmatprep.subr.mxu0 0.0
    %327 = vmatpush1.msra.mxu0 0.0
    %328 = vmatprep.subr.mxu0 0.0
    %329 = vmatpush1.msra.mxu0 0.0
    %330 = vmatprep.subr.mxu0 0.0
    %331 = vmatpush1.msra.mxu0 0.0
    %332 = vmatprep.subr.mxu0 0.0
    %333 = vmatpush1.msra.mxu0 0.0
    %334 = vmatprep.subr.mxu0 0.0
    %335 = vmatpush1.msra.mxu0 0.0
    %336 = vmatprep.subr.mxu0 0.0
    %337 = vmatpush1.msra.mxu0 0.0
    %338 = vmatprep.subr.mxu0 0.0
    %339 = vmatpush1.msra.mxu0 0.0
    %340 = vmatprep.subr.mxu0 0.0
    %341 = vmatpush1.msra.mxu0 0.0
    %342 = vmatprep.subr.mxu0 0.0
    %343 = vmatpush1.msra.mxu0 0.0
    %344 = vmatprep.subr.mxu0 0.0
    %345 = vmatpush1.msra.mxu0 0.0
    %346 = vmatprep.subr.mxu0 0.0
    %347 = vmatpush1.msra.mxu0 0.0
    %348 = vmatprep.mubr.f32.mxu0 0.0
    %v349 = vand.u32 %v46, 4294901760
    %v350 = vsub.f32 %v46, %v349
    %v351 = vand.u32 %v350, 4294901760
    %352 = vmatmul.mubr.f32.gmra.mrb[0].mxu0 %v351
    %v353 = vpop.f32.mrb[0].mxu0
    %v354 = vadd.f32 %v279, %v353
    %v355 = vpop.f32.mrb[0].mxu0
    %356 = vdwg.mxu0
    %357 = vmatprep.subr.mxu0 0.0
    %v358 = vand.u32 %v40, 4294901760
    %v359 = vsub.f32 %v40, %v358
    %v360 = vand.u32 %v359, 4294901760
    %361 = vmatpush1.msra.mxu0 %v360
    %362 = vmatprep.subr.mxu0 0.0
    %v363 = vand.u32 %v41, 4294901760
    %v364 = vsub.f32 %v41, %v363
    %v365 = vand.u32 %v364, 4294901760
    %366 = vmatpush1.msra.mxu0 %v365
    %367 = vmatprep.subr.mxu0 0.0
    %368 = vmatpush1.msra.mxu0 0.0
    %369 = vmatprep.subr.mxu0 0.0
    %370 = vmatpush1.msra.mxu0 0.0
    %371 = vmatprep.subr.mxu0 0.0
    %372 = vmatpush1.msra.mxu0 0.0
    %373 = vmatprep.subr.mxu0 0.0
    %374 = vmatpush1.msra.mxu0 0.0
    %375 = vmatprep.subr.mxu0 0.0
    %376 = vmatpush1.msra.mxu0 0.0
    %377 = vmatprep.subr.mxu0 0.0
    %378 = vmatpush1.msra.mxu0 0.0
    %379 = vmatprep.subr.mxu0 0.0
    %380 = vmatpush1.msra.mxu0 0.0
    %381 = vmatprep.subr.mxu0 0.0
    %382 = vmatpush1.msra.mxu0 0.0
    %383 = vmatprep.subr.mxu0 0.0
    %384 = vmatpush1.msra.mxu0 0.0
    %385 = vmatprep.subr.mxu0 0.0
    %386 = vmatpush1.msra.mxu0 0.0
    %387 = vmatprep.subr.mxu0 0.0
    %388 = vmatpush1.msra.mxu0 0.0
    %389 = vmatprep.subr.mxu0 0.0
    %390 = vmatpush1.msra.mxu0 0.0
    %391 = vmatprep.subr.mxu0 0.0
    %392 = vmatpush1.msra.mxu0 0.0
    %393 = vmatprep.subr.mxu0 0.0
    %394 = vmatpush1.msra.mxu0 0.0
    %395 = vmatprep.subr.mxu0 0.0
    %396 = vmatpush1.msra.mxu0 0.0
    %397 = vmatprep.subr.mxu0 0.0
    %398 = vmatpush1.msra.mxu0 0.0
    %399 = vmatprep.subr.mxu0 0.0
    %400 = vmatpush1.msra.mxu0 0.0
    %401 = vmatprep.subr.mxu0 0.0
    %402 = vmatpush1.msra.mxu0 0.0
    %403 = vmatprep.subr.mxu0 0.0
    %404 = vmatpush1.msra.mxu0 0.0
    %405 = vmatprep.subr.mxu0 0.0
    %406 = vmatpush1.msra.mxu0 0.0
    %407 = vmatprep.subr.mxu0 0.0
    %408 = vmatpush1.msra.mxu0 0.0
    %409 = vmatprep.subr.mxu0 0.0
    %410 = vmatpush1.msra.mxu0 0.0
    %411 = vmatprep.subr.mxu0 0.0
    %412 = vmatpush1.msra.mxu0 0.0
    %413 = vmatprep.subr.mxu0 0.0
    %414 = vmatpush1.msra.mxu0 0.0
    %415 = vmatprep.subr.mxu0 0.0
    %416 = vmatpush1.msra.mxu0 0.0
    %417 = vmatprep.subr.mxu0 0.0
    %418 = vmatpush1.msra.mxu0 0.0
    %419 = vmatprep.subr.mxu0 0.0
    %420 = vmatpush1.msra.mxu0 0.0
    %421 = vmatprep.subr.mxu0 0.0
    %422 = vmatpush1.msra.mxu0 0.0
    %423 = vmatprep.subr.mxu0 0.0
    %424 = vmatpush1.msra.mxu0 0.0
    %425 = vmatprep.subr.mxu0 0.0
    %426 = vmatpush1.msra.mxu0 0.0
    %427 = vmatprep.mubr.f32.mxu0 0.0
    %v428 = vand.u32 %v46, 4294901760
    %429 = vmatmul.mubr.f32.gmra.mrb[0].mxu0 %v428
    %v430 = vpop.f32.mrb[0].mxu0
    %v431 = vadd.f32 %v354, %v430
    %v432 = vpop.f32.mrb[0].mxu0
    %433 = vdwg.mxu0
    %434 = vmatprep.subr.mxu0 0.0
    %v435 = vand.u32 %v40, 4294901760
    %436 = vmatpush1.msra.mxu0 %v435
    %437 = vmatprep.subr.mxu0 0.0
    %v438 = vand.u32 %v41, 4294901760
    %439 = vmatpush1.msra.mxu0 %v438
    %440 = vmatprep.subr.mxu0 0.0
    %441 = vmatpush1.msra.mxu0 0.0
    %442 = vmatprep.subr.mxu0 0.0
    %443 = vmatpush1.msra.mxu0 0.0
    %444 = vmatprep.subr.mxu0 0.0
    %445 = vmatpush1.msra.mxu0 0.0
    %446 = vmatprep.subr.mxu0 0.0
    %447 = vmatpush1.msra.mxu0 0.0
    %448 = vmatprep.subr.mxu0 0.0
    %449 = vmatpush1.msra.mxu0 0.0
    %450 = vmatprep.subr.mxu0 0.0
    %451 = vmatpush1.msra.mxu0 0.0
    %452 = vmatprep.subr.mxu0 0.0
    %453 = vmatpush1.msra.mxu0 0.0
    %454 = vmatprep.subr.mxu0 0.0
    %455 = vmatpush1.msra.mxu0 0.0
    %456 = vmatprep.subr.mxu0 0.0
    %457 = vmatpush1.msra.mxu0 0.0
    %458 = vmatprep.subr.mxu0 0.0
    %459 = vmatpush1.msra.mxu0 0.0
    %460 = vmatprep.subr.mxu0 0.0
    %461 = vmatpush1.msra.mxu0 0.0
    %462 = vmatprep.subr.mxu0 0.0
    %463 = vmatpush1.msra.mxu0 0.0
    %464 = vmatprep.subr.mxu0 0.0
    %465 = vmatpush1.msra.mxu0 0.0
    %466 = vmatprep.subr.mxu0 0.0
    %467 = vmatpush1.msra.mxu0 0.0
    %468 = vmatprep.subr.mxu0 0.0
    %469 = vmatpush1.msra.mxu0 0.0
    %470 = vmatprep.subr.mxu0 0.0
    %471 = vmatpush1.msra.mxu0 0.0
    %472 = vmatprep.subr.mxu0 0.0
    %473 = vmatpush1.msra.mxu0 0.0
    %474 = vmatprep.subr.mxu0 0.0
    %475 = vmatpush1.msra.mxu0 0.0
    %476 = vmatprep.subr.mxu0 0.0
    %477 = vmatpush1.msra.mxu0 0.0
    %478 = vmatprep.subr.mxu0 0.0
    %479 = vmatpush1.msra.mxu0 0.0
    %480 = vmatprep.subr.mxu0 0.0
    %481 = vmatpush1.msra.mxu0 0.0
    %482 = vmatprep.subr.mxu0 0.0
    %483 = vmatpush1.msra.mxu0 0.0
    %484 = vmatprep.subr.mxu0 0.0
    %485 = vmatpush1.msra.mxu0 0.0
    %486 = vmatprep.subr.mxu0 0.0
    %487 = vmatpush1.msra.mxu0 0.0
    %488 = vmatprep.subr.mxu0 0.0
    %489 = vmatpush1.msra.mxu0 0.0
    %490 = vmatprep.subr.mxu0 0.0
    %491 = vmatpush1.msra.mxu0 0.0
    %492 = vmatprep.subr.mxu0 0.0
    %493 = vmatpush1.msra.mxu0 0.0
    %494 = vmatprep.subr.mxu0 0.0
    %495 = vmatpush1.msra.mxu0 0.0
    %496 = vmatprep.subr.mxu0 0.0
    %497 = vmatpush1.msra.mxu0 0.0
    %498 = vmatprep.subr.mxu0 0.0
    %499 = vmatpush1.msra.mxu0 0.0
    %500 = vmatprep.mubr.f32.mxu0 0.0
    %v501 = vand.u32 %v46, 4294901760
    %502 = vmatmul.mubr.f32.gmra.mrb[0].mxu0 %v501
    %v503 = vpop.f32.mrb[0].mxu0
    %v504 = vadd.f32 %v431, %v503
    %v505 = vpop.f32.mrb[0].mxu0
    %506 = vdwg.mxu0
    %v507 = vadd.f32 %v44, %v504
    %v508 = vtanh.pop %v507
    %s509 = scalar_lea.vmem [#allocation7], 8
    %510 = vst.msk [vmem:[%s509] sm:$0xff] %vm42, %v508
    %s511 = scalar_lea.vmem [#allocation2], 8
    %v512 = vld [vmem:[%s511] sm:$0xff]
    %v514 = vsel %vm42, %v508, 0
    %516 = vmatprep.subr.mxu0 0.0
    %v517 = vand.u32 %v40, 4294901760
    %518 = vmatpush1.msra.mxu0 %v517
    %519 = vmatprep.subr.mxu0 0.0
    %v520 = vand.u32 %v41, 4294901760
    %521 = vmatpush1.msra.mxu0 %v520
    %522 = vmatprep.subr.mxu0 0.0
    %523 = vmatpush1.msra.mxu0 0.0
    %524 = vmatprep.subr.mxu0 0.0
    %525 = vmatpush1.msra.mxu0 0.0
    %526 = vmatprep.subr.mxu0 0.0
    %527 = vmatpush1.msra.mxu0 0.0
    %528 = vmatprep.subr.mxu0 0.0
    %529 = vmatpush1.msra.mxu0 0.0
    %530 = vmatprep.subr.mxu0 0.0
    %531 = vmatpush1.msra.mxu0 0.0
    %532 = vmatprep.subr.mxu0 0.0
    %533 = vmatpush1.msra.mxu0 0.0
    %534 = vmatprep.subr.mxu0 0.0
    %535 = vmatpush1.msra.mxu0 0.0
    %536 = vmatprep.subr.mxu0 0.0
    %537 = vmatpush1.msra.mxu0 0.0
    %538 = vmatprep.subr.mxu0 0.0
    %539 = vmatpush1.msra.mxu0 0.0
    %540 = vmatprep.subr.mxu0 0.0
    %541 = vmatpush1.msra.mxu0 0.0
    %542 = vmatprep.subr.mxu0 0.0
    %543 = vmatpush1.msra.mxu0 0.0
    %544 = vmatprep.subr.mxu0 0.0
    %545 = vmatpush1.msra.mxu0 0.0
    %546 = vmatprep.subr.mxu0 0.0
    %547 = vmatpush1.msra.mxu0 0.0
    %548 = vmatprep.subr.mxu0 0.0
    %549 = vmatpush1.msra.mxu0 0.0
    %550 = vmatprep.subr.mxu0 0.0
    %551 = vmatpush1.msra.mxu0 0.0
    %552 = vmatprep.subr.mxu0 0.0
    %553 = vmatpush1.msra.mxu0 0.0
    %554 = vmatprep.subr.mxu0 0.0
    %555 = vmatpush1.msra.mxu0 0.0
    %556 = vmatprep.subr.mxu0 0.0
    %557 = vmatpush1.msra.mxu0 0.0
    %558 = vmatprep.subr.mxu0 0.0
    %559 = vmatpush1.msra.mxu0 0.0
    %560 = vmatprep.subr.mxu0 0.0
    %561 = vmatpush1.msra.mxu0 0.0
    %562 = vmatprep.subr.mxu0 0.0
    %563 = vmatpush1.msra.mxu0 0.0
    %564 = vmatprep.subr.mxu0 0.0
    %565 = vmatpush1.msra.mxu0 0.0
    %566 = vmatprep.subr.mxu0 0.0
    %567 = vmatpush1.msra.mxu0 0.0
    %568 = vmatprep.subr.mxu0 0.0
    %569 = vmatpush1.msra.mxu0 0.0
    %570 = vmatprep.subr.mxu0 0.0
    %571 = vmatpush1.msra.mxu0 0.0
    %572 = vmatprep.subr.mxu0 0.0
    %573 = vmatpush1.msra.mxu0 0.0
    %574 = vmatprep.subr.mxu0 0.0
    %575 = vmatpush1.msra.mxu0 0.0
    %576 = vmatprep.subr.mxu0 0.0
    %577 = vmatpush1.msra.mxu0 0.0
    %578 = vmatprep.subr.mxu0 0.0
    %579 = vmatpush1.msra.mxu0 0.0
    %580 = vmatprep.subr.mxu0 0.0
    %581 = vmatpush1.msra.mxu0 0.0
    %582 = vmatprep.mubr.f32.mxu0 0.0
    %v583 = vand.u32 %v514, 4294901760
    %v584 = vsub.f32 %v514, %v583
    %v585 = vand.u32 %v584, 4294901760
    %v586 = vsub.f32 %v584, %v585
    %v587 = vand.u32 %v586, 4294901760
    %588 = vmatmul.mubr.f32.gmra.mrb[0].mxu0 %v587
    %v589 = vpop.f32.mrb[0].mxu0
    %v590 = vadd.f32 0.0, %v589
    %v591 = vpop.f32.mrb[0].mxu0
    %592 = vdwg.mxu0
    %593 = vmatprep.subr.mxu0 0.0
    %v594 = vand.u32 %v40, 4294901760
    %v595 = vsub.f32 %v40, %v594
    %v596 = vand.u32 %v595, 4294901760
    %v597 = vsub.f32 %v595, %v596
    %v598 = vand.u32 %v597, 4294901760
    %599 = vmatpush1.msra.mxu0 %v598
    %600 = vmatprep.subr.mxu0 0.0
    %v601 = vand.u32 %v41, 4294901760
    %v602 = vsub.f32 %v41, %v601
    %v603 = vand.u32 %v602, 4294901760
    %v604 = vsub.f32 %v602, %v603
    %v605 = vand.u32 %v604, 4294901760
    %606 = vmatpush1.msra.mxu0 %v605
    %607 = vmatprep.subr.mxu0 0.0
    %608 = vmatpush1.msra.mxu0 0.0
    %609 = vmatprep.subr.mxu0 0.0
    %610 = vmatpush1.msra.mxu0 0.0
    %611 = vmatprep.subr.mxu0 0.0
    %612 = vmatpush1.msra.mxu0 0.0
    %613 = vmatprep.subr.mxu0 0.0
    %614 = vmatpush1.msra.mxu0 0.0
    %615 = vmatprep.subr.mxu0 0.0
    %616 = vmatpush1.msra.mxu0 0.0
    %617 = vmatprep.subr.mxu0 0.0
    %618 = vmatpush1.msra.mxu0 0.0
    %619 = vmatprep.subr.mxu0 0.0
    %620 = vmatpush1.msra.mxu0 0.0
    %621 = vmatprep.subr.mxu0 0.0
    %622 = vmatpush1.msra.mxu0 0.0
    %623 = vmatprep.subr.mxu0 0.0
    %624 = vmatpush1.msra.mxu0 0.0
    %625 = vmatprep.subr.mxu0 0.0
    %626 = vmatpush1.msra.mxu0 0.0
    %627 = vmatprep.subr.mxu0 0.0
    %628 = vmatpush1.msra.mxu0 0.0
    %629 = vmatprep.subr.mxu0 0.0
    %630 = vmatpush1.msra.mxu0 0.0
    %631 = vmatprep.subr.mxu0 0.0
    %632 = vmatpush1.msra.mxu0 0.0
    %633 = vmatprep.subr.mxu0 0.0
    %634 = vmatpush1.msra.mxu0 0.0
    %635 = vmatprep.subr.mxu0 0.0
    %636 = vmatpush1.msra.mxu0 0.0
    %637 = vmatprep.subr.mxu0 0.0
    %638 = vmatpush1.msra.mxu0 0.0
    %639 = vmatprep.subr.mxu0 0.0
    %640 = vmatpush1.msra.mxu0 0.0
    %641 = vmatprep.subr.mxu0 0.0
    %642 = vmatpush1.msra.mxu0 0.0
    %643 = vmatprep.subr.mxu0 0.0
    %644 = vmatpush1.msra.mxu0 0.0
    %645 = vmatprep.subr.mxu0 0.0
    %646 = vmatpush1.msra.mxu0 0.0
    %647 = vmatprep.subr.mxu0 0.0
    %648 = vmatpush1.msra.mxu0 0.0
    %649 = vmatprep.subr.mxu0 0.0
    %650 = vmatpush1.msra.mxu0 0.0
    %651 = vmatprep.subr.mxu0 0.0
    %652 = vmatpush1.msra.mxu0 0.0
    %653 = vmatprep.subr.mxu0 0.0
    %654 = vmatpush1.msra.mxu0 0.0
    %655 = vmatprep.subr.mxu0 0.0
    %656 = vmatpush1.msra.mxu0 0.0
    %657 = vmatprep.subr.mxu0 0.0
    %658 = vmatpush1.msra.mxu0 0.0
    %659 = vmatprep.subr.mxu0 0.0
    %660 = vmatpush1.msra.mxu0 0.0
    %661 = vmatprep.subr.mxu0 0.0
    %662 = vmatpush1.msra.mxu0 0.0
    %663 = vmatprep.subr.mxu0 0.0
    %664 = vmatpush1.msra.mxu0 0.0
    %665 = vmatprep.subr.mxu0 0.0
    %666 = vmatpush1.msra.mxu0 0.0
    %667 = vmatprep.mubr.f32.mxu0 0.0
    %v668 = vand.u32 %v514, 4294901760
    %669 = vmatmul.mubr.f32.gmra.mrb[0].mxu0 %v668
    %v670 = vpop.f32.mrb[0].mxu0
    %v671 = vadd.f32 %v590, %v670
    %v672 = vpop.f32.mrb[0].mxu0
    %673 = vdwg.mxu0
    %674 = vmatprep.subr.mxu0 0.0
    %v675 = vand.u32 %v40, 4294901760
    %v676 = vsub.f32 %v40, %v675
    %677 = vmatpush1.msra.mxu0 %v676
    %678 = vmatprep.subr.mxu0 0.0
    %v679 = vand.u32 %v41, 4294901760
    %v680 = vsub.f32 %v41, %v679
    %681 = vmatpush1.msra.mxu0 %v680
    %682 = vmatprep.subr.mxu0 0.0
    %683 = vmatpush1.msra.mxu0 0.0
    %684 = vmatprep.subr.mxu0 0.0
    %685 = vmatpush1.msra.mxu0 0.0
    %686 = vmatprep.subr.mxu0 0.0
    %687 = vmatpush1.msra.mxu0 0.0
    %688 = vmatprep.subr.mxu0 0.0
    %689 = vmatpush1.msra.mxu0 0.0
    %690 = vmatprep.subr.mxu0 0.0
    %691 = vmatpush1.msra.mxu0 0.0
    %692 = vmatprep.subr.mxu0 0.0
    %693 = vmatpush1.msra.mxu0 0.0
    %694 = vmatprep.subr.mxu0 0.0
    %695 = vmatpush1.msra.mxu0 0.0
    %696 = vmatprep.subr.mxu0 0.0
    %697 = vmatpush1.msra.mxu0 0.0
    %698 = vmatprep.subr.mxu0 0.0
    %699 = vmatpush1.msra.mxu0 0.0
    %700 = vmatprep.subr.mxu0 0.0
    %701 = vmatpush1.msra.mxu0 0.0
    %702 = vmatprep.subr.mxu0 0.0
    %703 = vmatpush1.msra.mxu0 0.0
    %704 = vmatprep.subr.mxu0 0.0
    %705 = vmatpush1.msra.mxu0 0.0
    %706 = vmatprep.subr.mxu0 0.0
    %707 = vmatpush1.msra.mxu0 0.0
    %708 = vmatprep.subr.mxu0 0.0
    %709 = vmatpush1.msra.mxu0 0.0
    %710 = vmatprep.subr.mxu0 0.0
    %711 = vmatpush1.msra.mxu0 0.0
    %712 = vmatprep.subr.mxu0 0.0
    %713 = vmatpush1.msra.mxu0 0.0
    %714 = vmatprep.subr.mxu0 0.0
    %715 = vmatpush1.msra.mxu0 0.0
    %716 = vmatprep.subr.mxu0 0.0
    %717 = vmatpush1.msra.mxu0 0.0
    %718 = vmatprep.subr.mxu0 0.0
    %719 = vmatpush1.msra.mxu0 0.0
    %720 = vmatprep.subr.mxu0 0.0
    %721 = vmatpush1.msra.mxu0 0.0
    %722 = vmatprep.subr.mxu0 0.0
    %723 = vmatpush1.msra.mxu0 0.0
    %724 = vmatprep.subr.mxu0 0.0
    %725 = vmatpush1.msra.mxu0 0.0
    %726 = vmatprep.subr.mxu0 0.0
    %727 = vmatpush1.msra.mxu0 0.0
    %728 = vmatprep.subr.mxu0 0.0
    %729 = vmatpush1.msra.mxu0 0.0
    %730 = vmatprep.subr.mxu0 0.0
    %731 = vmatpush1.msra.mxu0 0.0
    %732 = vmatprep.subr.mxu0 0.0
    %733 = vmatpush1.msra.mxu0 0.0
    %734 = vmatprep.subr.mxu0 0.0
    %735 = vmatpush1.msra.mxu0 0.0
    %736 = vmatprep.subr.mxu0 0.0
    %737 = vmatpush1.msra.mxu0 0.0
    %738 = vmatprep.subr.mxu0 0.0
    %739 = vmatpush1.msra.mxu0 0.0
    %740 = vmatprep.subr.mxu0 0.0
    %741 = vmatpush1.msra.mxu0 0.0
    %742 = vmatprep.mubr.f32.mxu0 0.0
    %v743 = vand.u32 %v514, 4294901760
    %v744 = vsub.f32 %v514, %v743
    %745 = vmatmul.mubr.f32.gmra.mrb[0].mxu0 %v744
    %v746 = vpop.f32.mrb[0].mxu0
    %v747 = vadd.f32 %v671, %v746
    %v748 = vpop.f32.mrb[0].mxu0
    %749 = vdwg.mxu0
    %750 = vmatprep.subr.mxu0 0.0
    %v751 = vand.u32 %v40, 4294901760
    %752 = vmatpush1.msra.mxu0 %v751
    %753 = vmatprep.subr.mxu0 0.0
    %v754 = vand.u32 %v41, 4294901760
    %755 = vmatpush1.msra.mxu0 %v754
    %756 = vmatprep.subr.mxu0 0.0
    %757 = vmatpush1.msra.mxu0 0.0
    %758 = vmatprep.subr.mxu0 0.0
    %759 = vmatpush1.msra.mxu0 0.0
    %760 = vmatprep.subr.mxu0 0.0
    %761 = vmatpush1.msra.mxu0 0.0
    %762 = vmatprep.subr.mxu0 0.0
    %763 = vmatpush1.msra.mxu0 0.0
    %764 = vmatprep.subr.mxu0 0.0
    %765 = vmatpush1.msra.mxu0 0.0
    %766 = vmatprep.subr.mxu0 0.0
    %767 = vmatpush1.msra.mxu0 0.0
    %768 = vmatprep.subr.mxu0 0.0
    %769 = vmatpush1.msra.mxu0 0.0
    %770 = vmatprep.subr.mxu0 0.0
    %771 = vmatpush1.msra.mxu0 0.0
    %772 = vmatprep.subr.mxu0 0.0
    %773 = vmatpush1.msra.mxu0 0.0
    %774 = vmatprep.subr.mxu0 0.0
    %775 = vmatpush1.msra.mxu0 0.0
    %776 = vmatprep.subr.mxu0 0.0
    %777 = vmatpush1.msra.mxu0 0.0
    %778 = vmatprep.subr.mxu0 0.0
    %779 = vmatpush1.msra.mxu0 0.0
    %780 = vmatprep.subr.mxu0 0.0
    %781 = vmatpush1.msra.mxu0 0.0
    %782 = vmatprep.subr.mxu0 0.0
    %783 = vmatpush1.msra.mxu0 0.0
    %784 = vmatprep.subr.mxu0 0.0
    %785 = vmatpush1.msra.mxu0 0.0
    %786 = vmatprep.subr.mxu0 0.0
    %787 = vmatpush1.msra.mxu0 0.0
    %788 = vmatprep.subr.mxu0 0.0
    %789 = vmatpush1.msra.mxu0 0.0
    %790 = vmatprep.subr.mxu0 0.0
    %791 = vmatpush1.msra.mxu0 0.0
    %792 = vmatprep.subr.mxu0 0.0
    %793 = vmatpush1.msra.mxu0 0.0
    %794 = vmatprep.subr.mxu0 0.0
    %795 = vmatpush1.msra.mxu0 0.0
    %796 = vmatprep.subr.mxu0 0.0
    %797 = vmatpush1.msra.mxu0 0.0
    %798 = vmatprep.subr.mxu0 0.0
    %799 = vmatpush1.msra.mxu0 0.0
    %800 = vmatprep.subr.mxu0 0.0
    %801 = vmatpush1.msra.mxu0 0.0
    %802 = vmatprep.subr.mxu0 0.0
    %803 = vmatpush1.msra.mxu0 0.0
    %804 = vmatprep.subr.mxu0 0.0
    %805 = vmatpush1.msra.mxu0 0.0
    %806 = vmatprep.subr.mxu0 0.0
    %807 = vmatpush1.msra.mxu0 0.0
    %808 = vmatprep.subr.mxu0 0.0
    %809 = vmatpush1.msra.mxu0 0.0
    %810 = vmatprep.subr.mxu0 0.0
    %811 = vmatpush1.msra.mxu0 0.0
    %812 = vmatprep.subr.mxu0 0.0
    %813 = vmatpush1.msra.mxu0 0.0
    %814 = vmatprep.subr.mxu0 0.0
    %815 = vmatpush1.msra.mxu0 0.0
    %816 = vmatprep.mubr.f32.mxu0 0.0
    %v817 = vand.u32 %v514, 4294901760
    %v818 = vsub.f32 %v514, %v817
    %v819 = vand.u32 %v818, 4294901760
    %820 = vmatmul.mubr.f32.gmra.mrb[0].mxu0 %v819
    %v821 = vpop.f32.mrb[0].mxu0
    %v822 = vadd.f32 %v747, %v821
    %v823 = vpop.f32.mrb[0].mxu0
    %824 = vdwg.mxu0
    %825 = vmatprep.subr.mxu0 0.0
    %v826 = vand.u32 %v40, 4294901760
    %v827 = vsub.f32 %v40, %v826
    %v828 = vand.u32 %v827, 4294901760
    %829 = vmatpush1.msra.mxu0 %v828
    %830 = vmatprep.subr.mxu0 0.0
    %v831 = vand.u32 %v41, 4294901760
    %v832 = vsub.f32 %v41, %v831
    %v833 = vand.u32 %v832, 4294901760
    %834 = vmatpush1.msra.mxu0 %v833
    %835 = vmatprep.subr.mxu0 0.0
    %836 = vmatpush1.msra.mxu0 0.0
    %837 = vmatprep.subr.mxu0 0.0
    %838 = vmatpush1.msra.mxu0 0.0
    %839 = vmatprep.subr.mxu0 0.0
    %840 = vmatpush1.msra.mxu0 0.0
    %841 = vmatprep.subr.mxu0 0.0
    %842 = vmatpush1.msra.mxu0 0.0
    %843 = vmatprep.subr.mxu0 0.0
    %844 = vmatpush1.msra.mxu0 0.0
    %845 = vmatprep.subr.mxu0 0.0
    %846 = vmatpush1.msra.mxu0 0.0
    %847 = vmatprep.subr.mxu0 0.0
    %848 = vmatpush1.msra.mxu0 0.0
    %849 = vmatprep.subr.mxu0 0.0
    %850 = vmatpush1.msra.mxu0 0.0
    %851 = vmatprep.subr.mxu0 0.0
    %852 = vmatpush1.msra.mxu0 0.0
    %853 = vmatprep.subr.mxu0 0.0
    %854 = vmatpush1.msra.mxu0 0.0
    %855 = vmatprep.subr.mxu0 0.0
    %856 = vmatpush1.msra.mxu0 0.0
    %857 = vmatprep.subr.mxu0 0.0
    %858 = vmatpush1.msra.mxu0 0.0
    %859 = vmatprep.subr.mxu0 0.0
    %860 = vmatpush1.msra.mxu0 0.0
    %861 = vmatprep.subr.mxu0 0.0
    %862 = vmatpush1.msra.mxu0 0.0
    %863 = vmatprep.subr.mxu0 0.0
    %864 = vmatpush1.msra.mxu0 0.0
    %865 = vmatprep.subr.mxu0 0.0
    %866 = vmatpush1.msra.mxu0 0.0
    %867 = vmatprep.subr.mxu0 0.0
    %868 = vmatpush1.msra.mxu0 0.0
    %869 = vmatprep.subr.mxu0 0.0
    %870 = vmatpush1.msra.mxu0 0.0
    %871 = vmatprep.subr.mxu0 0.0
    %872 = vmatpush1.msra.mxu0 0.0
    %873 = vmatprep.subr.mxu0 0.0
    %874 = vmatpush1.msra.mxu0 0.0
    %875 = vmatprep.subr.mxu0 0.0
    %876 = vmatpush1.msra.mxu0 0.0
    %877 = vmatprep.subr.mxu0 0.0
    %878 = vmatpush1.msra.mxu0 0.0
    %879 = vmatprep.subr.mxu0 0.0
    %880 = vmatpush1.msra.mxu0 0.0
    %881 = vmatprep.subr.mxu0 0.0
    %882 = vmatpush1.msra.mxu0 0.0
    %883 = vmatprep.subr.mxu0 0.0
    %884 = vmatpush1.msra.mxu0 0.0
    %885 = vmatprep.subr.mxu0 0.0
    %886 = vmatpush1.msra.mxu0 0.0
    %887 = vmatprep.subr.mxu0 0.0
    %888 = vmatpush1.msra.mxu0 0.0
    %889 = vmatprep.subr.mxu0 0.0
    %890 = vmatpush1.msra.mxu0 0.0
    %891 = vmatprep.subr.mxu0 0.0
    %892 = vmatpush1.msra.mxu0 0.0
    %893 = vmatprep.subr.mxu0 0.0
    %894 = vmatpush1.msra.mxu0 0.0
    %895 = vmatprep.mubr.f32.mxu0 0.0
    %v896 = vand.u32 %v514, 4294901760
    %897 = vmatmul.mubr.f32.gmra.mrb[0].mxu0 %v896
    %v898 = vpop.f32.mrb[0].mxu0
    %v899 = vadd.f32 %v822, %v898
    %v900 = vpop.f32.mrb[0].mxu0
    %901 = vdwg.mxu0
    %902 = vmatprep.subr.mxu0 0.0
    %v903 = vand.u32 %v40, 4294901760
    %904 = vmatpush1.msra.mxu0 %v903
    %905 = vmatprep.subr.mxu0 0.0
    %v906 = vand.u32 %v41, 4294901760
    %907 = vmatpush1.msra.mxu0 %v906
    %908 = vmatprep.subr.mxu0 0.0
    %909 = vmatpush1.msra.mxu0 0.0
    %910 = vmatprep.subr.mxu0 0.0
    %911 = vmatpush1.msra.mxu0 0.0
    %912 = vmatprep.subr.mxu0 0.0
    %913 = vmatpush1.msra.mxu0 0.0
    %914 = vmatprep.subr.mxu0 0.0
    %915 = vmatpush1.msra.mxu0 0.0
    %916 = vmatprep.subr.mxu0 0.0
    %917 = vmatpush1.msra.mxu0 0.0
    %918 = vmatprep.subr.mxu0 0.0
    %919 = vmatpush1.msra.mxu0 0.0
    %920 = vmatprep.subr.mxu0 0.0
    %921 = vmatpush1.msra.mxu0 0.0
    %922 = vmatprep.subr.mxu0 0.0
    %923 = vmatpush1.msra.mxu0 0.0
    %924 = vmatprep.subr.mxu0 0.0
    %925 = vmatpush1.msra.mxu0 0.0
    %926 = vmatprep.subr.mxu0 0.0
    %927 = vmatpush1.msra.mxu0 0.0
    %928 = vmatprep.subr.mxu0 0.0
    %929 = vmatpush1.msra.mxu0 0.0
    %930 = vmatprep.subr.mxu0 0.0
    %931 = vmatpush1.msra.mxu0 0.0
    %932 = vmatprep.subr.mxu0 0.0
    %933 = vmatpush1.msra.mxu0 0.0
    %934 = vmatprep.subr.mxu0 0.0
    %935 = vmatpush1.msra.mxu0 0.0
    %936 = vmatprep.subr.mxu0 0.0
    %937 = vmatpush1.msra.mxu0 0.0
    %938 = vmatprep.subr.mxu0 0.0
    %939 = vmatpush1.msra.mxu0 0.0
    %940 = vmatprep.subr.mxu0 0.0
    %941 = vmatpush1.msra.mxu0 0.0
    %942 = vmatprep.subr.mxu0 0.0
    %943 = vmatpush1.msra.mxu0 0.0
    %944 = vmatprep.subr.mxu0 0.0
    %945 = vmatpush1.msra.mxu0 0.0
    %946 = vmatprep.subr.mxu0 0.0
    %947 = vmatpush1.msra.mxu0 0.0
    %948 = vmatprep.subr.mxu0 0.0
    %949 = vmatpush1.msra.mxu0 0.0
    %950 = vmatprep.subr.mxu0 0.0
    %951 = vmatpush1.msra.mxu0 0.0
    %952 = vmatprep.subr.mxu0 0.0
    %953 = vmatpush1.msra.mxu0 0.0
    %954 = vmatprep.subr.mxu0 0.0
    %955 = vmatpush1.msra.mxu0 0.0
    %956 = vmatprep.subr.mxu0 0.0
    %957 = vmatpush1.msra.mxu0 0.0
    %958 = vmatprep.subr.mxu0 0.0
    %959 = vmatpush1.msra.mxu0 0.0
    %960 = vmatprep.subr.mxu0 0.0
    %961 = vmatpush1.msra.mxu0 0.0
    %962 = vmatprep.subr.mxu0 0.0
    %963 = vmatpush1.msra.mxu0 0.0
    %964 = vmatprep.subr.mxu0 0.0
    %965 = vmatpush1.msra.mxu0 0.0
    %966 = vmatprep.subr.mxu0 0.0
    %967 = vmatpush1.msra.mxu0 0.0
    %968 = vmatprep.mubr.f32.mxu0 0.0
    %v969 = vand.u32 %v514, 4294901760
    %970 = vmatmul.mubr.f32.gmra.mrb[0].mxu0 %v969
    %v971 = vpop.f32.mrb[0].mxu0
    %v972 = vadd.f32 %v899, %v971
    %v973 = vpop.f32.mrb[0].mxu0
    %974 = vdwg.mxu0
    %v975 = vadd.f32 %v512, %v972
    %v976 = vtanh.pop %v975
    %s977 = scalar_lea.vmem [#allocation7], 16
    %978 = vst.msk [vmem:[%s977] sm:$0xff] %vm42, %v976
    %s979 = scalar_lea.vmem [#allocation2], 16
    %v980 = vld [vmem:[%s979] sm:$0xff]
    %v982 = vsel %vm42, %v976, 0
    %984 = vmatprep.subr.mxu0 0.0
    %v985 = vand.u32 %v40, 4294901760
    %986 = vmatpush1.msra.mxu0 %v985
    %987 = vmatprep.subr.mxu0 0.0
    %v988 = vand.u32 %v41, 4294901760
    %989 = vmatpush1.msra.mxu0 %v988
    %990 = vmatprep.subr.mxu0 0.0
    %991 = vmatpush1.msra.mxu0 0.0
    %992 = vmatprep.subr.mxu0 0.0
    %993 = vmatpush1.msra.mxu0 0.0
    %994 = vmatprep.subr.mxu0 0.0
    %995 = vmatpush1.msra.mxu0 0.0
    %996 = vmatprep.subr.mxu0 0.0
    %997 = vmatpush1.msra.mxu0 0.0
    %998 = vmatprep.subr.mxu0 0.0
    %999 = vmatpush1.msra.mxu0 0.0
    %1000 = vmatprep.subr.mxu0 0.0
    %1001 = vmatpush1.msra.mxu0 0.0
    %1002 = vmatprep.subr.mxu0 0.0
    %1003 = vmatpush1.msra.mxu0 0.0
    %1004 = vmatprep.subr.mxu0 0.0
    %1005 = vmatpush1.msra.mxu0 0.0
    %1006 = vmatprep.subr.mxu0 0.0
    %1007 = vmatpush1.msra.mxu0 0.0
    %1008 = vmatprep.subr.mxu0 0.0
    %1009 = vmatpush1.msra.mxu0 0.0
    %1010 = vmatprep.subr.mxu0 0.0
    %1011 = vmatpush1.msra.mxu0 0.0
    %1012 = vmatprep.subr.mxu0 0.0
    %1013 = vmatpush1.msra.mxu0 0.0
    %1014 = vmatprep.subr.mxu0 0.0
    %1015 = vmatpush1.msra.mxu0 0.0
    %1016 = vmatprep.subr.mxu0 0.0
    %1017 = vmatpush1.msra.mxu0 0.0
    %1018 = vmatprep.subr.mxu0 0.0
    %1019 = vmatpush1.msra.mxu0 0.0
    %1020 = vmatprep.subr.mxu0 0.0
    %1021 = vmatpush1.msra.mxu0 0.0
    %1022 = vmatprep.subr.mxu0 0.0
    %1023 = vmatpush1.msra.mxu0 0.0
    %1024 = vmatprep.subr.mxu0 0.0
    %1025 = vmatpush1.msra.mxu0 0.0
    %1026 = vmatprep.subr.mxu0 0.0
    %1027 = vmatpush1.msra.mxu0 0.0
    %1028 = vmatprep.subr.mxu0 0.0
    %1029 = vmatpush1.msra.mxu0 0.0
    %1030 = vmatprep.subr.mxu0 0.0
    %1031 = vmatpush1.msra.mxu0 0.0
    %1032 = vmatprep.subr.mxu0 0.0
    %1033 = vmatpush1.msra.mxu0 0.0
    %1034 = vmatprep.subr.mxu0 0.0
    %1035 = vmatpush1.msra.mxu0 0.0
    %1036 = vmatprep.subr.mxu0 0.0
    %1037 = vmatpush1.msra.mxu0 0.0
    %1038 = vmatprep.subr.mxu0 0.0
    %1039 = vmatpush1.msra.mxu0 0.0
    %1040 = vmatprep.subr.mxu0 0.0
    %1041 = vmatpush1.msra.mxu0 0.0
    %1042 = vmatprep.subr.mxu0 0.0
    %1043 = vmatpush1.msra.mxu0 0.0
    %1044 = vmatprep.subr.mxu0 0.0
    %1045 = vmatpush1.msra.mxu0 0.0
    %1046 = vmatprep.subr.mxu0 0.0
    %1047 = vmatpush1.msra.mxu0 0.0
    %1048 = vmatprep.subr.mxu0 0.0
    %1049 = vmatpush1.msra.mxu0 0.0
    %1050 = vmatprep.mubr.f32.mxu0 0.0
    %v1051 = vand.u32 %v982, 4294901760
    %v1052 = vsub.f32 %v982, %v1051
    %v1053 = vand.u32 %v1052, 4294901760
    %v1054 = vsub.f32 %v1052, %v1053
    %v1055 = vand.u32 %v1054, 4294901760
    %1056 = vmatmul.mubr.f32.gmra.mrb[0].mxu0 %v1055
    %v1057 = vpop.f32.mrb[0].mxu0
    %v1058 = vadd.f32 0.0, %v1057
    %v1059 = vpop.f32.mrb[0].mxu0
    %1060 = vdwg.mxu0
    %1061 = vmatprep.subr.mxu0 0.0
    %v1062 = vand.u32 %v40, 4294901760
    %v1063 = vsub.f32 %v40, %v1062
    %v1064 = vand.u32 %v1063, 4294901760
    %v1065 = vsub.f32 %v1063, %v1064
    %v1066 = vand.u32 %v1065, 4294901760
    %1067 = vmatpush1.msra.mxu0 %v1066
    %1068 = vmatprep.subr.mxu0 0.0
    %v1069 = vand.u32 %v41, 4294901760
    %v1070 = vsub.f32 %v41, %v1069
    %v1071 = vand.u32 %v1070, 4294901760
    %v1072 = vsub.f32 %v1070, %v1071
    %v1073 = vand.u32 %v1072, 4294901760
    %1074 = vmatpush1.msra.mxu0 %v1073
    %1075 = vmatprep.subr.mxu0 0.0
    %1076 = vmatpush1.msra.mxu0 0.0
    %1077 = vmatprep.subr.mxu0 0.0
    %1078 = vmatpush1.msra.mxu0 0.0
    %1079 = vmatprep.subr.mxu0 0.0
    %1080 = vmatpush1.msra.mxu0 0.0
    %1081 = vmatprep.subr.mxu0 0.0
    %1082 = vmatpush1.msra.mxu0 0.0
    %1083 = vmatprep.subr.mxu0 0.0
    %1084 = vmatpush1.msra.mxu0 0.0
    %1085 = vmatprep.subr.mxu0 0.0
    %1086 = vmatpush1.msra.mxu0 0.0
    %1087 = vmatprep.subr.mxu0 0.0
    %1088 = vmatpush1.msra.mxu0 0.0
    %1089 = vmatprep.subr.mxu0 0.0
    %1090 = vmatpush1.msra.mxu0 0.0
    %1091 = vmatprep.subr.mxu0 0.0
    %1092 = vmatpush1.msra.mxu0 0.0
    %1093 = vmatprep.subr.mxu0 0.0
    %1094 = vmatpush1.msra.mxu0 0.0
    %1095 = vmatprep.subr.mxu0 0.0
    %1096 = vmatpush1.msra.mxu0 0.0
    %1097 = vmatprep.subr.mxu0 0.0
    %1098 = vmatpush1.msra.mxu0 0.0
    %1099 = vmatprep.subr.mxu0 0.0
    %1100 = vmatpush1.msra.mxu0 0.0
    %1101 = vmatprep.subr.mxu0 0.0
    %1102 = vmatpush1.msra.mxu0 0.0
    %1103 = vmatprep.subr.mxu0 0.0
    %1104 = vmatpush1.msra.mxu0 0.0
    %1105 = vmatprep.subr.mxu0 0.0
    %1106 = vmatpush1.msra.mxu0 0.0
    %1107 = vmatprep.subr.mxu0 0.0
    %1108 = vmatpush1.msra.mxu0 0.0
    %1109 = vmatprep.subr.mxu0 0.0
    %1110 = vmatpush1.msra.mxu0 0.0
    %1111 = vmatprep.subr.mxu0 0.0
    %1112 = vmatpush1.msra.mxu0 0.0
    %1113 = vmatprep.subr.mxu0 0.0
    %1114 = vmatpush1.msra.mxu0 0.0
    %1115 = vmatprep.subr.mxu0 0.0
    %1116 = vmatpush1.msra.mxu0 0.0
    %1117 = vmatprep.subr.mxu0 0.0
    %1118 = vmatpush1.msra.mxu0 0.0
    %1119 = vmatprep.subr.mxu0 0.0
    %1120 = vmatpush1.msra.mxu0 0.0
    %1121 = vmatprep.subr.mxu0 0.0
    %1122 = vmatpush1.msra.mxu0 0.0
    %1123 = vmatprep.subr.mxu0 0.0
    %1124 = vmatpush1.msra.mxu0 0.0
    %1125 = vmatprep.subr.mxu0 0.0
    %1126 = vmatpush1.msra.mxu0 0.0
    %1127 = vmatprep.subr.mxu0 0.0
    %1128 = vmatpush1.msra.mxu0 0.0
    %1129 = vmatprep.subr.mxu0 0.0
    %1130 = vmatpush1.msra.mxu0 0.0
    %1131 = vmatprep.subr.mxu0 0.0
    %1132 = vmatpush1.msra.mxu0 0.0
    %1133 = vmatprep.subr.mxu0 0.0
    %1134 = vmatpush1.msra.mxu0 0.0
    %1135 = vmatprep.mubr.f32.mxu0 0.0
    %v1136 = vand.u32 %v982, 4294901760
    %1137 = vmatmul.mubr.f32.gmra.mrb[0].mxu0 %v1136
    %v1138 = vpop.f32.mrb[0].mxu0
    %v1139 = vadd.f32 %v1058, %v1138
    %v1140 = vpop.f32.mrb[0].mxu0
    %1141 = vdwg.mxu0
    %1142 = vmatprep.subr.mxu0 0.0
    %v1143 = vand.u32 %v40, 4294901760
    %v1144 = vsub.f32 %v40, %v1143
    %1145 = vmatpush1.msra.mxu0 %v1144
    %1146 = vmatprep.subr.mxu0 0.0
    %v1147 = vand.u32 %v41, 4294901760
    %v1148 = vsub.f32 %v41, %v1147
    %1149 = vmatpush1.msra.mxu0 %v1148
    %1150 = vmatprep.subr.mxu0 0.0
    %1151 = vmatpush1.msra.mxu0 0.0
    %1152 = vmatprep.subr.mxu0 0.0
    %1153 = vmatpush1.msra.mxu0 0.0
    %1154 = vmatprep.subr.mxu0 0.0
    %1155 = vmatpush1.msra.mxu0 0.0
    %1156 = vmatprep.subr.mxu0 0.0
    %1157 = vmatpush1.msra.mxu0 0.0
    %1158 = vmatprep.subr.mxu0 0.0
    %1159 = vmatpush1.msra.mxu0 0.0
    %1160 = vmatprep.subr.mxu0 0.0
    %1161 = vmatpush1.msra.mxu0 0.0
    %1162 = vmatprep.subr.mxu0 0.0
    %1163 = vmatpush1.msra.mxu0 0.0
    %1164 = vmatprep.subr.mxu0 0.0
    %1165 = vmatpush1.msra.mxu0 0.0
    %1166 = vmatprep.subr.mxu0 0.0
    %1167 = vmatpush1.msra.mxu0 0.0
    %1168 = vmatprep.subr.mxu0 0.0
    %1169 = vmatpush1.msra.mxu0 0.0
    %1170 = vmatprep.subr.mxu0 0.0
    %1171 = vmatpush1.msra.mxu0 0.0
    %1172 = vmatprep.subr.mxu0 0.0
    %1173 = vmatpush1.msra.mxu0 0.0
    %1174 = vmatprep.subr.mxu0 0.0
    %1175 = vmatpush1.msra.mxu0 0.0
    %1176 = vmatprep.subr.mxu0 0.0
    %1177 = vmatpush1.msra.mxu0 0.0
    %1178 = vmatprep.subr.mxu0 0.0
    %1179 = vmatpush1.msra.mxu0 0.0
    %1180 = vmatprep.subr.mxu0 0.0
    %1181 = vmatpush1.msra.mxu0 0.0
    %1182 = vmatprep.subr.mxu0 0.0
    %1183 = vmatpush1.msra.mxu0 0.0
    %1184 = vmatprep.subr.mxu0 0.0
    %1185 = vmatpush1.msra.mxu0 0.0
    %1186 = vmatprep.subr.mxu0 0.0
    %1187 = vmatpush1.msra.mxu0 0.0
    %1188 = vmatprep.subr.mxu0 0.0
    %1189 = vmatpush1.msra.mxu0 0.0
    %1190 = vmatprep.subr.mxu0 0.0
    %1191 = vmatpush1.msra.mxu0 0.0
    %1192 = vmatprep.subr.mxu0 0.0
    %1193 = vmatpush1.msra.mxu0 0.0
    %1194 = vmatprep.subr.mxu0 0.0
    %1195 = vmatpush1.msra.mxu0 0.0
    %1196 = vmatprep.subr.mxu0 0.0
    %1197 = vmatpush1.msra.mxu0 0.0
    %1198 = vmatprep.subr.mxu0 0.0
    %1199 = vmatpush1.msra.mxu0 0.0
    %1200 = vmatprep.subr.mxu0 0.0
    %1201 = vmatpush1.msra.mxu0 0.0
    %1202 = vmatprep.subr.mxu0 0.0
    %1203 = vmatpush1.msra.mxu0 0.0
    %1204 = vmatprep.subr.mxu0 0.0
    %1205 = vmatpush1.msra.mxu0 0.0
    %1206 = vmatprep.subr.mxu0 0.0
    %1207 = vmatpush1.msra.mxu0 0.0
    %1208 = vmatprep.subr.mxu0 0.0
    %1209 = vmatpush1.msra.mxu0 0.0
    %1210 = vmatprep.mubr.f32.mxu0 0.0
    %v1211 = vand.u32 %v982, 4294901760
    %v1212 = vsub.f32 %v982, %v1211
    %1213 = vmatmul.mubr.f32.gmra.mrb[0].mxu0 %v1212
    %v1214 = vpop.f32.mrb[0].mxu0
    %v1215 = vadd.f32 %v1139, %v1214
    %v1216 = vpop.f32.mrb[0].mxu0
    %1217 = vdwg.mxu0
    %1218 = vmatprep.subr.mxu0 0.0
    %v1219 = vand.u32 %v40, 4294901760
    %1220 = vmatpush1.msra.mxu0 %v1219
    %1221 = vmatprep.subr.mxu0 0.0
    %v1222 = vand.u32 %v41, 4294901760
    %1223 = vmatpush1.msra.mxu0 %v1222
    %1224 = vmatprep.subr.mxu0 0.0
    %1225 = vmatpush1.msra.mxu0 0.0
    %1226 = vmatprep.subr.mxu0 0.0
    %1227 = vmatpush1.msra.mxu0 0.0
    %1228 = vmatprep.subr.mxu0 0.0
    %1229 = vmatpush1.msra.mxu0 0.0
    %1230 = vmatprep.subr.mxu0 0.0
    %1231 = vmatpush1.msra.mxu0 0.0
    %1232 = vmatprep.subr.mxu0 0.0
    %1233 = vmatpush1.msra.mxu0 0.0
    %1234 = vmatprep.subr.mxu0 0.0
    %1235 = vmatpush1.msra.mxu0 0.0
    %1236 = vmatprep.subr.mxu0 0.0
    %1237 = vmatpush1.msra.mxu0 0.0
    %1238 = vmatprep.subr.mxu0 0.0
    %1239 = vmatpush1.msra.mxu0 0.0
    %1240 = vmatprep.subr.mxu0 0.0
    %1241 = vmatpush1.msra.mxu0 0.0
    %1242 = vmatprep.subr.mxu0 0.0
    %1243 = vmatpush1.msra.mxu0 0.0
    %1244 = vmatprep.subr.mxu0 0.0
    %1245 = vmatpush1.msra.mxu0 0.0
    %1246 = vmatprep.subr.mxu0 0.0
    %1247 = vmatpush1.msra.mxu0 0.0
    %1248 = vmatprep.subr.mxu0 0.0
    %1249 = vmatpush1.msra.mxu0 0.0
    %1250 = vmatprep.subr.mxu0 0.0
    %1251 = vmatpush1.msra.mxu0 0.0
    %1252 = vmatprep.subr.mxu0 0.0
    %1253 = vmatpush1.msra.mxu0 0.0
    %1254 = vmatprep.subr.mxu0 0.0
    %1255 = vmatpush1.msra.mxu0 0.0
    %1256 = vmatprep.subr.mxu0 0.0
    %1257 = vmatpush1.msra.mxu0 0.0
    %1258 = vmatprep.subr.mxu0 0.0
    %1259 = vmatpush1.msra.mxu0 0.0
    %1260 = vmatprep.subr.mxu0 0.0
    %1261 = vmatpush1.msra.mxu0 0.0
    %1262 = vmatprep.subr.mxu0 0.0
    %1263 = vmatpush1.msra.mxu0 0.0
    %1264 = vmatprep.subr.mxu0 0.0
    %1265 = vmatpush1.msra.mxu0 0.0
    %1266 = vmatprep.subr.mxu0 0.0
    %1267 = vmatpush1.msra.mxu0 0.0
    %1268 = vmatprep.subr.mxu0 0.0
    %1269 = vmatpush1.msra.mxu0 0.0
    %1270 = vmatprep.subr.mxu0 0.0
    %1271 = vmatpush1.msra.mxu0 0.0
    %1272 = vmatprep.subr.mxu0 0.0
    %1273 = vmatpush1.msra.mxu0 0.0
    %1274 = vmatprep.subr.mxu0 0.0
    %1275 = vmatpush1.msra.mxu0 0.0
    %1276 = vmatprep.subr.mxu0 0.0
    %1277 = vmatpush1.msra.mxu0 0.0
    %1278 = vmatprep.subr.mxu0 0.0
    %1279 = vmatpush1.msra.mxu0 0.0
    %1280 = vmatprep.subr.mxu0 0.0
    %1281 = vmatpush1.msra.mxu0 0.0
    %1282 = vmatprep.subr.mxu0 0.0
    %1283 = vmatpush1.msra.mxu0 0.0
    %1284 = vmatprep.mubr.f32.mxu0 0.0
    %v1285 = vand.u32 %v982, 4294901760
    %v1286 = vsub.f32 %v982, %v1285
    %v1287 = vand.u32 %v1286, 4294901760
    %1288 = vmatmul.mubr.f32.gmra.mrb[0].mxu0 %v1287
    %v1289 = vpop.f32.mrb[0].mxu0
    %v1290 = vadd.f32 %v1215, %v1289
    %v1291 = vpop.f32.mrb[0].mxu0
    %1292 = vdwg.mxu0
    %1293 = vmatprep.subr.mxu0 0.0
    %v1294 = vand.u32 %v40, 4294901760
    %v1295 = vsub.f32 %v40, %v1294
    %v1296 = vand.u32 %v1295, 4294901760
    %1297 = vmatpush1.msra.mxu0 %v1296
    %1298 = vmatprep.subr.mxu0 0.0
    %v1299 = vand.u32 %v41, 4294901760
    %v1300 = vsub.f32 %v41, %v1299
    %v1301 = vand.u32 %v1300, 4294901760
    %1302 = vmatpush1.msra.mxu0 %v1301
    %1303 = vmatprep.subr.mxu0 0.0
    %1304 = vmatpush1.msra.mxu0 0.0
    %1305 = vmatprep.subr.mxu0 0.0
    %1306 = vmatpush1.msra.mxu0 0.0
    %1307 = vmatprep.subr.mxu0 0.0
    %1308 = vmatpush1.msra.mxu0 0.0
    %1309 = vmatprep.subr.mxu0 0.0
    %1310 = vmatpush1.msra.mxu0 0.0
    %1311 = vmatprep.subr.mxu0 0.0
    %1312 = vmatpush1.msra.mxu0 0.0
    %1313 = vmatprep.subr.mxu0 0.0
    %1314 = vmatpush1.msra.mxu0 0.0
    %1315 = vmatprep.subr.mxu0 0.0
    %1316 = vmatpush1.msra.mxu0 0.0
    %1317 = vmatprep.subr.mxu0 0.0
    %1318 = vmatpush1.msra.mxu0 0.0
    %1319 = vmatprep.subr.mxu0 0.0
    %1320 = vmatpush1.msra.mxu0 0.0
    %1321 = vmatprep.subr.mxu0 0.0
    %1322 = vmatpush1.msra.mxu0 0.0
    %1323 = vmatprep.subr.mxu0 0.0
    %1324 = vmatpush1.msra.mxu0 0.0
    %1325 = vmatprep.subr.mxu0 0.0
    %1326 = vmatpush1.msra.mxu0 0.0
    %1327 = vmatprep.subr.mxu0 0.0
    %1328 = vmatpush1.msra.mxu0 0.0
    %1329 = vmatprep.subr.mxu0 0.0
    %1330 = vmatpush1.msra.mxu0 0.0
    %1331 = vmatprep.subr.mxu0 0.0
    %1332 = vmatpush1.msra.mxu0 0.0
    %1333 = vmatprep.subr.mxu0 0.0
    %1334 = vmatpush1.msra.mxu0 0.0
    %1335 = vmatprep.subr.mxu0 0.0
    %1336 = vmatpush1.msra.mxu0 0.0
    %1337 = vmatprep.subr.mxu0 0.0
    %1338 = vmatpush1.msra.mxu0 0.0
    %1339 = vmatprep.subr.mxu0 0.0
    %1340 = vmatpush1.msra.mxu0 0.0
    %1341 = vmatprep.subr.mxu0 0.0
    %1342 = vmatpush1.msra.mxu0 0.0
    %1343 = vmatprep.subr.mxu0 0.0
    %1344 = vmatpush1.msra.mxu0 0.0
    %1345 = vmatprep.subr.mxu0 0.0
    %1346 = vmatpush1.msra.mxu0 0.0
    %1347 = vmatprep.subr.mxu0 0.0
    %1348 = vmatpush1.msra.mxu0 0.0
    %1349 = vmatprep.subr.mxu0 0.0
    %1350 = vmatpush1.msra.mxu0 0.0
    %1351 = vmatprep.subr.mxu0 0.0
    %1352 = vmatpush1.msra.mxu0 0.0
    %1353 = vmatprep.subr.mxu0 0.0
    %1354 = vmatpush1.msra.mxu0 0.0
    %1355 = vmatprep.subr.mxu0 0.0
    %1356 = vmatpush1.msra.mxu0 0.0
    %1357 = vmatprep.subr.mxu0 0.0
    %1358 = vmatpush1.msra.mxu0 0.0
    %1359 = vmatprep.subr.mxu0 0.0
    %1360 = vmatpush1.msra.mxu0 0.0
    %1361 = vmatprep.subr.mxu0 0.0
    %1362 = vmatpush1.msra.mxu0 0.0
    %1363 = vmatprep.mubr.f32.mxu0 0.0
    %v1364 = vand.u32 %v982, 4294901760
    %1365 = vmatmul.mubr.f32.gmra.mrb[0].mxu0 %v1364
    %v1366 = vpop.f32.mrb[0].mxu0
    %v1367 = vadd.f32 %v1290, %v1366
    %v1368 = vpop.f32.mrb[0].mxu0
    %1369 = vdwg.mxu0
    %1370 = vmatprep.subr.mxu0 0.0
    %v1371 = vand.u32 %v40, 4294901760
    %1372 = vmatpush1.msra.mxu0 %v1371
    %1373 = vmatprep.subr.mxu0 0.0
    %v1374 = vand.u32 %v41, 4294901760
    %1375 = vmatpush1.msra.mxu0 %v1374
    %1376 = vmatprep.subr.mxu0 0.0
    %1377 = vmatpush1.msra.mxu0 0.0
    %1378 = vmatprep.subr.mxu0 0.0
    %1379 = vmatpush1.msra.mxu0 0.0
    %1380 = vmatprep.subr.mxu0 0.0
    %1381 = vmatpush1.msra.mxu0 0.0
    %1382 = vmatprep.subr.mxu0 0.0
    %1383 = vmatpush1.msra.mxu0 0.0
    %1384 = vmatprep.subr.mxu0 0.0
    %1385 = vmatpush1.msra.mxu0 0.0
    %1386 = vmatprep.subr.mxu0 0.0
    %1387 = vmatpush1.msra.mxu0 0.0
    %1388 = vmatprep.subr.mxu0 0.0
    %1389 = vmatpush1.msra.mxu0 0.0
    %1390 = vmatprep.subr.mxu0 0.0
    %1391 = vmatpush1.msra.mxu0 0.0
    %1392 = vmatprep.subr.mxu0 0.0
    %1393 = vmatpush1.msra.mxu0 0.0
    %1394 = vmatprep.subr.mxu0 0.0
    %1395 = vmatpush1.msra.mxu0 0.0
    %1396 = vmatprep.subr.mxu0 0.0
    %1397 = vmatpush1.msra.mxu0 0.0
    %1398 = vmatprep.subr.mxu0 0.0
    %1399 = vmatpush1.msra.mxu0 0.0
    %1400 = vmatprep.subr.mxu0 0.0
    %1401 = vmatpush1.msra.mxu0 0.0
    %1402 = vmatprep.subr.mxu0 0.0
    %1403 = vmatpush1.msra.mxu0 0.0
    %1404 = vmatprep.subr.mxu0 0.0
    %1405 = vmatpush1.msra.mxu0 0.0
    %1406 = vmatprep.subr.mxu0 0.0
    %1407 = vmatpush1.msra.mxu0 0.0
    %1408 = vmatprep.subr.mxu0 0.0
    %1409 = vmatpush1.msra.mxu0 0.0
    %1410 = vmatprep.subr.mxu0 0.0
    %1411 = vmatpush1.msra.mxu0 0.0
    %1412 = vmatprep.subr.mxu0 0.0
    %1413 = vmatpush1.msra.mxu0 0.0
    %1414 = vmatprep.subr.mxu0 0.0
    %1415 = vmatpush1.msra.mxu0 0.0
    %1416 = vmatprep.subr.mxu0 0.0
    %1417 = vmatpush1.msra.mxu0 0.0
    %1418 = vmatprep.subr.mxu0 0.0
    %1419 = vmatpush1.msra.mxu0 0.0
    %1420 = vmatprep.subr.mxu0 0.0
    %1421 = vmatpush1.msra.mxu0 0.0
    %1422 = vmatprep.subr.mxu0 0.0
    %1423 = vmatpush1.msra.mxu0 0.0
    %1424 = vmatprep.subr.mxu0 0.0
    %1425 = vmatpush1.msra.mxu0 0.0
    %1426 = vmatprep.subr.mxu0 0.0
    %1427 = vmatpush1.msra.mxu0 0.0
    %1428 = vmatprep.subr.mxu0 0.0
    %1429 = vmatpush1.msra.mxu0 0.0
    %1430 = vmatprep.subr.mxu0 0.0
    %1431 = vmatpush1.msra.mxu0 0.0
    %1432 = vmatprep.subr.mxu0 0.0
    %1433 = vmatpush1.msra.mxu0 0.0
    %1434 = vmatprep.subr.mxu0 0.0
    %1435 = vmatpush1.msra.mxu0 0.0
    %1436 = vmatprep.mubr.f32.mxu0 0.0
    %v1437 = vand.u32 %v982, 4294901760
    %1438 = vmatmul.mubr.f32.gmra.mrb[0].mxu0 %v1437
    %v1439 = vpop.f32.mrb[0].mxu0
    %v1440 = vadd.f32 %v1367, %v1439
    %v1441 = vpop.f32.mrb[0].mxu0
    %1442 = vdwg.mxu0
    %v1443 = vadd.f32 %v980, %v1440
    %v1444 = vtanh.pop %v1443
    %s1445 = scalar_lea.vmem [#allocation7], 24
    %1446 = vst.msk [vmem:[%s1445] sm:$0xff] %vm42, %v1444
    %s1447 = scalar_lea.vmem [#allocation2], 24
    %v1448 = vld [vmem:[%s1447] sm:$0xff]
    %v1450 = vsel %vm42, %v1444, 0
    %1452 = vmatprep.subr.mxu0 0.0
    %v1453 = vand.u32 %v40, 4294901760
    %1454 = vmatpush1.msra.mxu0 %v1453
    %1455 = vmatprep.subr.mxu0 0.0
    %v1456 = vand.u32 %v41, 4294901760
    %1457 = vmatpush1.msra.mxu0 %v1456
    %1458 = vmatprep.subr.mxu0 0.0
    %1459 = vmatpush1.msra.mxu0 0.0
    %1460 = vmatprep.subr.mxu0 0.0
    %1461 = vmatpush1.msra.mxu0 0.0
    %1462 = vmatprep.subr.mxu0 0.0
    %1463 = vmatpush1.msra.mxu0 0.0
    %1464 = vmatprep.subr.mxu0 0.0
    %1465 = vmatpush1.msra.mxu0 0.0
    %1466 = vmatprep.subr.mxu0 0.0
    %1467 = vmatpush1.msra.mxu0 0.0
    %1468 = vmatprep.subr.mxu0 0.0
    %1469 = vmatpush1.msra.mxu0 0.0
    %1470 = vmatprep.subr.mxu0 0.0
    %1471 = vmatpush1.msra.mxu0 0.0
    %1472 = vmatprep.subr.mxu0 0.0
    %1473 = vmatpush1.msra.mxu0 0.0
    %1474 = vmatprep.subr.mxu0 0.0
    %1475 = vmatpush1.msra.mxu0 0.0
    %1476 = vmatprep.subr.mxu0 0.0
    %1477 = vmatpush1.msra.mxu0 0.0
    %1478 = vmatprep.subr.mxu0 0.0
    %1479 = vmatpush1.msra.mxu0 0.0
    %1480 = vmatprep.subr.mxu0 0.0
    %1481 = vmatpush1.msra.mxu0 0.0
    %1482 = vmatprep.subr.mxu0 0.0
    %1483 = vmatpush1.msra.mxu0 0.0
    %1484 = vmatprep.subr.mxu0 0.0
    %1485 = vmatpush1.msra.mxu0 0.0
    %1486 = vmatprep.subr.mxu0 0.0
    %1487 = vmatpush1.msra.mxu0 0.0
    %1488 = vmatprep.subr.mxu0 0.0
    %1489 = vmatpush1.msra.mxu0 0.0
    %1490 = vmatprep.subr.mxu0 0.0
    %1491 = vmatpush1.msra.mxu0 0.0
    %1492 = vmatprep.subr.mxu0 0.0
    %1493 = vmatpush1.msra.mxu0 0.0
    %1494 = vmatprep.subr.mxu0 0.0
    %1495 = vmatpush1.msra.mxu0 0.0
    %1496 = vmatprep.subr.mxu0 0.0
    %1497 = vmatpush1.msra.mxu0 0.0
    %1498 = vmatprep.subr.mxu0 0.0
    %1499 = vmatpush1.msra.mxu0 0.0
    %1500 = vmatprep.subr.mxu0 0.0
    %1501 = vmatpush1.msra.mxu0 0.0
    %1502 = vmatprep.subr.mxu0 0.0
    %1503 = vmatpush1.msra.mxu0 0.0
    %1504 = vmatprep.subr.mxu0 0.0
    %1505 = vmatpush1.msra.mxu0 0.0
    %1506 = vmatprep.subr.mxu0 0.0
    %1507 = vmatpush1.msra.mxu0 0.0
    %1508 = vmatprep.subr.mxu0 0.0
    %1509 = vmatpush1.msra.mxu0 0.0
    %1510 = vmatprep.subr.mxu0 0.0
    %1511 = vmatpush1.msra.mxu0 0.0
    %1512 = vmatprep.subr.mxu0 0.0
    %1513 = vmatpush1.msra.mxu0 0.0
    %1514 = vmatprep.subr.mxu0 0.0
    %1515 = vmatpush1.msra.mxu0 0.0
    %1516 = vmatprep.subr.mxu0 0.0
    %1517 = vmatpush1.msra.mxu0 0.0
    %1518 = vmatprep.mubr.f32.mxu0 0.0
    %v1519 = vand.u32 %v1450, 4294901760
    %v1520 = vsub.f32 %v1450, %v1519
    %v1521 = vand.u32 %v1520, 4294901760
    %v1522 = vsub.f32 %v1520, %v1521
    %v1523 = vand.u32 %v1522, 4294901760
    %1524 = vmatmul.mubr.f32.gmra.mrb[0].mxu0 %v1523
    %v1525 = vpop.f32.mrb[0].mxu0
    %v1526 = vadd.f32 0.0, %v1525
    %v1527 = vpop.f32.mrb[0].mxu0
    %1528 = vdwg.mxu0
    %1529 = vmatprep.subr.mxu0 0.0
    %v1530 = vand.u32 %v40, 4294901760
    %v1531 = vsub.f32 %v40, %v1530
    %v1532 = vand.u32 %v1531, 4294901760
    %v1533 = vsub.f32 %v1531, %v1532
    %v1534 = vand.u32 %v1533, 4294901760
    %1535 = vmatpush1.msra.mxu0 %v1534
    %1536 = vmatprep.subr.mxu0 0.0
    %v1537 = vand.u32 %v41, 4294901760
    %v1538 = vsub.f32 %v41, %v1537
    %v1539 = vand.u32 %v1538, 4294901760
    %v1540 = vsub.f32 %v1538, %v1539
    %v1541 = vand.u32 %v1540, 4294901760
    %1542 = vmatpush1.msra.mxu0 %v1541
    %1543 = vmatprep.subr.mxu0 0.0
    %1544 = vmatpush1.msra.mxu0 0.0
    %1545 = vmatprep.subr.mxu0 0.0
    %1546 = vmatpush1.msra.mxu0 0.0
    %1547 = vmatprep.subr.mxu0 0.0
    %1548 = vmatpush1.msra.mxu0 0.0
    %1549 = vmatprep.subr.mxu0 0.0
    %1550 = vmatpush1.msra.mxu0 0.0
    %1551 = vmatprep.subr.mxu0 0.0
    %1552 = vmatpush1.msra.mxu0 0.0
    %1553 = vmatprep.subr.mxu0 0.0
    %1554 = vmatpush1.msra.mxu0 0.0
    %1555 = vmatprep.subr.mxu0 0.0
    %1556 = vmatpush1.msra.mxu0 0.0
    %1557 = vmatprep.subr.mxu0 0.0
    %1558 = vmatpush1.msra.mxu0 0.0
    %1559 = vmatprep.subr.mxu0 0.0
    %1560 = vmatpush1.msra.mxu0 0.0
    %1561 = vmatprep.subr.mxu0 0.0
    %1562 = vmatpush1.msra.mxu0 0.0
    %1563 = vmatprep.subr.mxu0 0.0
    %1564 = vmatpush1.msra.mxu0 0.0
    %1565 = vmatprep.subr.mxu0 0.0
    %1566 = vmatpush1.msra.mxu0 0.0
    %1567 = vmatprep.subr.mxu0 0.0
    %1568 = vmatpush1.msra.mxu0 0.0
    %1569 = vmatprep.subr.mxu0 0.0
    %1570 = vmatpush1.msra.mxu0 0.0
    %1571 = vmatprep.subr.mxu0 0.0
    %1572 = vmatpush1.msra.mxu0 0.0
    %1573 = vmatprep.subr.mxu0 0.0
    %1574 = vmatpush1.msra.mxu0 0.0
    %1575 = vmatprep.subr.mxu0 0.0
    %1576 = vmatpush1.msra.mxu0 0.0
    %1577 = vmatprep.subr.mxu0 0.0
    %1578 = vmatpush1.msra.mxu0 0.0
    %1579 = vmatprep.subr.mxu0 0.0
    %1580 = vmatpush1.msra.mxu0 0.0
    %1581 = vmatprep.subr.mxu0 0.0
    %1582 = vmatpush1.msra.mxu0 0.0
    %1583 = vmatprep.subr.mxu0 0.0
    %1584 = vmatpush1.msra.mxu0 0.0
    %1585 = vmatprep.subr.mxu0 0.0
    %1586 = vmatpush1.msra.mxu0 0.0
    %1587 = vmatprep.subr.mxu0 0.0
    %1588 = vmatpush1.msra.mxu0 0.0
    %1589 = vmatprep.subr.mxu0 0.0
    %1590 = vmatpush1.msra.mxu0 0.0
    %1591 = vmatprep.subr.mxu0 0.0
    %1592 = vmatpush1.msra.mxu0 0.0
    %1593 = vmatprep.subr.mxu0 0.0
    %1594 = vmatpush1.msra.mxu0 0.0
    %1595 = vmatprep.subr.mxu0 0.0
    %1596 = vmatpush1.msra.mxu0 0.0
    %1597 = vmatprep.subr.mxu0 0.0
    %1598 = vmatpush1.msra.mxu0 0.0
    %1599 = vmatprep.subr.mxu0 0.0
    %1600 = vmatpush1.msra.mxu0 0.0
    %1601 = vmatprep.subr.mxu0 0.0
    %1602 = vmatpush1.msra.mxu0 0.0
    %1603 = vmatprep.mubr.f32.mxu0 0.0
    %v1604 = vand.u32 %v1450, 4294901760
    %1605 = vmatmul.mubr.f32.gmra.mrb[0].mxu0 %v1604
    %v1606 = vpop.f32.mrb[0].mxu0
    %v1607 = vadd.f32 %v1526, %v1606
    %v1608 = vpop.f32.mrb[0].mxu0
    %1609 = vdwg.mxu0
    %1610 = vmatprep.subr.mxu0 0.0
    %v1611 = vand.u32 %v40, 4294901760
    %v1612 = vsub.f32 %v40, %v1611
    %1613 = vmatpush1.msra.mxu0 %v1612
    %1614 = vmatprep.subr.mxu0 0.0
    %v1615 = vand.u32 %v41, 4294901760
    %v1616 = vsub.f32 %v41, %v1615
    %1617 = vmatpush1.msra.mxu0 %v1616
    %1618 = vmatprep.subr.mxu0 0.0
    %1619 = vmatpush1.msra.mxu0 0.0
    %1620 = vmatprep.subr.mxu0 0.0
    %1621 = vmatpush1.msra.mxu0 0.0
    %1622 = vmatprep.subr.mxu0 0.0
    %1623 = vmatpush1.msra.mxu0 0.0
    %1624 = vmatprep.subr.mxu0 0.0
    %1625 = vmatpush1.msra.mxu0 0.0
    %1626 = vmatprep.subr.mxu0 0.0
    %1627 = vmatpush1.msra.mxu0 0.0
    %1628 = vmatprep.subr.mxu0 0.0
    %1629 = vmatpush1.msra.mxu0 0.0
    %1630 = vmatprep.subr.mxu0 0.0
    %1631 = vmatpush1.msra.mxu0 0.0
    %1632 = vmatprep.subr.mxu0 0.0
    %1633 = vmatpush1.msra.mxu0 0.0
    %1634 = vmatprep.subr.mxu0 0.0
    %1635 = vmatpush1.msra.mxu0 0.0
    %1636 = vmatprep.subr.mxu0 0.0
    %1637 = vmatpush1.msra.mxu0 0.0
    %1638 = vmatprep.subr.mxu0 0.0
    %1639 = vmatpush1.msra.mxu0 0.0
    %1640 = vmatprep.subr.mxu0 0.0
    %1641 = vmatpush1.msra.mxu0 0.0
    %1642 = vmatprep.subr.mxu0 0.0
    %1643 = vmatpush1.msra.mxu0 0.0
    %1644 = vmatprep.subr.mxu0 0.0
    %1645 = vmatpush1.msra.mxu0 0.0
    %1646 = vmatprep.subr.mxu0 0.0
    %1647 = vmatpush1.msra.mxu0 0.0
    %1648 = vmatprep.subr.mxu0 0.0
    %1649 = vmatpush1.msra.mxu0 0.0
    %1650 = vmatprep.subr.mxu0 0.0
    %1651 = vmatpush1.msra.mxu0 0.0
    %1652 = vmatprep.subr.mxu0 0.0
    %1653 = vmatpush1.msra.mxu0 0.0
    %1654 = vmatprep.subr.mxu0 0.0
    %1655 = vmatpush1.msra.mxu0 0.0
    %1656 = vmatprep.subr.mxu0 0.0
    %1657 = vmatpush1.msra.mxu0 0.0
    %1658 = vmatprep.subr.mxu0 0.0
    %1659 = vmatpush1.msra.mxu0 0.0
    %1660 = vmatprep.subr.mxu0 0.0
    %1661 = vmatpush1.msra.mxu0 0.0
    %1662 = vmatprep.subr.mxu0 0.0
    %1663 = vmatpush1.msra.mxu0 0.0
    %1664 = vmatprep.subr.mxu0 0.0
    %1665 = vmatpush1.msra.mxu0 0.0
    %1666 = vmatprep.subr.mxu0 0.0
    %1667 = vmatpush1.msra.mxu0 0.0
    %1668 = vmatprep.subr.mxu0 0.0
    %1669 = vmatpush1.msra.mxu0 0.0
    %1670 = vmatprep.subr.mxu0 0.0
    %1671 = vmatpush1.msra.mxu0 0.0
    %1672 = vmatprep.subr.mxu0 0.0
    %1673 = vmatpush1.msra.mxu0 0.0
    %1674 = vmatprep.subr.mxu0 0.0
    %1675 = vmatpush1.msra.mxu0 0.0
    %1676 = vmatprep.subr.mxu0 0.0
    %1677 = vmatpush1.msra.mxu0 0.0
    %1678 = vmatprep.mubr.f32.mxu0 0.0
    %v1679 = vand.u32 %v1450, 4294901760
    %v1680 = vsub.f32 %v1450, %v1679
    %1681 = vmatmul.mubr.f32.gmra.mrb[0].mxu0 %v1680
    %v1682 = vpop.f32.mrb[0].mxu0
    %v1683 = vadd.f32 %v1607, %v1682
    %v1684 = vpop.f32.mrb[0].mxu0
    %1685 = vdwg.mxu0
    %1686 = vmatprep.subr.mxu0 0.0
    %v1687 = vand.u32 %v40, 4294901760
    %1688 = vmatpush1.msra.mxu0 %v1687
    %1689 = vmatprep.subr.mxu0 0.0
    %v1690 = vand.u32 %v41, 4294901760
    %1691 = vmatpush1.msra.mxu0 %v1690
    %1692 = vmatprep.subr.mxu0 0.0
    %1693 = vmatpush1.msra.mxu0 0.0
    %1694 = vmatprep.subr.mxu0 0.0
    %1695 = vmatpush1.msra.mxu0 0.0
    %1696 = vmatprep.subr.mxu0 0.0
    %1697 = vmatpush1.msra.mxu0 0.0
    %1698 = vmatprep.subr.mxu0 0.0
    %1699 = vmatpush1.msra.mxu0 0.0
    %1700 = vmatprep.subr.mxu0 0.0
    %1701 = vmatpush1.msra.mxu0 0.0
    %1702 = vmatprep.subr.mxu0 0.0
    %1703 = vmatpush1.msra.mxu0 0.0
    %1704 = vmatprep.subr.mxu0 0.0
    %1705 = vmatpush1.msra.mxu0 0.0
    %1706 = vmatprep.subr.mxu0 0.0
    %1707 = vmatpush1.msra.mxu0 0.0
    %1708 = vmatprep.subr.mxu0 0.0
    %1709 = vmatpush1.msra.mxu0 0.0
    %1710 = vmatprep.subr.mxu0 0.0
    %1711 = vmatpush1.msra.mxu0 0.0
    %1712 = vmatprep.subr.mxu0 0.0
    %1713 = vmatpush1.msra.mxu0 0.0
    %1714 = vmatprep.subr.mxu0 0.0
    %1715 = vmatpush1.msra.mxu0 0.0
    %1716 = vmatprep.subr.mxu0 0.0
    %1717 = vmatpush1.msra.mxu0 0.0
    %1718 = vmatprep.subr.mxu0 0.0
    %1719 = vmatpush1.msra.mxu0 0.0
    %1720 = vmatprep.subr.mxu0 0.0
    %1721 = vmatpush1.msra.mxu0 0.0
    %1722 = vmatprep.subr.mxu0 0.0
    %1723 = vmatpush1.msra.mxu0 0.0
    %1724 = vmatprep.subr.mxu0 0.0
    %1725 = vmatpush1.msra.mxu0 0.0
    %1726 = vmatprep.subr.mxu0 0.0
    %1727 = vmatpush1.msra.mxu0 0.0
    %1728 = vmatprep.subr.mxu0 0.0
    %1729 = vmatpush1.msra.mxu0 0.0
    %1730 = vmatprep.subr.mxu0 0.0
    %1731 = vmatpush1.msra.mxu0 0.0
    %1732 = vmatprep.subr.mxu0 0.0
    %1733 = vmatpush1.msra.mxu0 0.0
    %1734 = vmatprep.subr.mxu0 0.0
    %1735 = vmatpush1.msra.mxu0 0.0
    %1736 = vmatprep.subr.mxu0 0.0
    %1737 = vmatpush1.msra.mxu0 0.0
    %1738 = vmatprep.subr.mxu0 0.0
    %1739 = vmatpush1.msra.mxu0 0.0
    %1740 = vmatprep.subr.mxu0 0.0
    %1741 = vmatpush1.msra.mxu0 0.0
    %1742 = vmatprep.subr.mxu0 0.0
    %1743 = vmatpush1.msra.mxu0 0.0
    %1744 = vmatprep.subr.mxu0 0.0
    %1745 = vmatpush1.msra.mxu0 0.0
    %1746 = vmatprep.subr.mxu0 0.0
    %1747 = vmatpush1.msra.mxu0 0.0
    %1748 = vmatprep.subr.mxu0 0.0
    %1749 = vmatpush1.msra.mxu0 0.0
    %1750 = vmatprep.subr.mxu0 0.0
    %1751 = vmatpush1.msra.mxu0 0.0
    %1752 = vmatprep.mubr.f32.mxu0 0.0
    %v1753 = vand.u32 %v1450, 4294901760
    %v1754 = vsub.f32 %v1450, %v1753
    %v1755 = vand.u32 %v1754, 4294901760
    %1756 = vmatmul.mubr.f32.gmra.mrb[0].mxu0 %v1755
    %v1757 = vpop.f32.mrb[0].mxu0
    %v1758 = vadd.f32 %v1683, %v1757
    %v1759 = vpop.f32.mrb[0].mxu0
    %1760 = vdwg.mxu0
    %1761 = vmatprep.subr.mxu0 0.0
    %v1762 = vand.u32 %v40, 4294901760
    %v1763 = vsub.f32 %v40, %v1762
    %v1764 = vand.u32 %v1763, 4294901760
    %1765 = vmatpush1.msra.mxu0 %v1764
    %1766 = vmatprep.subr.mxu0 0.0
    %v1767 = vand.u32 %v41, 4294901760
    %v1768 = vsub.f32 %v41, %v1767
    %v1769 = vand.u32 %v1768, 4294901760
    %1770 = vmatpush1.msra.mxu0 %v1769
    %1771 = vmatprep.subr.mxu0 0.0
    %1772 = vmatpush1.msra.mxu0 0.0
    %1773 = vmatprep.subr.mxu0 0.0
    %1774 = vmatpush1.msra.mxu0 0.0
    %1775 = vmatprep.subr.mxu0 0.0
    %1776 = vmatpush1.msra.mxu0 0.0
    %1777 = vmatprep.subr.mxu0 0.0
    %1778 = vmatpush1.msra.mxu0 0.0
    %1779 = vmatprep.subr.mxu0 0.0
    %1780 = vmatpush1.msra.mxu0 0.0
    %1781 = vmatprep.subr.mxu0 0.0
    %1782 = vmatpush1.msra.mxu0 0.0
    %1783 = vmatprep.subr.mxu0 0.0
    %1784 = vmatpush1.msra.mxu0 0.0
    %1785 = vmatprep.subr.mxu0 0.0
    %1786 = vmatpush1.msra.mxu0 0.0
    %1787 = vmatprep.subr.mxu0 0.0
    %1788 = vmatpush1.msra.mxu0 0.0
    %1789 = vmatprep.subr.mxu0 0.0
    %1790 = vmatpush1.msra.mxu0 0.0
    %1791 = vmatprep.subr.mxu0 0.0
    %1792 = vmatpush1.msra.mxu0 0.0
    %1793 = vmatprep.subr.mxu0 0.0
    %1794 = vmatpush1.msra.mxu0 0.0
    %1795 = vmatprep.subr.mxu0 0.0
    %1796 = vmatpush1.msra.mxu0 0.0
    %1797 = vmatprep.subr.mxu0 0.0
    %1798 = vmatpush1.msra.mxu0 0.0
    %1799 = vmatprep.subr.mxu0 0.0
    %1800 = vmatpush1.msra.mxu0 0.0
    %1801 = vmatprep.subr.mxu0 0.0
    %1802 = vmatpush1.msra.mxu0 0.0
    %1803 = vmatprep.subr.mxu0 0.0
    %1804 = vmatpush1.msra.mxu0 0.0
    %1805 = vmatprep.subr.mxu0 0.0
    %1806 = vmatpush1.msra.mxu0 0.0
    %1807 = vmatprep.subr.mxu0 0.0
    %1808 = vmatpush1.msra.mxu0 0.0
    %1809 = vmatprep.subr.mxu0 0.0
    %1810 = vmatpush1.msra.mxu0 0.0
    %1811 = vmatprep.subr.mxu0 0.0
    %1812 = vmatpush1.msra.mxu0 0.0
    %1813 = vmatprep.subr.mxu0 0.0
    %1814 = vmatpush1.msra.mxu0 0.0
    %1815 = vmatprep.subr.mxu0 0.0
    %1816 = vmatpush1.msra.mxu0 0.0
    %1817 = vmatprep.subr.mxu0 0.0
    %1818 = vmatpush1.msra.mxu0 0.0
    %1819 = vmatprep.subr.mxu0 0.0
    %1820 = vmatpush1.msra.mxu0 0.0
    %1821 = vmatprep.subr.mxu0 0.0
    %1822 = vmatpush1.msra.mxu0 0.0
    %1823 = vmatprep.subr.mxu0 0.0
    %1824 = vmatpush1.msra.mxu0 0.0
    %1825 = vmatprep.subr.mxu0 0.0
    %1826 = vmatpush1.msra.mxu0 0.0
    %1827 = vmatprep.subr.mxu0 0.0
    %1828 = vmatpush1.msra.mxu0 0.0
    %1829 = vmatprep.subr.mxu0 0.0
    %1830 = vmatpush1.msra.mxu0 0.0
    %1831 = vmatprep.mubr.f32.mxu0 0.0
    %v1832 = vand.u32 %v1450, 4294901760
    %1833 = vmatmul.mubr.f32.gmra.mrb[0].mxu0 %v1832
    %v1834 = vpop.f32.mrb[0].mxu0
    %v1835 = vadd.f32 %v1758, %v1834
    %v1836 = vpop.f32.mrb[0].mxu0
    %1837 = vdwg.mxu0
    %1838 = vmatprep.subr.mxu0 0.0
    %v1839 = vand.u32 %v40, 4294901760
    %1840 = vmatpush1.msra.mxu0 %v1839
    %1841 = vmatprep.subr.mxu0 0.0
    %v1842 = vand.u32 %v41, 4294901760
    %1843 = vmatpush1.msra.mxu0 %v1842
    %1844 = vmatprep.subr.mxu0 0.0
    %1845 = vmatpush1.msra.mxu0 0.0
    %1846 = vmatprep.subr.mxu0 0.0
    %1847 = vmatpush1.msra.mxu0 0.0
    %1848 = vmatprep.subr.mxu0 0.0
    %1849 = vmatpush1.msra.mxu0 0.0
    %1850 = vmatprep.subr.mxu0 0.0
    %1851 = vmatpush1.msra.mxu0 0.0
    %1852 = vmatprep.subr.mxu0 0.0
    %1853 = vmatpush1.msra.mxu0 0.0
    %1854 = vmatprep.subr.mxu0 0.0
    %1855 = vmatpush1.msra.mxu0 0.0
    %1856 = vmatprep.subr.mxu0 0.0
    %1857 = vmatpush1.msra.mxu0 0.0
    %1858 = vmatprep.subr.mxu0 0.0
    %1859 = vmatpush1.msra.mxu0 0.0
    %1860 = vmatprep.subr.mxu0 0.0
    %1861 = vmatpush1.msra.mxu0 0.0
    %1862 = vmatprep.subr.mxu0 0.0
    %1863 = vmatpush1.msra.mxu0 0.0
    %1864 = vmatprep.subr.mxu0 0.0
    %1865 = vmatpush1.msra.mxu0 0.0
    %1866 = vmatprep.subr.mxu0 0.0
    %1867 = vmatpush1.msra.mxu0 0.0
    %1868 = vmatprep.subr.mxu0 0.0
    %1869 = vmatpush1.msra.mxu0 0.0
    %1870 = vmatprep.subr.mxu0 0.0
    %1871 = vmatpush1.msra.mxu0 0.0
    %1872 = vmatprep.subr.mxu0 0.0
    %1873 = vmatpush1.msra.mxu0 0.0
    %1874 = vmatprep.subr.mxu0 0.0
    %1875 = vmatpush1.msra.mxu0 0.0
    %1876 = vmatprep.subr.mxu0 0.0
    %1877 = vmatpush1.msra.mxu0 0.0
    %1878 = vmatprep.subr.mxu0 0.0
    %1879 = vmatpush1.msra.mxu0 0.0
    %1880 = vmatprep.subr.mxu0 0.0
    %1881 = vmatpush1.msra.mxu0 0.0
    %1882 = vmatprep.subr.mxu0 0.0
    %1883 = vmatpush1.msra.mxu0 0.0
    %1884 = vmatprep.subr.mxu0 0.0
    %1885 = vmatpush1.msra.mxu0 0.0
    %1886 = vmatprep.subr.mxu0 0.0
    %1887 = vmatpush1.msra.mxu0 0.0
    %1888 = vmatprep.subr.mxu0 0.0
    %1889 = vmatpush1.msra.mxu0 0.0
    %1890 = vmatprep.subr.mxu0 0.0
    %1891 = vmatpush1.msra.mxu0 0.0
    %1892 = vmatprep.subr.mxu0 0.0
    %1893 = vmatpush1.msra.mxu0 0.0
    %1894 = vmatprep.subr.mxu0 0.0
    %1895 = vmatpush1.msra.mxu0 0.0
    %1896 = vmatprep.subr.mxu0 0.0
    %1897 = vmatpush1.msra.mxu0 0.0
    %1898 = vmatprep.subr.mxu0 0.0
    %1899 = vmatpush1.msra.mxu0 0.0
    %1900 = vmatprep.subr.mxu0 0.0
    %1901 = vmatpush1.msra.mxu0 0.0
    %1902 = vmatprep.subr.mxu0 0.0
    %1903 = vmatpush1.msra.mxu0 0.0
    %1904 = vmatprep.mubr.f32.mxu0 0.0
    %v1905 = vand.u32 %v1450, 4294901760
    %1906 = vmatmul.mubr.f32.gmra.mrb[0].mxu0 %v1905
    %v1907 = vpop.f32.mrb[0].mxu0
    %v1908 = vadd.f32 %v1835, %v1907
    %v1909 = vpop.f32.mrb[0].mxu0
    %1910 = vdwg.mxu0
    %v1911 = vadd.f32 %v1448, %v1908
    %v1912 = vtanh.pop %v1911
    %s1913 = scalar_lea.vmem [#allocation7], 32
    %1914 = vst.msk [vmem:[%s1913] sm:$0xff] %vm42, %v1912
    %s1915 = scalar_lea.vmem [#allocation2], 32
    %v1916 = vld [vmem:[%s1915] sm:$0xff]
    %v1918 = vsel %vm42, %v1912, 0
    %1920 = vmatprep.subr.mxu0 0.0
    %v1921 = vand.u32 %v40, 4294901760
    %1922 = vmatpush1.msra.mxu0 %v1921
    %1923 = vmatprep.subr.mxu0 0.0
    %v1924 = vand.u32 %v41, 4294901760
    %1925 = vmatpush1.msra.mxu0 %v1924
    %1926 = vmatprep.subr.mxu0 0.0
    %1927 = vmatpush1.msra.mxu0 0.0
    %1928 = vmatprep.subr.mxu0 0.0
    %1929 = vmatpush1.msra.mxu0 0.0
    %1930 = vmatprep.subr.mxu0 0.0
    %1931 = vmatpush1.msra.mxu0 0.0
    %1932 = vmatprep.subr.mxu0 0.0
    %1933 = vmatpush1.msra.mxu0 0.0
    %1934 = vmatprep.subr.mxu0 0.0
    %1935 = vmatpush1.msra.mxu0 0.0
    %1936 = vmatprep.subr.mxu0 0.0
    %1937 = vmatpush1.msra.mxu0 0.0
    %1938 = vmatprep.subr.mxu0 0.0
    %1939 = vmatpush1.msra.mxu0 0.0
    %1940 = vmatprep.subr.mxu0 0.0
    %1941 = vmatpush1.msra.mxu0 0.0
    %1942 = vmatprep.subr.mxu0 0.0
    %1943 = vmatpush1.msra.mxu0 0.0
    %1944 = vmatprep.subr.mxu0 0.0
    %1945 = vmatpush1.msra.mxu0 0.0
    %1946 = vmatprep.subr.mxu0 0.0
    %1947 = vmatpush1.msra.mxu0 0.0
    %1948 = vmatprep.subr.mxu0 0.0
    %1949 = vmatpush1.msra.mxu0 0.0
    %1950 = vmatprep.subr.mxu0 0.0
    %1951 = vmatpush1.msra.mxu0 0.0
    %1952 = vmatprep.subr.mxu0 0.0
    %1953 = vmatpush1.msra.mxu0 0.0
    %1954 = vmatprep.subr.mxu0 0.0
    %1955 = vmatpush1.msra.mxu0 0.0
    %1956 = vmatprep.subr.mxu0 0.0
    %1957 = vmatpush1.msra.mxu0 0.0
    %1958 = vmatprep.subr.mxu0 0.0
    %1959 = vmatpush1.msra.mxu0 0.0
    %1960 = vmatprep.subr.mxu0 0.0
    %1961 = vmatpush1.msra.mxu0 0.0
    %1962 = vmatprep.subr.mxu0 0.0
    %1963 = vmatpush1.msra.mxu0 0.0
    %1964 = vmatprep.subr.mxu0 0.0
    %1965 = vmatpush1.msra.mxu0 0.0
    %1966 = vmatprep.subr.mxu0 0.0
    %1967 = vmatpush1.msra.mxu0 0.0
    %1968 = vmatprep.subr.mxu0 0.0
    %1969 = vmatpush1.msra.mxu0 0.0
    %1970 = vmatprep.subr.mxu0 0.0
    %1971 = vmatpush1.msra.mxu0 0.0
    %1972 = vmatprep.subr.mxu0 0.0
    %1973 = vmatpush1.msra.mxu0 0.0
    %1974 = vmatprep.subr.mxu0 0.0
    %1975 = vmatpush1.msra.mxu0 0.0
    %1976 = vmatprep.subr.mxu0 0.0
    %1977 = vmatpush1.msra.mxu0 0.0
    %1978 = vmatprep.subr.mxu0 0.0
    %1979 = vmatpush1.msra.mxu0 0.0
    %1980 = vmatprep.subr.mxu0 0.0
    %1981 = vmatpush1.msra.mxu0 0.0
    %1982 = vmatprep.subr.mxu0 0.0
    %1983 = vmatpush1.msra.mxu0 0.0
    %1984 = vmatprep.subr.mxu0 0.0
    %1985 = vmatpush1.msra.mxu0 0.0
    %1986 = vmatprep.mubr.f32.mxu0 0.0
    %v1987 = vand.u32 %v1918, 4294901760
    %v1988 = vsub.f32 %v1918, %v1987
    %v1989 = vand.u32 %v1988, 4294901760
    %v1990 = vsub.f32 %v1988, %v1989
    %v1991 = vand.u32 %v1990, 4294901760
    %1992 = vmatmul.mubr.f32.gmra.mrb[0].mxu0 %v1991
    %v1993 = vpop.f32.mrb[0].mxu0
    %v1994 = vadd.f32 0.0, %v1993
    %v1995 = vpop.f32.mrb[0].mxu0
    %1996 = vdwg.mxu0
    %1997 = vmatprep.subr.mxu0 0.0
    %v1998 = vand.u32 %v40, 4294901760
    %v1999 = vsub.f32 %v40, %v1998
    %v2000 = vand.u32 %v1999, 4294901760
    %v2001 = vsub.f32 %v1999, %v2000
    %v2002 = vand.u32 %v2001, 4294901760
    %2003 = vmatpush1.msra.mxu0 %v2002
    %2004 = vmatprep.subr.mxu0 0.0
    %v2005 = vand.u32 %v41, 4294901760
    %v2006 = vsub.f32 %v41, %v2005
    %v2007 = vand.u32 %v2006, 4294901760
    %v2008 = vsub.f32 %v2006, %v2007
    %v2009 = vand.u32 %v2008, 4294901760
    %2010 = vmatpush1.msra.mxu0 %v2009
    %2011 = vmatprep.subr.mxu0 0.0
    %2012 = vmatpush1.msra.mxu0 0.0
    %2013 = vmatprep.subr.mxu0 0.0
    %2014 = vmatpush1.msra.mxu0 0.0
    %2015 = vmatprep.subr.mxu0 0.0
    %2016 = vmatpush1.msra.mxu0 0.0
    %2017 = vmatprep.subr.mxu0 0.0
    %2018 = vmatpush1.msra.mxu0 0.0
    %2019 = vmatprep.subr.mxu0 0.0
    %2020 = vmatpush1.msra.mxu0 0.0
    %2021 = vmatprep.subr.mxu0 0.0
    %2022 = vmatpush1.msra.mxu0 0.0
    %2023 = vmatprep.subr.mxu0 0.0
    %2024 = vmatpush1.msra.mxu0 0.0
    %2025 = vmatprep.subr.mxu0 0.0
    %2026 = vmatpush1.msra.mxu0 0.0
    %2027 = vmatprep.subr.mxu0 0.0
    %2028 = vmatpush1.msra.mxu0 0.0
    %2029 = vmatprep.subr.mxu0 0.0
    %2030 = vmatpush1.msra.mxu0 0.0
    %2031 = vmatprep.subr.mxu0 0.0
    %2032 = vmatpush1.msra.mxu0 0.0
    %2033 = vmatprep.subr.mxu0 0.0
    %2034 = vmatpush1.msra.mxu0 0.0
    %2035 = vmatprep.subr.mxu0 0.0
    %2036 = vmatpush1.msra.mxu0 0.0
    %2037 = vmatprep.subr.mxu0 0.0
    %2038 = vmatpush1.msra.mxu0 0.0
    %2039 = vmatprep.subr.mxu0 0.0
    %2040 = vmatpush1.msra.mxu0 0.0
    %2041 = vmatprep.subr.mxu0 0.0
    %2042 = vmatpush1.msra.mxu0 0.0
    %2043 = vmatprep.subr.mxu0 0.0
    %2044 = vmatpush1.msra.mxu0 0.0
    %2045 = vmatprep.subr.mxu0 0.0
    %2046 = vmatpush1.msra.mxu0 0.0
    %2047 = vmatprep.subr.mxu0 0.0
    %2048 = vmatpush1.msra.mxu0 0.0
    %2049 = vmatprep.subr.mxu0 0.0
    %2050 = vmatpush1.msra.mxu0 0.0
    %2051 = vmatprep.subr.mxu0 0.0
    %2052 = vmatpush1.msra.mxu0 0.0
    %2053 = vmatprep.subr.mxu0 0.0
    %2054 = vmatpush1.msra.mxu0 0.0
    %2055 = vmatprep.subr.mxu0 0.0
    %2056 = vmatpush1.msra.mxu0 0.0
    %2057 = vmatprep.subr.mxu0 0.0
    %2058 = vmatpush1.msra.mxu0 0.0
    %2059 = vmatprep.subr.mxu0 0.0
    %2060 = vmatpush1.msra.mxu0 0.0
    %2061 = vmatprep.subr.mxu0 0.0
    %2062 = vmatpush1.msra.mxu0 0.0
    %2063 = vmatprep.subr.mxu0 0.0
    %2064 = vmatpush1.msra.mxu0 0.0
    %2065 = vmatprep.subr.mxu0 0.0
    %2066 = vmatpush1.msra.mxu0 0.0
    %2067 = vmatprep.subr.mxu0 0.0
    %2068 = vmatpush1.msra.mxu0 0.0
    %2069 = vmatprep.subr.mxu0 0.0
    %2070 = vmatpush1.msra.mxu0 0.0
    %2071 = vmatprep.mubr.f32.mxu0 0.0
    %v2072 = vand.u32 %v1918, 4294901760
    %2073 = vmatmul.mubr.f32.gmra.mrb[0].mxu0 %v2072
    %v2074 = vpop.f32.mrb[0].mxu0
    %v2075 = vadd.f32 %v1994, %v2074
    %v2076 = vpop.f32.mrb[0].mxu0
    %2077 = vdwg.mxu0
    %2078 = vmatprep.subr.mxu0 0.0
    %v2079 = vand.u32 %v40, 4294901760
    %v2080 = vsub.f32 %v40, %v2079
    %2081 = vmatpush1.msra.mxu0 %v2080
    %2082 = vmatprep.subr.mxu0 0.0
    %v2083 = vand.u32 %v41, 4294901760
    %v2084 = vsub.f32 %v41, %v2083
    %2085 = vmatpush1.msra.mxu0 %v2084
    %2086 = vmatprep.subr.mxu0 0.0
    %2087 = vmatpush1.msra.mxu0 0.0
    %2088 = vmatprep.subr.mxu0 0.0
    %2089 = vmatpush1.msra.mxu0 0.0
    %2090 = vmatprep.subr.mxu0 0.0
    %2091 = vmatpush1.msra.mxu0 0.0
    %2092 = vmatprep.subr.mxu0 0.0
    %2093 = vmatpush1.msra.mxu0 0.0
    %2094 = vmatprep.subr.mxu0 0.0
    %2095 = vmatpush1.msra.mxu0 0.0
    %2096 = vmatprep.subr.mxu0 0.0
    %2097 = vmatpush1.msra.mxu0 0.0
    %2098 = vmatprep.subr.mxu0 0.0
    %2099 = vmatpush1.msra.mxu0 0.0
    %2100 = vmatprep.subr.mxu0 0.0
    %2101 = vmatpush1.msra.mxu0 0.0
    %2102 = vmatprep.subr.mxu0 0.0
    %2103 = vmatpush1.msra.mxu0 0.0
    %2104 = vmatprep.subr.mxu0 0.0
    %2105 = vmatpush1.msra.mxu0 0.0
    %2106 = vmatprep.subr.mxu0 0.0
    %2107 = vmatpush1.msra.mxu0 0.0
    %2108 = vmatprep.subr.mxu0 0.0
    %2109 = vmatpush1.msra.mxu0 0.0
    %2110 = vmatprep.subr.mxu0 0.0
    %2111 = vmatpush1.msra.mxu0 0.0
    %2112 = vmatprep.subr.mxu0 0.0
    %2113 = vmatpush1.msra.mxu0 0.0
    %2114 = vmatprep.subr.mxu0 0.0
    %2115 = vmatpush1.msra.mxu0 0.0
    %2116 = vmatprep.subr.mxu0 0.0
    %2117 = vmatpush1.msra.mxu0 0.0
    %2118 = vmatprep.subr.mxu0 0.0
    %2119 = vmatpush1.msra.mxu0 0.0
    %2120 = vmatprep.subr.mxu0 0.0
    %2121 = vmatpush1.msra.mxu0 0.0
    %2122 = vmatprep.subr.mxu0 0.0
    %2123 = vmatpush1.msra.mxu0 0.0
    %2124 = vmatprep.subr.mxu0 0.0
    %2125 = vmatpush1.msra.mxu0 0.0
    %2126 = vmatprep.subr.mxu0 0.0
    %2127 = vmatpush1.msra.mxu0 0.0
    %2128 = vmatprep.subr.mxu0 0.0
    %2129 = vmatpush1.msra.mxu0 0.0
    %2130 = vmatprep.subr.mxu0 0.0
    %2131 = vmatpush1.msra.mxu0 0.0
    %2132 = vmatprep.subr.mxu0 0.0
    %2133 = vmatpush1.msra.mxu0 0.0
    %2134 = vmatprep.subr.mxu0 0.0
    %2135 = vmatpush1.msra.mxu0 0.0
    %2136 = vmatprep.subr.mxu0 0.0
    %2137 = vmatpush1.msra.mxu0 0.0
    %2138 = vmatprep.subr.mxu0 0.0
    %2139 = vmatpush1.msra.mxu0 0.0
    %2140 = vmatprep.subr.mxu0 0.0
    %2141 = vmatpush1.msra.mxu0 0.0
    %2142 = vmatprep.subr.mxu0 0.0
    %2143 = vmatpush1.msra.mxu0 0.0
    %2144 = vmatprep.subr.mxu0 0.0
    %2145 = vmatpush1.msra.mxu0 0.0
    %2146 = vmatprep.mubr.f32.mxu0 0.0
    %v2147 = vand.u32 %v1918, 4294901760
    %v2148 = vsub.f32 %v1918, %v2147
    %2149 = vmatmul.mubr.f32.gmra.mrb[0].mxu0 %v2148
    %v2150 = vpop.f32.mrb[0].mxu0
    %v2151 = vadd.f32 %v2075, %v2150
    %v2152 = vpop.f32.mrb[0].mxu0
    %2153 = vdwg.mxu0
    %2154 = vmatprep.subr.mxu0 0.0
    %v2155 = vand.u32 %v40, 4294901760
    %2156 = vmatpush1.msra.mxu0 %v2155
    %2157 = vmatprep.subr.mxu0 0.0
    %v2158 = vand.u32 %v41, 4294901760
    %2159 = vmatpush1.msra.mxu0 %v2158
    %2160 = vmatprep.subr.mxu0 0.0
    %2161 = vmatpush1.msra.mxu0 0.0
    %2162 = vmatprep.subr.mxu0 0.0
    %2163 = vmatpush1.msra.mxu0 0.0
    %2164 = vmatprep.subr.mxu0 0.0
    %2165 = vmatpush1.msra.mxu0 0.0
    %2166 = vmatprep.subr.mxu0 0.0
    %2167 = vmatpush1.msra.mxu0 0.0
    %2168 = vmatprep.subr.mxu0 0.0
    %2169 = vmatpush1.msra.mxu0 0.0
    %2170 = vmatprep.subr.mxu0 0.0
    %2171 = vmatpush1.msra.mxu0 0.0
    %2172 = vmatprep.subr.mxu0 0.0
    %2173 = vmatpush1.msra.mxu0 0.0
    %2174 = vmatprep.subr.mxu0 0.0
    %2175 = vmatpush1.msra.mxu0 0.0
    %2176 = vmatprep.subr.mxu0 0.0
    %2177 = vmatpush1.msra.mxu0 0.0
    %2178 = vmatprep.subr.mxu0 0.0
    %2179 = vmatpush1.msra.mxu0 0.0
    %2180 = vmatprep.subr.mxu0 0.0
    %2181 = vmatpush1.msra.mxu0 0.0
    %2182 = vmatprep.subr.mxu0 0.0
    %2183 = vmatpush1.msra.mxu0 0.0
    %2184 = vmatprep.subr.mxu0 0.0
    %2185 = vmatpush1.msra.mxu0 0.0
    %2186 = vmatprep.subr.mxu0 0.0
    %2187 = vmatpush1.msra.mxu0 0.0
    %2188 = vmatprep.subr.mxu0 0.0
    %2189 = vmatpush1.msra.mxu0 0.0
    %2190 = vmatprep.subr.mxu0 0.0
    %2191 = vmatpush1.msra.mxu0 0.0
    %2192 = vmatprep.subr.mxu0 0.0
    %2193 = vmatpush1.msra.mxu0 0.0
    %2194 = vmatprep.subr.mxu0 0.0
    %2195 = vmatpush1.msra.mxu0 0.0
    %2196 = vmatprep.subr.mxu0 0.0
    %2197 = vmatpush1.msra.mxu0 0.0
    %2198 = vmatprep.subr.mxu0 0.0
    %2199 = vmatpush1.msra.mxu0 0.0
    %2200 = vmatprep.subr.mxu0 0.0
    %2201 = vmatpush1.msra.mxu0 0.0
    %2202 = vmatprep.subr.mxu0 0.0
    %2203 = vmatpush1.msra.mxu0 0.0
    %2204 = vmatprep.subr.mxu0 0.0
    %2205 = vmatpush1.msra.mxu0 0.0
    %2206 = vmatprep.subr.mxu0 0.0
    %2207 = vmatpush1.msra.mxu0 0.0
    %2208 = vmatprep.subr.mxu0 0.0
    %2209 = vmatpush1.msra.mxu0 0.0
    %2210 = vmatprep.subr.mxu0 0.0
    %2211 = vmatpush1.msra.mxu0 0.0
    %2212 = vmatprep.subr.mxu0 0.0
    %2213 = vmatpush1.msra.mxu0 0.0
    %2214 = vmatprep.subr.mxu0 0.0
    %2215 = vmatpush1.msra.mxu0 0.0
    %2216 = vmatprep.subr.mxu0 0.0
    %2217 = vmatpush1.msra.mxu0 0.0
    %2218 = vmatprep.subr.mxu0 0.0
    %2219 = vmatpush1.msra.mxu0 0.0
    %2220 = vmatprep.mubr.f32.mxu0 0.0
    %v2221 = vand.u32 %v1918, 4294901760
    %v2222 = vsub.f32 %v1918, %v2221
    %v2223 = vand.u32 %v2222, 4294901760
    %2224 = vmatmul.mubr.f32.gmra.mrb[0].mxu0 %v2223
    %v2225 = vpop.f32.mrb[0].mxu0
    %v2226 = vadd.f32 %v2151, %v2225
    %v2227 = vpop.f32.mrb[0].mxu0
    %2228 = vdwg.mxu0
    %2229 = vmatprep.subr.mxu0 0.0
    %v2230 = vand.u32 %v40, 4294901760
    %v2231 = vsub.f32 %v40, %v2230
    %v2232 = vand.u32 %v2231, 4294901760
    %2233 = vmatpush1.msra.mxu0 %v2232
    %2234 = vmatprep.subr.mxu0 0.0
    %v2235 = vand.u32 %v41, 4294901760
    %v2236 = vsub.f32 %v41, %v2235
    %v2237 = vand.u32 %v2236, 4294901760
    %2238 = vmatpush1.msra.mxu0 %v2237
    %2239 = vmatprep.subr.mxu0 0.0
    %2240 = vmatpush1.msra.mxu0 0.0
    %2241 = vmatprep.subr.mxu0 0.0
    %2242 = vmatpush1.msra.mxu0 0.0
    %2243 = vmatprep.subr.mxu0 0.0
    %2244 = vmatpush1.msra.mxu0 0.0
    %2245 = vmatprep.subr.mxu0 0.0
    %2246 = vmatpush1.msra.mxu0 0.0
    %2247 = vmatprep.subr.mxu0 0.0
    %2248 = vmatpush1.msra.mxu0 0.0
    %2249 = vmatprep.subr.mxu0 0.0
    %2250 = vmatpush1.msra.mxu0 0.0
    %2251 = vmatprep.subr.mxu0 0.0
    %2252 = vmatpush1.msra.mxu0 0.0
    %2253 = vmatprep.subr.mxu0 0.0
    %2254 = vmatpush1.msra.mxu0 0.0
    %2255 = vmatprep.subr.mxu0 0.0
    %2256 = vmatpush1.msra.mxu0 0.0
    %2257 = vmatprep.subr.mxu0 0.0
    %2258 = vmatpush1.msra.mxu0 0.0
    %2259 = vmatprep.subr.mxu0 0.0
    %2260 = vmatpush1.msra.mxu0 0.0
    %2261 = vmatprep.subr.mxu0 0.0
    %2262 = vmatpush1.msra.mxu0 0.0
    %2263 = vmatprep.subr.mxu0 0.0
    %2264 = vmatpush1.msra.mxu0 0.0
    %2265 = vmatprep.subr.mxu0 0.0
    %2266 = vmatpush1.msra.mxu0 0.0
    %2267 = vmatprep.subr.mxu0 0.0
    %2268 = vmatpush1.msra.mxu0 0.0
    %2269 = vmatprep.subr.mxu0 0.0
    %2270 = vmatpush1.msra.mxu0 0.0
    %2271 = vmatprep.subr.mxu0 0.0
    %2272 = vmatpush1.msra.mxu0 0.0
    %2273 = vmatprep.subr.mxu0 0.0
    %2274 = vmatpush1.msra.mxu0 0.0
    %2275 = vmatprep.subr.mxu0 0.0
    %2276 = vmatpush1.msra.mxu0 0.0
    %2277 = vmatprep.subr.mxu0 0.0
    %2278 = vmatpush1.msra.mxu0 0.0
    %2279 = vmatprep.subr.mxu0 0.0
    %2280 = vmatpush1.msra.mxu0 0.0
    %2281 = vmatprep.subr.mxu0 0.0
    %2282 = vmatpush1.msra.mxu0 0.0
    %2283 = vmatprep.subr.mxu0 0.0
    %2284 = vmatpush1.msra.mxu0 0.0
    %2285 = vmatprep.subr.mxu0 0.0
    %2286 = vmatpush1.msra.mxu0 0.0
    %2287 = vmatprep.subr.mxu0 0.0
    %2288 = vmatpush1.msra.mxu0 0.0
    %2289 = vmatprep.subr.mxu0 0.0
    %2290 = vmatpush1.msra.mxu0 0.0
    %2291 = vmatprep.subr.mxu0 0.0
    %2292 = vmatpush1.msra.mxu0 0.0
    %2293 = vmatprep.subr.mxu0 0.0
    %2294 = vmatpush1.msra.mxu0 0.0
    %2295 = vmatprep.subr.mxu0 0.0
    %2296 = vmatpush1.msra.mxu0 0.0
    %2297 = vmatprep.subr.mxu0 0.0
    %2298 = vmatpush1.msra.mxu0 0.0
    %2299 = vmatprep.mubr.f32.mxu0 0.0
    %v2300 = vand.u32 %v1918, 4294901760
    %2301 = vmatmul.mubr.f32.gmra.mrb[0].mxu0 %v2300
    %v2302 = vpop.f32.mrb[0].mxu0
    %v2303 = vadd.f32 %v2226, %v2302
    %v2304 = vpop.f32.mrb[0].mxu0
    %2305 = vdwg.mxu0
    %2306 = vmatprep.subr.mxu0 0.0
    %v2307 = vand.u32 %v40, 4294901760
    %2308 = vmatpush1.msra.mxu0 %v2307
    %2309 = vmatprep.subr.mxu0 0.0
    %v2310 = vand.u32 %v41, 4294901760
    %2311 = vmatpush1.msra.mxu0 %v2310
    %2312 = vmatprep.subr.mxu0 0.0
    %2313 = vmatpush1.msra.mxu0 0.0
    %2314 = vmatprep.subr.mxu0 0.0
    %2315 = vmatpush1.msra.mxu0 0.0
    %2316 = vmatprep.subr.mxu0 0.0
    %2317 = vmatpush1.msra.mxu0 0.0
    %2318 = vmatprep.subr.mxu0 0.0
    %2319 = vmatpush1.msra.mxu0 0.0
    %2320 = vmatprep.subr.mxu0 0.0
    %2321 = vmatpush1.msra.mxu0 0.0
    %2322 = vmatprep.subr.mxu0 0.0
    %2323 = vmatpush1.msra.mxu0 0.0
    %2324 = vmatprep.subr.mxu0 0.0
    %2325 = vmatpush1.msra.mxu0 0.0
    %2326 = vmatprep.subr.mxu0 0.0
    %2327 = vmatpush1.msra.mxu0 0.0
    %2328 = vmatprep.subr.mxu0 0.0
    %2329 = vmatpush1.msra.mxu0 0.0
    %2330 = vmatprep.subr.mxu0 0.0
    %2331 = vmatpush1.msra.mxu0 0.0
    %2332 = vmatprep.subr.mxu0 0.0
    %2333 = vmatpush1.msra.mxu0 0.0
    %2334 = vmatprep.subr.mxu0 0.0
    %2335 = vmatpush1.msra.mxu0 0.0
    %2336 = vmatprep.subr.mxu0 0.0
    %2337 = vmatpush1.msra.mxu0 0.0
    %2338 = vmatprep.subr.mxu0 0.0
    %2339 = vmatpush1.msra.mxu0 0.0
    %2340 = vmatprep.subr.mxu0 0.0
    %2341 = vmatpush1.msra.mxu0 0.0
    %2342 = vmatprep.subr.mxu0 0.0
    %2343 = vmatpush1.msra.mxu0 0.0
    %2344 = vmatprep.subr.mxu0 0.0
    %2345 = vmatpush1.msra.mxu0 0.0
    %2346 = vmatprep.subr.mxu0 0.0
    %2347 = vmatpush1.msra.mxu0 0.0
    %2348 = vmatprep.subr.mxu0 0.0
    %2349 = vmatpush1.msra.mxu0 0.0
    %2350 = vmatprep.subr.mxu0 0.0
    %2351 = vmatpush1.msra.mxu0 0.0
    %2352 = vmatprep.subr.mxu0 0.0
    %2353 = vmatpush1.msra.mxu0 0.0
    %2354 = vmatprep.subr.mxu0 0.0
    %2355 = vmatpush1.msra.mxu0 0.0
    %2356 = vmatprep.subr.mxu0 0.0
    %2357 = vmatpush1.msra.mxu0 0.0
    %2358 = vmatprep.subr.mxu0 0.0
    %2359 = vmatpush1.msra.mxu0 0.0
    %2360 = vmatprep.subr.mxu0 0.0
    %2361 = vmatpush1.msra.mxu0 0.0
    %2362 = vmatprep.subr.mxu0 0.0
    %2363 = vmatpush1.msra.mxu0 0.0
    %2364 = vmatprep.subr.mxu0 0.0
    %2365 = vmatpush1.msra.mxu0 0.0
    %2366 = vmatprep.subr.mxu0 0.0
    %2367 = vmatpush1.msra.mxu0 0.0
    %2368 = vmatprep.subr.mxu0 0.0
    %2369 = vmatpush1.msra.mxu0 0.0
    %2370 = vmatprep.subr.mxu0 0.0
    %2371 = vmatpush1.msra.mxu0 0.0
    %2372 = vmatprep.mubr.f32.mxu0 0.0
    %v2373 = vand.u32 %v1918, 4294901760
    %2374 = vmatmul.mubr.f32.gmra.mrb[0].mxu0 %v2373
    %v2375 = vpop.f32.mrb[0].mxu0
    %v2376 = vadd.f32 %v2303, %v2375
    %v2377 = vpop.f32.mrb[0].mxu0
    %2378 = vdwg.mxu0
    %v2379 = vadd.f32 %v1916, %v2376
    %v2380 = vtanh.pop %v2379
    %s2381 = scalar_lea.vmem [#allocation7], 40
    %2382 = vst.msk [vmem:[%s2381] sm:$0xff] %vm42, %v2380
    %s2383 = scalar_lea.vmem [#allocation2], 40
    %v2384 = vld [vmem:[%s2383] sm:$0xff]
    %v2386 = vsel %vm42, %v2380, 0
    %2388 = vmatprep.subr.mxu0 0.0
    %v2389 = vand.u32 %v40, 4294901760
    %2390 = vmatpush1.msra.mxu0 %v2389
    %2391 = vmatprep.subr.mxu0 0.0
    %v2392 = vand.u32 %v41, 4294901760
    %2393 = vmatpush1.msra.mxu0 %v2392
    %2394 = vmatprep.subr.mxu0 0.0
    %2395 = vmatpush1.msra.mxu0 0.0
    %2396 = vmatprep.subr.mxu0 0.0
    %2397 = vmatpush1.msra.mxu0 0.0
    %2398 = vmatprep.subr.mxu0 0.0
    %2399 = vmatpush1.msra.mxu0 0.0
    %2400 = vmatprep.subr.mxu0 0.0
    %2401 = vmatpush1.msra.mxu0 0.0
    %2402 = vmatprep.subr.mxu0 0.0
    %2403 = vmatpush1.msra.mxu0 0.0
    %2404 = vmatprep.subr.mxu0 0.0
    %2405 = vmatpush1.msra.mxu0 0.0
    %2406 = vmatprep.subr.mxu0 0.0
    %2407 = vmatpush1.msra.mxu0 0.0
    %2408 = vmatprep.subr.mxu0 0.0
    %2409 = vmatpush1.msra.mxu0 0.0
    %2410 = vmatprep.subr.mxu0 0.0
    %2411 = vmatpush1.msra.mxu0 0.0
    %2412 = vmatprep.subr.mxu0 0.0
    %2413 = vmatpush1.msra.mxu0 0.0
    %2414 = vmatprep.subr.mxu0 0.0
    %2415 = vmatpush1.msra.mxu0 0.0
    %2416 = vmatprep.subr.mxu0 0.0
    %2417 = vmatpush1.msra.mxu0 0.0
    %2418 = vmatprep.subr.mxu0 0.0
    %2419 = vmatpush1.msra.mxu0 0.0
    %2420 = vmatprep.subr.mxu0 0.0
    %2421 = vmatpush1.msra.mxu0 0.0
    %2422 = vmatprep.subr.mxu0 0.0
    %2423 = vmatpush1.msra.mxu0 0.0
    %2424 = vmatprep.subr.mxu0 0.0
    %2425 = vmatpush1.msra.mxu0 0.0
    %2426 = vmatprep.subr.mxu0 0.0
    %2427 = vmatpush1.msra.mxu0 0.0
    %2428 = vmatprep.subr.mxu0 0.0
    %2429 = vmatpush1.msra.mxu0 0.0
    %2430 = vmatprep.subr.mxu0 0.0
    %2431 = vmatpush1.msra.mxu0 0.0
    %2432 = vmatprep.subr.mxu0 0.0
    %2433 = vmatpush1.msra.mxu0 0.0
    %2434 = vmatprep.subr.mxu0 0.0
    %2435 = vmatpush1.msra.mxu0 0.0
    %2436 = vmatprep.subr.mxu0 0.0
    %2437 = vmatpush1.msra.mxu0 0.0
    %2438 = vmatprep.subr.mxu0 0.0
    %2439 = vmatpush1.msra.mxu0 0.0
    %2440 = vmatprep.subr.mxu0 0.0
    %2441 = vmatpush1.msra.mxu0 0.0
    %2442 = vmatprep.subr.mxu0 0.0
    %2443 = vmatpush1.msra.mxu0 0.0
    %2444 = vmatprep.subr.mxu0 0.0
    %2445 = vmatpush1.msra.mxu0 0.0
    %2446 = vmatprep.subr.mxu0 0.0
    %2447 = vmatpush1.msra.mxu0 0.0
    %2448 = vmatprep.subr.mxu0 0.0
    %2449 = vmatpush1.msra.mxu0 0.0
    %2450 = vmatprep.subr.mxu0 0.0
    %2451 = vmatpush1.msra.mxu0 0.0
    %2452 = vmatprep.subr.mxu0 0.0
    %2453 = vmatpush1.msra.mxu0 0.0
    %2454 = vmatprep.mubr.f32.mxu0 0.0
    %v2455 = vand.u32 %v2386, 4294901760
    %v2456 = vsub.f32 %v2386, %v2455
    %v2457 = vand.u32 %v2456, 4294901760
    %v2458 = vsub.f32 %v2456, %v2457
    %v2459 = vand.u32 %v2458, 4294901760
    %2460 = vmatmul.mubr.f32.gmra.mrb[0].mxu0 %v2459
    %v2461 = vpop.f32.mrb[0].mxu0
    %v2462 = vadd.f32 0.0, %v2461
    %v2463 = vpop.f32.mrb[0].mxu0
    %2464 = vdwg.mxu0
    %2465 = vmatprep.subr.mxu0 0.0
    %v2466 = vand.u32 %v40, 4294901760
    %v2467 = vsub.f32 %v40, %v2466
    %v2468 = vand.u32 %v2467, 4294901760
    %v2469 = vsub.f32 %v2467, %v2468
    %v2470 = vand.u32 %v2469, 4294901760
    %2471 = vmatpush1.msra.mxu0 %v2470
    %2472 = vmatprep.subr.mxu0 0.0
    %v2473 = vand.u32 %v41, 4294901760
    %v2474 = vsub.f32 %v41, %v2473
    %v2475 = vand.u32 %v2474, 4294901760
    %v2476 = vsub.f32 %v2474, %v2475
    %v2477 = vand.u32 %v2476, 4294901760
    %2478 = vmatpush1.msra.mxu0 %v2477
    %2479 = vmatprep.subr.mxu0 0.0
    %2480 = vmatpush1.msra.mxu0 0.0
    %2481 = vmatprep.subr.mxu0 0.0
    %2482 = vmatpush1.msra.mxu0 0.0
    %2483 = vmatprep.subr.mxu0 0.0
    %2484 = vmatpush1.msra.mxu0 0.0
    %2485 = vmatprep.subr.mxu0 0.0
    %2486 = vmatpush1.msra.mxu0 0.0
    %2487 = vmatprep.subr.mxu0 0.0
    %2488 = vmatpush1.msra.mxu0 0.0
    %2489 = vmatprep.subr.mxu0 0.0
    %2490 = vmatpush1.msra.mxu0 0.0
    %2491 = vmatprep.subr.mxu0 0.0
    %2492 = vmatpush1.msra.mxu0 0.0
    %2493 = vmatprep.subr.mxu0 0.0
    %2494 = vmatpush1.msra.mxu0 0.0
    %2495 = vmatprep.subr.mxu0 0.0
    %2496 = vmatpush1.msra.mxu0 0.0
    %2497 = vmatprep.subr.mxu0 0.0
    %2498 = vmatpush1.msra.mxu0 0.0
    %2499 = vmatprep.subr.mxu0 0.0
    %2500 = vmatpush1.msra.mxu0 0.0
    %2501 = vmatprep.subr.mxu0 0.0
    %2502 = vmatpush1.msra.mxu0 0.0
    %2503 = vmatprep.subr.mxu0 0.0
    %2504 = vmatpush1.msra.mxu0 0.0
    %2505 = vmatprep.subr.mxu0 0.0
    %2506 = vmatpush1.msra.mxu0 0.0
    %2507 = vmatprep.subr.mxu0 0.0
    %2508 = vmatpush1.msra.mxu0 0.0
    %2509 = vmatprep.subr.mxu0 0.0
    %2510 = vmatpush1.msra.mxu0 0.0
    %2511 = vmatprep.subr.mxu0 0.0
    %2512 = vmatpush1.msra.mxu0 0.0
    %2513 = vmatprep.subr.mxu0 0.0
    %2514 = vmatpush1.msra.mxu0 0.0
    %2515 = vmatprep.subr.mxu0 0.0
    %2516 = vmatpush1.msra.mxu0 0.0
    %2517 = vmatprep.subr.mxu0 0.0
    %2518 = vmatpush1.msra.mxu0 0.0
    %2519 = vmatprep.subr.mxu0 0.0
    %2520 = vmatpush1.msra.mxu0 0.0
    %2521 = vmatprep.subr.mxu0 0.0
    %2522 = vmatpush1.msra.mxu0 0.0
    %2523 = vmatprep.subr.mxu0 0.0
    %2524 = vmatpush1.msra.mxu0 0.0
    %2525 = vmatprep.subr.mxu0 0.0
    %2526 = vmatpush1.msra.mxu0 0.0
    %2527 = vmatprep.subr.mxu0 0.0
    %2528 = vmatpush1.msra.mxu0 0.0
    %2529 = vmatprep.subr.mxu0 0.0
    %2530 = vmatpush1.msra.mxu0 0.0
    %2531 = vmatprep.subr.mxu0 0.0
    %2532 = vmatpush1.msra.mxu0 0.0
    %2533 = vmatprep.subr.mxu0 0.0
    %2534 = vmatpush1.msra.mxu0 0.0
    %2535 = vmatprep.subr.mxu0 0.0
    %2536 = vmatpush1.msra.mxu0 0.0
    %2537 = vmatprep.subr.mxu0 0.0
    %2538 = vmatpush1.msra.mxu0 0.0
    %2539 = vmatprep.mubr.f32.mxu0 0.0
    %v2540 = vand.u32 %v2386, 4294901760
    %2541 = vmatmul.mubr.f32.gmra.mrb[0].mxu0 %v2540
    %v2542 = vpop.f32.mrb[0].mxu0
    %v2543 = vadd.f32 %v2462, %v2542
    %v2544 = vpop.f32.mrb[0].mxu0
    %2545 = vdwg.mxu0
    %2546 = vmatprep.subr.mxu0 0.0
    %v2547 = vand.u32 %v40, 4294901760
    %v2548 = vsub.f32 %v40, %v2547
    %2549 = vmatpush1.msra.mxu0 %v2548
    %2550 = vmatprep.subr.mxu0 0.0
    %v2551 = vand.u32 %v41, 4294901760
    %v2552 = vsub.f32 %v41, %v2551
    %2553 = vmatpush1.msra.mxu0 %v2552
    %2554 = vmatprep.subr.mxu0 0.0
    %2555 = vmatpush1.msra.mxu0 0.0
    %2556 = vmatprep.subr.mxu0 0.0
    %2557 = vmatpush1.msra.mxu0 0.0
    %2558 = vmatprep.subr.mxu0 0.0
    %2559 = vmatpush1.msra.mxu0 0.0
    %2560 = vmatprep.subr.mxu0 0.0
    %2561 = vmatpush1.msra.mxu0 0.0
    %2562 = vmatprep.subr.mxu0 0.0
    %2563 = vmatpush1.msra.mxu0 0.0
    %2564 = vmatprep.subr.mxu0 0.0
    %2565 = vmatpush1.msra.mxu0 0.0
    %2566 = vmatprep.subr.mxu0 0.0
    %2567 = vmatpush1.msra.mxu0 0.0
    %2568 = vmatprep.subr.mxu0 0.0
    %2569 = vmatpush1.msra.mxu0 0.0
    %2570 = vmatprep.subr.mxu0 0.0
    %2571 = vmatpush1.msra.mxu0 0.0
    %2572 = vmatprep.subr.mxu0 0.0
    %2573 = vmatpush1.msra.mxu0 0.0
    %2574 = vmatprep.subr.mxu0 0.0
    %2575 = vmatpush1.msra.mxu0 0.0
    %2576 = vmatprep.subr.mxu0 0.0
    %2577 = vmatpush1.msra.mxu0 0.0
    %2578 = vmatprep.subr.mxu0 0.0
    %2579 = vmatpush1.msra.mxu0 0.0
    %2580 = vmatprep.subr.mxu0 0.0
    %2581 = vmatpush1.msra.mxu0 0.0
    %2582 = vmatprep.subr.mxu0 0.0
    %2583 = vmatpush1.msra.mxu0 0.0
    %2584 = vmatprep.subr.mxu0 0.0
    %2585 = vmatpush1.msra.mxu0 0.0
    %2586 = vmatprep.subr.mxu0 0.0
    %2587 = vmatpush1.msra.mxu0 0.0
    %2588 = vmatprep.subr.mxu0 0.0
    %2589 = vmatpush1.msra.mxu0 0.0
    %2590 = vmatprep.subr.mxu0 0.0
    %2591 = vmatpush1.msra.mxu0 0.0
    %2592 = vmatprep.subr.mxu0 0.0
    %2593 = vmatpush1.msra.mxu0 0.0
    %2594 = vmatprep.subr.mxu0 0.0
    %2595 = vmatpush1.msra.mxu0 0.0
    %2596 = vmatprep.subr.mxu0 0.0
    %2597 = vmatpush1.msra.mxu0 0.0
    %2598 = vmatprep.subr.mxu0 0.0
    %2599 = vmatpush1.msra.mxu0 0.0
    %2600 = vmatprep.subr.mxu0 0.0
    %2601 = vmatpush1.msra.mxu0 0.0
    %2602 = vmatprep.subr.mxu0 0.0
    %2603 = vmatpush1.msra.mxu0 0.0
    %2604 = vmatprep.subr.mxu0 0.0
    %2605 = vmatpush1.msra.mxu0 0.0
    %2606 = vmatprep.subr.mxu0 0.0
    %2607 = vmatpush1.msra.mxu0 0.0
    %2608 = vmatprep.subr.mxu0 0.0
    %2609 = vmatpush1.msra.mxu0 0.0
    %2610 = vmatprep.subr.mxu0 0.0
    %2611 = vmatpush1.msra.mxu0 0.0
    %2612 = vmatprep.subr.mxu0 0.0
    %2613 = vmatpush1.msra.mxu0 0.0
    %2614 = vmatprep.mubr.f32.mxu0 0.0
    %v2615 = vand.u32 %v2386, 4294901760
    %v2616 = vsub.f32 %v2386, %v2615
    %2617 = vmatmul.mubr.f32.gmra.mrb[0].mxu0 %v2616
    %v2618 = vpop.f32.mrb[0].mxu0
    %v2619 = vadd.f32 %v2543, %v2618
    %v2620 = vpop.f32.mrb[0].mxu0
    %2621 = vdwg.mxu0
    %2622 = vmatprep.subr.mxu0 0.0
    %v2623 = vand.u32 %v40, 4294901760
    %2624 = vmatpush1.msra.mxu0 %v2623
    %2625 = vmatprep.subr.mxu0 0.0
    %v2626 = vand.u32 %v41, 4294901760
    %2627 = vmatpush1.msra.mxu0 %v2626
    %2628 = vmatprep.subr.mxu0 0.0
    %2629 = vmatpush1.msra.mxu0 0.0
    %2630 = vmatprep.subr.mxu0 0.0
    %2631 = vmatpush1.msra.mxu0 0.0
    %2632 = vmatprep.subr.mxu0 0.0
    %2633 = vmatpush1.msra.mxu0 0.0
    %2634 = vmatprep.subr.mxu0 0.0
    %2635 = vmatpush1.msra.mxu0 0.0
    %2636 = vmatprep.subr.mxu0 0.0
    %2637 = vmatpush1.msra.mxu0 0.0
    %2638 = vmatprep.subr.mxu0 0.0
    %2639 = vmatpush1.msra.mxu0 0.0
    %2640 = vmatprep.subr.mxu0 0.0
    %2641 = vmatpush1.msra.mxu0 0.0
    %2642 = vmatprep.subr.mxu0 0.0
    %2643 = vmatpush1.msra.mxu0 0.0
    %2644 = vmatprep.subr.mxu0 0.0
    %2645 = vmatpush1.msra.mxu0 0.0
    %2646 = vmatprep.subr.mxu0 0.0
    %2647 = vmatpush1.msra.mxu0 0.0
    %2648 = vmatprep.subr.mxu0 0.0
    %2649 = vmatpush1.msra.mxu0 0.0
    %2650 = vmatprep.subr.mxu0 0.0
    %2651 = vmatpush1.msra.mxu0 0.0
    %2652 = vmatprep.subr.mxu0 0.0
    %2653 = vmatpush1.msra.mxu0 0.0
    %2654 = vmatprep.subr.mxu0 0.0
    %2655 = vmatpush1.msra.mxu0 0.0
    %2656 = vmatprep.subr.mxu0 0.0
    %2657 = vmatpush1.msra.mxu0 0.0
    %2658 = vmatprep.subr.mxu0 0.0
    %2659 = vmatpush1.msra.mxu0 0.0
    %2660 = vmatprep.subr.mxu0 0.0
    %2661 = vmatpush1.msra.mxu0 0.0
    %2662 = vmatprep.subr.mxu0 0.0
    %2663 = vmatpush1.msra.mxu0 0.0
    %2664 = vmatprep.subr.mxu0 0.0
    %2665 = vmatpush1.msra.mxu0 0.0
    %2666 = vmatprep.subr.mxu0 0.0
    %2667 = vmatpush1.msra.mxu0 0.0
    %2668 = vmatprep.subr.mxu0 0.0
    %2669 = vmatpush1.msra.mxu0 0.0
    %2670 = vmatprep.subr.mxu0 0.0
    %2671 = vmatpush1.msra.mxu0 0.0
    %2672 = vmatprep.subr.mxu0 0.0
    %2673 = vmatpush1.msra.mxu0 0.0
    %2674 = vmatprep.subr.mxu0 0.0
    %2675 = vmatpush1.msra.mxu0 0.0
    %2676 = vmatprep.subr.mxu0 0.0
    %2677 = vmatpush1.msra.mxu0 0.0
    %2678 = vmatprep.subr.mxu0 0.0
    %2679 = vmatpush1.msra.mxu0 0.0
    %2680 = vmatprep.subr.mxu0 0.0
    %2681 = vmatpush1.msra.mxu0 0.0
    %2682 = vmatprep.subr.mxu0 0.0
    %2683 = vmatpush1.msra.mxu0 0.0
    %2684 = vmatprep.subr.mxu0 0.0
    %2685 = vmatpush1.msra.mxu0 0.0
    %2686 = vmatprep.subr.mxu0 0.0
    %2687 = vmatpush1.msra.mxu0 0.0
    %2688 = vmatprep.mubr.f32.mxu0 0.0
    %v2689 = vand.u32 %v2386, 4294901760
    %v2690 = vsub.f32 %v2386, %v2689
    %v2691 = vand.u32 %v2690, 4294901760
    %2692 = vmatmul.mubr.f32.gmra.mrb[0].mxu0 %v2691
    %v2693 = vpop.f32.mrb[0].mxu0
    %v2694 = vadd.f32 %v2619, %v2693
    %v2695 = vpop.f32.mrb[0].mxu0
    %2696 = vdwg.mxu0
    %2697 = vmatprep.subr.mxu0 0.0
    %v2698 = vand.u32 %v40, 4294901760
    %v2699 = vsub.f32 %v40, %v2698
    %v2700 = vand.u32 %v2699, 4294901760
    %2701 = vmatpush1.msra.mxu0 %v2700
    %2702 = vmatprep.subr.mxu0 0.0
    %v2703 = vand.u32 %v41, 4294901760
    %v2704 = vsub.f32 %v41, %v2703
    %v2705 = vand.u32 %v2704, 4294901760
    %2706 = vmatpush1.msra.mxu0 %v2705
    %2707 = vmatprep.subr.mxu0 0.0
    %2708 = vmatpush1.msra.mxu0 0.0
    %2709 = vmatprep.subr.mxu0 0.0
    %2710 = vmatpush1.msra.mxu0 0.0
    %2711 = vmatprep.subr.mxu0 0.0
    %2712 = vmatpush1.msra.mxu0 0.0
    %2713 = vmatprep.subr.mxu0 0.0
    %2714 = vmatpush1.msra.mxu0 0.0
    %2715 = vmatprep.subr.mxu0 0.0
    %2716 = vmatpush1.msra.mxu0 0.0
    %2717 = vmatprep.subr.mxu0 0.0
    %2718 = vmatpush1.msra.mxu0 0.0
    %2719 = vmatprep.subr.mxu0 0.0
    %2720 = vmatpush1.msra.mxu0 0.0
    %2721 = vmatprep.subr.mxu0 0.0
    %2722 = vmatpush1.msra.mxu0 0.0
    %2723 = vmatprep.subr.mxu0 0.0
    %2724 = vmatpush1.msra.mxu0 0.0
    %2725 = vmatprep.subr.mxu0 0.0
    %2726 = vmatpush1.msra.mxu0 0.0
    %2727 = vmatprep.subr.mxu0 0.0
    %2728 = vmatpush1.msra.mxu0 0.0
    %2729 = vmatprep.subr.mxu0 0.0
    %2730 = vmatpush1.msra.mxu0 0.0
    %2731 = vmatprep.subr.mxu0 0.0
    %2732 = vmatpush1.msra.mxu0 0.0
    %2733 = vmatprep.subr.mxu0 0.0
    %2734 = vmatpush1.msra.mxu0 0.0
    %2735 = vmatprep.subr.mxu0 0.0
    %2736 = vmatpush1.msra.mxu0 0.0
    %2737 = vmatprep.subr.mxu0 0.0
    %2738 = vmatpush1.msra.mxu0 0.0
    %2739 = vmatprep.subr.mxu0 0.0
    %2740 = vmatpush1.msra.mxu0 0.0
    %2741 = vmatprep.subr.mxu0 0.0
    %2742 = vmatpush1.msra.mxu0 0.0
    %2743 = vmatprep.subr.mxu0 0.0
    %2744 = vmatpush1.msra.mxu0 0.0
    %2745 = vmatprep.subr.mxu0 0.0
    %2746 = vmatpush1.msra.mxu0 0.0
    %2747 = vmatprep.subr.mxu0 0.0
    %2748 = vmatpush1.msra.mxu0 0.0
    %2749 = vmatprep.subr.mxu0 0.0
    %2750 = vmatpush1.msra.mxu0 0.0
    %2751 = vmatprep.subr.mxu0 0.0
    %2752 = vmatpush1.msra.mxu0 0.0
    %2753 = vmatprep.subr.mxu0 0.0
    %2754 = vmatpush1.msra.mxu0 0.0
    %2755 = vmatprep.subr.mxu0 0.0
    %2756 = vmatpush1.msra.mxu0 0.0
    %2757 = vmatprep.subr.mxu0 0.0
    %2758 = vmatpush1.msra.mxu0 0.0
    %2759 = vmatprep.subr.mxu0 0.0
    %2760 = vmatpush1.msra.mxu0 0.0
    %2761 = vmatprep.subr.mxu0 0.0
    %2762 = vmatpush1.msra.mxu0 0.0
    %2763 = vmatprep.subr.mxu0 0.0
    %2764 = vmatpush1.msra.mxu0 0.0
    %2765 = vmatprep.subr.mxu0 0.0
    %2766 = vmatpush1.msra.mxu0 0.0
    %2767 = vmatprep.mubr.f32.mxu0 0.0
    %v2768 = vand.u32 %v2386, 4294901760
    %2769 = vmatmul.mubr.f32.gmra.mrb[0].mxu0 %v2768
    %v2770 = vpop.f32.mrb[0].mxu0
    %v2771 = vadd.f32 %v2694, %v2770
    %v2772 = vpop.f32.mrb[0].mxu0
    %2773 = vdwg.mxu0
    %2774 = vmatprep.subr.mxu0 0.0
    %v2775 = vand.u32 %v40, 4294901760
    %2776 = vmatpush1.msra.mxu0 %v2775
    %2777 = vmatprep.subr.mxu0 0.0
    %v2778 = vand.u32 %v41, 4294901760
    %2779 = vmatpush1.msra.mxu0 %v2778
    %2780 = vmatprep.subr.mxu0 0.0
    %2781 = vmatpush1.msra.mxu0 0.0
    %2782 = vmatprep.subr.mxu0 0.0
    %2783 = vmatpush1.msra.mxu0 0.0
    %2784 = vmatprep.subr.mxu0 0.0
    %2785 = vmatpush1.msra.mxu0 0.0
    %2786 = vmatprep.subr.mxu0 0.0
    %2787 = vmatpush1.msra.mxu0 0.0
    %2788 = vmatprep.subr.mxu0 0.0
    %2789 = vmatpush1.msra.mxu0 0.0
    %2790 = vmatprep.subr.mxu0 0.0
    %2791 = vmatpush1.msra.mxu0 0.0
    %2792 = vmatprep.subr.mxu0 0.0
    %2793 = vmatpush1.msra.mxu0 0.0
    %2794 = vmatprep.subr.mxu0 0.0
    %2795 = vmatpush1.msra.mxu0 0.0
    %2796 = vmatprep.subr.mxu0 0.0
    %2797 = vmatpush1.msra.mxu0 0.0
    %2798 = vmatprep.subr.mxu0 0.0
    %2799 = vmatpush1.msra.mxu0 0.0
    %2800 = vmatprep.subr.mxu0 0.0
    %2801 = vmatpush1.msra.mxu0 0.0
    %2802 = vmatprep.subr.mxu0 0.0
    %2803 = vmatpush1.msra.mxu0 0.0
    %2804 = vmatprep.subr.mxu0 0.0
    %2805 = vmatpush1.msra.mxu0 0.0
    %2806 = vmatprep.subr.mxu0 0.0
    %2807 = vmatpush1.msra.mxu0 0.0
    %2808 = vmatprep.subr.mxu0 0.0
    %2809 = vmatpush1.msra.mxu0 0.0
    %2810 = vmatprep.subr.mxu0 0.0
    %2811 = vmatpush1.msra.mxu0 0.0
    %2812 = vmatprep.subr.mxu0 0.0
    %2813 = vmatpush1.msra.mxu0 0.0
    %2814 = vmatprep.subr.mxu0 0.0
    %2815 = vmatpush1.msra.mxu0 0.0
    %2816 = vmatprep.subr.mxu0 0.0
    %2817 = vmatpush1.msra.mxu0 0.0
    %2818 = vmatprep.subr.mxu0 0.0
    %2819 = vmatpush1.msra.mxu0 0.0
    %2820 = vmatprep.subr.mxu0 0.0
    %2821 = vmatpush1.msra.mxu0 0.0
    %2822 = vmatprep.subr.mxu0 0.0
    %2823 = vmatpush1.msra.mxu0 0.0
    %2824 = vmatprep.subr.mxu0 0.0
    %2825 = vmatpush1.msra.mxu0 0.0
    %2826 = vmatprep.subr.mxu0 0.0
    %2827 = vmatpush1.msra.mxu0 0.0
    %2828 = vmatprep.subr.mxu0 0.0
    %2829 = vmatpush1.msra.mxu0 0.0
    %2830 = vmatprep.subr.mxu0 0.0
    %2831 = vmatpush1.msra.mxu0 0.0
    %2832 = vmatprep.subr.mxu0 0.0
    %2833 = vmatpush1.msra.mxu0 0.0
    %2834 = vmatprep.subr.mxu0 0.0
    %2835 = vmatpush1.msra.mxu0 0.0
    %2836 = vmatprep.subr.mxu0 0.0
    %2837 = vmatpush1.msra.mxu0 0.0
    %2838 = vmatprep.subr.mxu0 0.0
    %2839 = vmatpush1.msra.mxu0 0.0
    %2840 = vmatprep.mubr.f32.mxu0 0.0
    %v2841 = vand.u32 %v2386, 4294901760
    %2842 = vmatmul.mubr.f32.gmra.mrb[0].mxu0 %v2841
    %v2843 = vpop.f32.mrb[0].mxu0
    %v2844 = vadd.f32 %v2771, %v2843
    %v2845 = vpop.f32.mrb[0].mxu0
    %2846 = vdwg.mxu0
    %v2847 = vadd.f32 %v2384, %v2844
    %v2848 = vtanh.pop %v2847
    %s2849 = scalar_lea.vmem [#allocation7], 48
    %2850 = vst.msk [vmem:[%s2849] sm:$0xff] %vm42, %v2848
    %s2851 = scalar_lea.vmem [#allocation2], 48
    %v2852 = vld [vmem:[%s2851] sm:$0xff]
    %v2854 = vsel %vm42, %v2848, 0
    %2856 = vmatprep.subr.mxu0 0.0
    %v2857 = vand.u32 %v40, 4294901760
    %2858 = vmatpush1.msra.mxu0 %v2857
    %2859 = vmatprep.subr.mxu0 0.0
    %v2860 = vand.u32 %v41, 4294901760
    %2861 = vmatpush1.msra.mxu0 %v2860
    %2862 = vmatprep.subr.mxu0 0.0
    %2863 = vmatpush1.msra.mxu0 0.0
    %2864 = vmatprep.subr.mxu0 0.0
    %2865 = vmatpush1.msra.mxu0 0.0
    %2866 = vmatprep.subr.mxu0 0.0
    %2867 = vmatpush1.msra.mxu0 0.0
    %2868 = vmatprep.subr.mxu0 0.0
    %2869 = vmatpush1.msra.mxu0 0.0
    %2870 = vmatprep.subr.mxu0 0.0
    %2871 = vmatpush1.msra.mxu0 0.0
    %2872 = vmatprep.subr.mxu0 0.0
    %2873 = vmatpush1.msra.mxu0 0.0
    %2874 = vmatprep.subr.mxu0 0.0
    %2875 = vmatpush1.msra.mxu0 0.0
    %2876 = vmatprep.subr.mxu0 0.0
    %2877 = vmatpush1.msra.mxu0 0.0
    %2878 = vmatprep.subr.mxu0 0.0
    %2879 = vmatpush1.msra.mxu0 0.0
    %2880 = vmatprep.subr.mxu0 0.0
    %2881 = vmatpush1.msra.mxu0 0.0
    %2882 = vmatprep.subr.mxu0 0.0
    %2883 = vmatpush1.msra.mxu0 0.0
    %2884 = vmatprep.subr.mxu0 0.0
    %2885 = vmatpush1.msra.mxu0 0.0
    %2886 = vmatprep.subr.mxu0 0.0
    %2887 = vmatpush1.msra.mxu0 0.0
    %2888 = vmatprep.subr.mxu0 0.0
    %2889 = vmatpush1.msra.mxu0 0.0
    %2890 = vmatprep.subr.mxu0 0.0
    %2891 = vmatpush1.msra.mxu0 0.0
    %2892 = vmatprep.subr.mxu0 0.0
    %2893 = vmatpush1.msra.mxu0 0.0
    %2894 = vmatprep.subr.mxu0 0.0
    %2895 = vmatpush1.msra.mxu0 0.0
    %2896 = vmatprep.subr.mxu0 0.0
    %2897 = vmatpush1.msra.mxu0 0.0
    %2898 = vmatprep.subr.mxu0 0.0
    %2899 = vmatpush1.msra.mxu0 0.0
    %2900 = vmatprep.subr.mxu0 0.0
    %2901 = vmatpush1.msra.mxu0 0.0
    %2902 = vmatprep.subr.mxu0 0.0
    %2903 = vmatpush1.msra.mxu0 0.0
    %2904 = vmatprep.subr.mxu0 0.0
    %2905 = vmatpush1.msra.mxu0 0.0
    %2906 = vmatprep.subr.mxu0 0.0
    %2907 = vmatpush1.msra.mxu0 0.0
    %2908 = vmatprep.subr.mxu0 0.0
    %2909 = vmatpush1.msra.mxu0 0.0
    %2910 = vmatprep.subr.mxu0 0.0
    %2911 = vmatpush1.msra.mxu0 0.0
    %2912 = vmatprep.subr.mxu0 0.0
    %2913 = vmatpush1.msra.mxu0 0.0
    %2914 = vmatprep.subr.mxu0 0.0
    %2915 = vmatpush1.msra.mxu0 0.0
    %2916 = vmatprep.subr.mxu0 0.0
    %2917 = vmatpush1.msra.mxu0 0.0
    %2918 = vmatprep.subr.mxu0 0.0
    %2919 = vmatpush1.msra.mxu0 0.0
    %2920 = vmatprep.subr.mxu0 0.0
    %2921 = vmatpush1.msra.mxu0 0.0
    %2922 = vmatprep.mubr.f32.mxu0 0.0
    %v2923 = vand.u32 %v2854, 4294901760
    %v2924 = vsub.f32 %v2854, %v2923
    %v2925 = vand.u32 %v2924, 4294901760
    %v2926 = vsub.f32 %v2924, %v2925
    %v2927 = vand.u32 %v2926, 4294901760
    %2928 = vmatmul.mubr.f32.gmra.mrb[0].mxu0 %v2927
    %v2929 = vpop.f32.mrb[0].mxu0
    %v2930 = vadd.f32 0.0, %v2929
    %v2931 = vpop.f32.mrb[0].mxu0
    %2932 = vdwg.mxu0
    %2933 = vmatprep.subr.mxu0 0.0
    %v2934 = vand.u32 %v40, 4294901760
    %v2935 = vsub.f32 %v40, %v2934
    %v2936 = vand.u32 %v2935, 4294901760
    %v2937 = vsub.f32 %v2935, %v2936
    %v2938 = vand.u32 %v2937, 4294901760
    %2939 = vmatpush1.msra.mxu0 %v2938
    %2940 = vmatprep.subr.mxu0 0.0
    %v2941 = vand.u32 %v41, 4294901760
    %v2942 = vsub.f32 %v41, %v2941
    %v2943 = vand.u32 %v2942, 4294901760
    %v2944 = vsub.f32 %v2942, %v2943
    %v2945 = vand.u32 %v2944, 4294901760
    %2946 = vmatpush1.msra.mxu0 %v2945
    %2947 = vmatprep.subr.mxu0 0.0
    %2948 = vmatpush1.msra.mxu0 0.0
    %2949 = vmatprep.subr.mxu0 0.0
    %2950 = vmatpush1.msra.mxu0 0.0
    %2951 = vmatprep.subr.mxu0 0.0
    %2952 = vmatpush1.msra.mxu0 0.0
    %2953 = vmatprep.subr.mxu0 0.0
    %2954 = vmatpush1.msra.mxu0 0.0
    %2955 = vmatprep.subr.mxu0 0.0
    %2956 = vmatpush1.msra.mxu0 0.0
    %2957 = vmatprep.subr.mxu0 0.0
    %2958 = vmatpush1.msra.mxu0 0.0
    %2959 = vmatprep.subr.mxu0 0.0
    %2960 = vmatpush1.msra.mxu0 0.0
    %2961 = vmatprep.subr.mxu0 0.0
    %2962 = vmatpush1.msra.mxu0 0.0
    %2963 = vmatprep.subr.mxu0 0.0
    %2964 = vmatpush1.msra.mxu0 0.0
    %2965 = vmatprep.subr.mxu0 0.0
    %2966 = vmatpush1.msra.mxu0 0.0
    %2967 = vmatprep.subr.mxu0 0.0
    %2968 = vmatpush1.msra.mxu0 0.0
    %2969 = vmatprep.subr.mxu0 0.0
    %2970 = vmatpush1.msra.mxu0 0.0
    %2971 = vmatprep.subr.mxu0 0.0
    %2972 = vmatpush1.msra.mxu0 0.0
    %2973 = vmatprep.subr.mxu0 0.0
    %2974 = vmatpush1.msra.mxu0 0.0
    %2975 = vmatprep.subr.mxu0 0.0
    %2976 = vmatpush1.msra.mxu0 0.0
    %2977 = vmatprep.subr.mxu0 0.0
    %2978 = vmatpush1.msra.mxu0 0.0
    %2979 = vmatprep.subr.mxu0 0.0
    %2980 = vmatpush1.msra.mxu0 0.0
    %2981 = vmatprep.subr.mxu0 0.0
    %2982 = vmatpush1.msra.mxu0 0.0
    %2983 = vmatprep.subr.mxu0 0.0
    %2984 = vmatpush1.msra.mxu0 0.0
    %2985 = vmatprep.subr.mxu0 0.0
    %2986 = vmatpush1.msra.mxu0 0.0
    %2987 = vmatprep.subr.mxu0 0.0
    %2988 = vmatpush1.msra.mxu0 0.0
    %2989 = vmatprep.subr.mxu0 0.0
    %2990 = vmatpush1.msra.mxu0 0.0
    %2991 = vmatprep.subr.mxu0 0.0
    %2992 = vmatpush1.msra.mxu0 0.0
    %2993 = vmatprep.subr.mxu0 0.0
    %2994 = vmatpush1.msra.mxu0 0.0
    %2995 = vmatprep.subr.mxu0 0.0
    %2996 = vmatpush1.msra.mxu0 0.0
    %2997 = vmatprep.subr.mxu0 0.0
    %2998 = vmatpush1.msra.mxu0 0.0
    %2999 = vmatprep.subr.mxu0 0.0
    %3000 = vmatpush1.msra.mxu0 0.0
    %3001 = vmatprep.subr.mxu0 0.0
    %3002 = vmatpush1.msra.mxu0 0.0
    %3003 = vmatprep.subr.mxu0 0.0
    %3004 = vmatpush1.msra.mxu0 0.0
    %3005 = vmatprep.subr.mxu0 0.0
    %3006 = vmatpush1.msra.mxu0 0.0
    %3007 = vmatprep.mubr.f32.mxu0 0.0
    %v3008 = vand.u32 %v2854, 4294901760
    %3009 = vmatmul.mubr.f32.gmra.mrb[0].mxu0 %v3008
    %v3010 = vpop.f32.mrb[0].mxu0
    %v3011 = vadd.f32 %v2930, %v3010
    %v3012 = vpop.f32.mrb[0].mxu0
    %3013 = vdwg.mxu0
    %3014 = vmatprep.subr.mxu0 0.0
    %v3015 = vand.u32 %v40, 4294901760
    %v3016 = vsub.f32 %v40, %v3015
    %3017 = vmatpush1.msra.mxu0 %v3016
    %3018 = vmatprep.subr.mxu0 0.0
    %v3019 = vand.u32 %v41, 4294901760
    %v3020 = vsub.f32 %v41, %v3019
    %3021 = vmatpush1.msra.mxu0 %v3020
    %3022 = vmatprep.subr.mxu0 0.0
    %3023 = vmatpush1.msra.mxu0 0.0
    %3024 = vmatprep.subr.mxu0 0.0
    %3025 = vmatpush1.msra.mxu0 0.0
    %3026 = vmatprep.subr.mxu0 0.0
    %3027 = vmatpush1.msra.mxu0 0.0
    %3028 = vmatprep.subr.mxu0 0.0
    %3029 = vmatpush1.msra.mxu0 0.0
    %3030 = vmatprep.subr.mxu0 0.0
    %3031 = vmatpush1.msra.mxu0 0.0
    %3032 = vmatprep.subr.mxu0 0.0
    %3033 = vmatpush1.msra.mxu0 0.0
    %3034 = vmatprep.subr.mxu0 0.0
    %3035 = vmatpush1.msra.mxu0 0.0
    %3036 = vmatprep.subr.mxu0 0.0
    %3037 = vmatpush1.msra.mxu0 0.0
    %3038 = vmatprep.subr.mxu0 0.0
    %3039 = vmatpush1.msra.mxu0 0.0
    %3040 = vmatprep.subr.mxu0 0.0
    %3041 = vmatpush1.msra.mxu0 0.0
    %3042 = vmatprep.subr.mxu0 0.0
    %3043 = vmatpush1.msra.mxu0 0.0
    %3044 = vmatprep.subr.mxu0 0.0
    %3045 = vmatpush1.msra.mxu0 0.0
    %3046 = vmatprep.subr.mxu0 0.0
    %3047 = vmatpush1.msra.mxu0 0.0
    %3048 = vmatprep.subr.mxu0 0.0
    %3049 = vmatpush1.msra.mxu0 0.0
    %3050 = vmatprep.subr.mxu0 0.0
    %3051 = vmatpush1.msra.mxu0 0.0
    %3052 = vmatprep.subr.mxu0 0.0
    %3053 = vmatpush1.msra.mxu0 0.0
    %3054 = vmatprep.subr.mxu0 0.0
    %3055 = vmatpush1.msra.mxu0 0.0
    %3056 = vmatprep.subr.mxu0 0.0
    %3057 = vmatpush1.msra.mxu0 0.0
    %3058 = vmatprep.subr.mxu0 0.0
    %3059 = vmatpush1.msra.mxu0 0.0
    %3060 = vmatprep.subr.mxu0 0.0
    %3061 = vmatpush1.msra.mxu0 0.0
    %3062 = vmatprep.subr.mxu0 0.0
    %3063 = vmatpush1.msra.mxu0 0.0
    %3064 = vmatprep.subr.mxu0 0.0
    %3065 = vmatpush1.msra.mxu0 0.0
    %3066 = vmatprep.subr.mxu0 0.0
    %3067 = vmatpush1.msra.mxu0 0.0
    %3068 = vmatprep.subr.mxu0 0.0
    %3069 = vmatpush1.msra.mxu0 0.0
    %3070 = vmatprep.subr.mxu0 0.0
    %3071 = vmatpush1.msra.mxu0 0.0
    %3072 = vmatprep.subr.mxu0 0.0
    %3073 = vmatpush1.msra.mxu0 0.0
    %3074 = vmatprep.subr.mxu0 0.0
    %3075 = vmatpush1.msra.mxu0 0.0
    %3076 = vmatprep.subr.mxu0 0.0
    %3077 = vmatpush1.msra.mxu0 0.0
    %3078 = vmatprep.subr.mxu0 0.0
    %3079 = vmatpush1.msra.mxu0 0.0
    %3080 = vmatprep.subr.mxu0 0.0
    %3081 = vmatpush1.msra.mxu0 0.0
    %3082 = vmatprep.mubr.f32.mxu0 0.0
    %v3083 = vand.u32 %v2854, 4294901760
    %v3084 = vsub.f32 %v2854, %v3083
    %3085 = vmatmul.mubr.f32.gmra.mrb[0].mxu0 %v3084
    %v3086 = vpop.f32.mrb[0].mxu0
    %v3087 = vadd.f32 %v3011, %v3086
    %v3088 = vpop.f32.mrb[0].mxu0
    %3089 = vdwg.mxu0
    %3090 = vmatprep.subr.mxu0 0.0
    %v3091 = vand.u32 %v40, 4294901760
    %3092 = vmatpush1.msra.mxu0 %v3091
    %3093 = vmatprep.subr.mxu0 0.0
    %v3094 = vand.u32 %v41, 4294901760
    %3095 = vmatpush1.msra.mxu0 %v3094
    %3096 = vmatprep.subr.mxu0 0.0
    %3097 = vmatpush1.msra.mxu0 0.0
    %3098 = vmatprep.subr.mxu0 0.0
    %3099 = vmatpush1.msra.mxu0 0.0
    %3100 = vmatprep.subr.mxu0 0.0
    %3101 = vmatpush1.msra.mxu0 0.0
    %3102 = vmatprep.subr.mxu0 0.0
    %3103 = vmatpush1.msra.mxu0 0.0
    %3104 = vmatprep.subr.mxu0 0.0
    %3105 = vmatpush1.msra.mxu0 0.0
    %3106 = vmatprep.subr.mxu0 0.0
    %3107 = vmatpush1.msra.mxu0 0.0
    %3108 = vmatprep.subr.mxu0 0.0
    %3109 = vmatpush1.msra.mxu0 0.0
    %3110 = vmatprep.subr.mxu0 0.0
    %3111 = vmatpush1.msra.mxu0 0.0
    %3112 = vmatprep.subr.mxu0 0.0
    %3113 = vmatpush1.msra.mxu0 0.0
    %3114 = vmatprep.subr.mxu0 0.0
    %3115 = vmatpush1.msra.mxu0 0.0
    %3116 = vmatprep.subr.mxu0 0.0
    %3117 = vmatpush1.msra.mxu0 0.0
    %3118 = vmatprep.subr.mxu0 0.0
    %3119 = vmatpush1.msra.mxu0 0.0
    %3120 = vmatprep.subr.mxu0 0.0
    %3121 = vmatpush1.msra.mxu0 0.0
    %3122 = vmatprep.subr.mxu0 0.0
    %3123 = vmatpush1.msra.mxu0 0.0
    %3124 = vmatprep.subr.mxu0 0.0
    %3125 = vmatpush1.msra.mxu0 0.0
    %3126 = vmatprep.subr.mxu0 0.0
    %3127 = vmatpush1.msra.mxu0 0.0
    %3128 = vmatprep.subr.mxu0 0.0
    %3129 = vmatpush1.msra.mxu0 0.0
    %3130 = vmatprep.subr.mxu0 0.0
    %3131 = vmatpush1.msra.mxu0 0.0
    %3132 = vmatprep.subr.mxu0 0.0
    %3133 = vmatpush1.msra.mxu0 0.0
    %3134 = vmatprep.subr.mxu0 0.0
    %3135 = vmatpush1.msra.mxu0 0.0
    %3136 = vmatprep.subr.mxu0 0.0
    %3137 = vmatpush1.msra.mxu0 0.0
    %3138 = vmatprep.subr.mxu0 0.0
    %3139 = vmatpush1.msra.mxu0 0.0
    %3140 = vmatprep.subr.mxu0 0.0
    %3141 = vmatpush1.msra.mxu0 0.0
    %3142 = vmatprep.subr.mxu0 0.0
    %3143 = vmatpush1.msra.mxu0 0.0
    %3144 = vmatprep.subr.mxu0 0.0
    %3145 = vmatpush1.msra.mxu0 0.0
    %3146 = vmatprep.subr.mxu0 0.0
    %3147 = vmatpush1.msra.mxu0 0.0
    %3148 = vmatprep.subr.mxu0 0.0
    %3149 = vmatpush1.msra.mxu0 0.0
    %3150 = vmatprep.subr.mxu0 0.0
    %3151 = vmatpush1.msra.mxu0 0.0
    %3152 = vmatprep.subr.mxu0 0.0
    %3153 = vmatpush1.msra.mxu0 0.0
    %3154 = vmatprep.subr.mxu0 0.0
    %3155 = vmatpush1.msra.mxu0 0.0
    %3156 = vmatprep.mubr.f32.mxu0 0.0
    %v3157 = vand.u32 %v2854, 4294901760
    %v3158 = vsub.f32 %v2854, %v3157
    %v3159 = vand.u32 %v3158, 4294901760
    %3160 = vmatmul.mubr.f32.gmra.mrb[0].mxu0 %v3159
    %v3161 = vpop.f32.mrb[0].mxu0
    %v3162 = vadd.f32 %v3087, %v3161
    %v3163 = vpop.f32.mrb[0].mxu0
    %3164 = vdwg.mxu0
    %3165 = vmatprep.subr.mxu0 0.0
    %v3166 = vand.u32 %v40, 4294901760
    %v3167 = vsub.f32 %v40, %v3166
    %v3168 = vand.u32 %v3167, 4294901760
    %3169 = vmatpush1.msra.mxu0 %v3168
    %3170 = vmatprep.subr.mxu0 0.0
    %v3171 = vand.u32 %v41, 4294901760
    %v3172 = vsub.f32 %v41, %v3171
    %v3173 = vand.u32 %v3172, 4294901760
    %3174 = vmatpush1.msra.mxu0 %v3173
    %3175 = vmatprep.subr.mxu0 0.0
    %3176 = vmatpush1.msra.mxu0 0.0
    %3177 = vmatprep.subr.mxu0 0.0
    %3178 = vmatpush1.msra.mxu0 0.0
    %3179 = vmatprep.subr.mxu0 0.0
    %3180 = vmatpush1.msra.mxu0 0.0
    %3181 = vmatprep.subr.mxu0 0.0
    %3182 = vmatpush1.msra.mxu0 0.0
    %3183 = vmatprep.subr.mxu0 0.0
    %3184 = vmatpush1.msra.mxu0 0.0
    %3185 = vmatprep.subr.mxu0 0.0
    %3186 = vmatpush1.msra.mxu0 0.0
    %3187 = vmatprep.subr.mxu0 0.0
    %3188 = vmatpush1.msra.mxu0 0.0
    %3189 = vmatprep.subr.mxu0 0.0
    %3190 = vmatpush1.msra.mxu0 0.0
    %3191 = vmatprep.subr.mxu0 0.0
    %3192 = vmatpush1.msra.mxu0 0.0
    %3193 = vmatprep.subr.mxu0 0.0
    %3194 = vmatpush1.msra.mxu0 0.0
    %3195 = vmatprep.subr.mxu0 0.0
    %3196 = vmatpush1.msra.mxu0 0.0
    %3197 = vmatprep.subr.mxu0 0.0
    %3198 = vmatpush1.msra.mxu0 0.0
    %3199 = vmatprep.subr.mxu0 0.0
    %3200 = vmatpush1.msra.mxu0 0.0
    %3201 = vmatprep.subr.mxu0 0.0
    %3202 = vmatpush1.msra.mxu0 0.0
    %3203 = vmatprep.subr.mxu0 0.0
    %3204 = vmatpush1.msra.mxu0 0.0
    %3205 = vmatprep.subr.mxu0 0.0
    %3206 = vmatpush1.msra.mxu0 0.0
    %3207 = vmatprep.subr.mxu0 0.0
    %3208 = vmatpush1.msra.mxu0 0.0
    %3209 = vmatprep.subr.mxu0 0.0
    %3210 = vmatpush1.msra.mxu0 0.0
    %3211 = vmatprep.subr.mxu0 0.0
    %3212 = vmatpush1.msra.mxu0 0.0
    %3213 = vmatprep.subr.mxu0 0.0
    %3214 = vmatpush1.msra.mxu0 0.0
    %3215 = vmatprep.subr.mxu0 0.0
    %3216 = vmatpush1.msra.mxu0 0.0
    %3217 = vmatprep.subr.mxu0 0.0
    %3218 = vmatpush1.msra.mxu0 0.0
    %3219 = vmatprep.subr.mxu0 0.0
    %3220 = vmatpush1.msra.mxu0 0.0
    %3221 = vmatprep.subr.mxu0 0.0
    %3222 = vmatpush1.msra.mxu0 0.0
    %3223 = vmatprep.subr.mxu0 0.0
    %3224 = vmatpush1.msra.mxu0 0.0
    %3225 = vmatprep.subr.mxu0 0.0
    %3226 = vmatpush1.msra.mxu0 0.0
    %3227 = vmatprep.subr.mxu0 0.0
    %3228 = vmatpush1.msra.mxu0 0.0
    %3229 = vmatprep.subr.mxu0 0.0
    %3230 = vmatpush1.msra.mxu0 0.0
    %3231 = vmatprep.subr.mxu0 0.0
    %3232 = vmatpush1.msra.mxu0 0.0
    %3233 = vmatprep.subr.mxu0 0.0
    %3234 = vmatpush1.msra.mxu0 0.0
    %3235 = vmatprep.mubr.f32.mxu0 0.0
    %v3236 = vand.u32 %v2854, 4294901760
    %3237 = vmatmul.mubr.f32.gmra.mrb[0].mxu0 %v3236
    %v3238 = vpop.f32.mrb[0].mxu0
    %v3239 = vadd.f32 %v3162, %v3238
    %v3240 = vpop.f32.mrb[0].mxu0
    %3241 = vdwg.mxu0
    %3242 = vmatprep.subr.mxu0 0.0
    %v3243 = vand.u32 %v40, 4294901760
    %3244 = vmatpush1.msra.mxu0 %v3243
    %3245 = vmatprep.subr.mxu0 0.0
    %v3246 = vand.u32 %v41, 4294901760
    %3247 = vmatpush1.msra.mxu0 %v3246
    %3248 = vmatprep.subr.mxu0 0.0
    %3249 = vmatpush1.msra.mxu0 0.0
    %3250 = vmatprep.subr.mxu0 0.0
    %3251 = vmatpush1.msra.mxu0 0.0
    %3252 = vmatprep.subr.mxu0 0.0
    %3253 = vmatpush1.msra.mxu0 0.0
    %3254 = vmatprep.subr.mxu0 0.0
    %3255 = vmatpush1.msra.mxu0 0.0
    %3256 = vmatprep.subr.mxu0 0.0
    %3257 = vmatpush1.msra.mxu0 0.0
    %3258 = vmatprep.subr.mxu0 0.0
    %3259 = vmatpush1.msra.mxu0 0.0
    %3260 = vmatprep.subr.mxu0 0.0
    %3261 = vmatpush1.msra.mxu0 0.0
    %3262 = vmatprep.subr.mxu0 0.0
    %3263 = vmatpush1.msra.mxu0 0.0
    %3264 = vmatprep.subr.mxu0 0.0
    %3265 = vmatpush1.msra.mxu0 0.0
    %3266 = vmatprep.subr.mxu0 0.0
    %3267 = vmatpush1.msra.mxu0 0.0
    %3268 = vmatprep.subr.mxu0 0.0
    %3269 = vmatpush1.msra.mxu0 0.0
    %3270 = vmatprep.subr.mxu0 0.0
    %3271 = vmatpush1.msra.mxu0 0.0
    %3272 = vmatprep.subr.mxu0 0.0
    %3273 = vmatpush1.msra.mxu0 0.0
    %3274 = vmatprep.subr.mxu0 0.0
    %3275 = vmatpush1.msra.mxu0 0.0
    %3276 = vmatprep.subr.mxu0 0.0
    %3277 = vmatpush1.msra.mxu0 0.0
    %3278 = vmatprep.subr.mxu0 0.0
    %3279 = vmatpush1.msra.mxu0 0.0
    %3280 = vmatprep.subr.mxu0 0.0
    %3281 = vmatpush1.msra.mxu0 0.0
    %3282 = vmatprep.subr.mxu0 0.0
    %3283 = vmatpush1.msra.mxu0 0.0
    %3284 = vmatprep.subr.mxu0 0.0
    %3285 = vmatpush1.msra.mxu0 0.0
    %3286 = vmatprep.subr.mxu0 0.0
    %3287 = vmatpush1.msra.mxu0 0.0
    %3288 = vmatprep.subr.mxu0 0.0
    %3289 = vmatpush1.msra.mxu0 0.0
    %3290 = vmatprep.subr.mxu0 0.0
    %3291 = vmatpush1.msra.mxu0 0.0
    %3292 = vmatprep.subr.mxu0 0.0
    %3293 = vmatpush1.msra.mxu0 0.0
    %3294 = vmatprep.subr.mxu0 0.0
    %3295 = vmatpush1.msra.mxu0 0.0
    %3296 = vmatprep.subr.mxu0 0.0
    %3297 = vmatpush1.msra.mxu0 0.0
    %3298 = vmatprep.subr.mxu0 0.0
    %3299 = vmatpush1.msra.mxu0 0.0
    %3300 = vmatprep.subr.mxu0 0.0
    %3301 = vmatpush1.msra.mxu0 0.0
    %3302 = vmatprep.subr.mxu0 0.0
    %3303 = vmatpush1.msra.mxu0 0.0
    %3304 = vmatprep.subr.mxu0 0.0
    %3305 = vmatpush1.msra.mxu0 0.0
    %3306 = vmatprep.subr.mxu0 0.0
    %3307 = vmatpush1.msra.mxu0 0.0
    %3308 = vmatprep.mubr.f32.mxu0 0.0
    %v3309 = vand.u32 %v2854, 4294901760
    %3310 = vmatmul.mubr.f32.gmra.mrb[0].mxu0 %v3309
    %v3311 = vpop.f32.mrb[0].mxu0
    %v3312 = vadd.f32 %v3239, %v3311
    %v3313 = vpop.f32.mrb[0].mxu0
    %3314 = vdwg.mxu0
    %v3315 = vadd.f32 %v2852, %v3312
    %v3316 = vtanh.pop %v3315
    %s3317 = scalar_lea.vmem [#allocation7], 56
    %3318 = vst.msk [vmem:[%s3317] sm:$0xff] %vm42, %v3316
    // Predicated region
    $region18: #{tpu_custom_call.1} parent=1 // pred_check
      _
    $region19: #{tpu_custom_call.1} parent=1 // pred_check_branch
      %3320 = sbr.rel (0) target = $region21
    $region20: #{tpu_custom_call.1} parent=1 // pred_region
      %s3322 = ssub.s32 1024, 1024
      %3323 = vsyncadd [#allocation4], %s3322
      %s3324 = sshll.u32 [#allocation7], 4
      %s3325 = int_to_ptr.vmem [resolvable:$true] %s3324
      %3330 = dma.vmem_to_hbm [thread:$0]  %s3325, 1024, %s2, [#allocation4], 128, 128, 8
    $region21: #{tpu_custom_call.1} parent=1 // pred_fallthru
      _
    // Predicated region
    $region22: #{tpu_custom_call.1} parent=1 // pred_check
      _
    $region23: #{tpu_custom_call.1} parent=1 // pred_check_branch
      %3332 = sbr.rel (0) target = $region25
    $region24: #{tpu_custom_call.1} parent=1 // pred_region
      %3333 = dma.done [#allocation4], 1024
    $region25: #{tpu_custom_call.1} parent=1 // pred_fallthru
      _
    %3334 = vsyncpa [#allocation3], 1
    %3335 = vsyncpa [#allocation6], 1
    %3336 = vsyncpa [#allocation4], 1

</llo_original>
